<compile_context>
chip_gen: v7x
topology: tpu7x:2x2x1
jax: 0.10.0
libtpu: 0.0.40
codegen_flags: <defaults>
</compile_context>

<pallas_src>
import jax
import jax.numpy as jnp
import numpy as np
from jax import lax
from jax.experimental import pallas as pl
from jax.experimental.pallas import tpu as pltpu


def _round_up(v, m):
    return (v + m - 1) // m * m


def _pick_vmem_limit():
    """VMEM limit derived from the device instead of a hard-coded constant."""
    try:
        info = pltpu.get_tpu_info()
        cap = int(getattr(info, "vmem_capacity_bytes", 128 * 1024 * 1024))
    except Exception:
        cap = 128 * 1024 * 1024
    # never ask for more than half of physical VMEM, capped at 64 MiB
    return int(min(max(cap // 2, 16 * 1024 * 1024), 64 * 1024 * 1024))


# ----------------------------- Pallas kernel ------------------------------- #

def _decoder_iter_kernel(x_ref, enc_ref, w_ref, b2_ref, o_ref, cat_ref):
    """One full decoder iteration (convT -> crop/cat -> convT) on a tile of pixel rows.

    x_ref   : (tile_m, Cin)           bf16  input pixels (row = one spatial location)
    enc_ref : (4, tile_m, Cenc)       bf16  cropped skip feature, plane = (kh1, kw1) parity
    w_ref   : (Cin, 4*Cout)           bf16  shared ConvTranspose2d weight, cols = (kh, kw, co)
    b2_ref  : (1, 4*Cout)             f32   bias of conv2 with conv1's bias folded through
    o_ref   : (tile_m, 16*Cout)             cols ordered (kh1, kw1, kh2, kw2, co)
    cat_ref : (4*tile_m, Cin)         bf16  scratch: [h1_p | enc_p], parities stacked on M
    """
    tile_m, cin = x_ref.shape
    cout4 = w_ref.shape[1]
    cmid = cout4 // 4  # channels after the first convT (== Cout, same block reused)

    # Stage 1: all four (kh1,kw1) parities of the first ConvTranspose2d in ONE MXU dot.
    #   h1[m, p*cmid + cm] = sum_ci x[m,ci] * W[ci, cm, kh1, kw1]        (bias folded out)
    h1 = jnp.dot(x_ref[...], w_ref[...], preferred_element_type=jnp.float32)
    h1 = h1.astype(jnp.bfloat16)                               # (tile_m, 4*cmid)

    # Fused CenterCrop+cat: stack parities along M and merge the x/skip halves along K, so
    # stage 2 becomes a single dot:  cat[p*tile_m + m, :] = [h1_p[m, :], enc_p[m, :]]
    for p in range(4):
        rows = slice(p * tile_m, (p + 1) * tile_m)
        cat_ref[rows, :cmid] = h1[:, p * cmid:(p + 1) * cmid]
        cat_ref[rows, cmid:] = enc_ref[p]

    # Stage 2: second ConvTranspose2d for all four (kh1,kw1) planes in ONE stacked dot.
    res = jnp.dot(cat_ref[...], w_ref[...], preferred_element_type=jnp.float32)
    res = (res + b2_ref[...]).astype(o_ref.dtype)              # (4*tile_m, 4*cout)

    # Scatter parity planes into lane groups -> output columns ordered (kh1,kw1,kh2,kw2,co);
    # the HBM-side output block stays lane-dense (16*Cout is a multiple of 128 here).
    for p in range(4):
        o_ref[:, p * cout4:(p + 1) * cout4] = res[p * tile_m:(p + 1) * tile_m, :]


# --------------------------- per-iteration wrapper -------------------------- #

def _decoder_iteration_flat(x_flat, enc_r, w_flat, b2_eff, out_dtype, vmem_limit):
    """Run one fused decoder iteration on flat pixel rows.

    x_flat : (M, Cin)      bf16 pixel rows (nested pixel ordering)
    enc_r  : (4, M, Cenc)  bf16 cropped skip feature per first-convT parity (same ordering)
    returns: (M, 16*Cout)  out_dtype, columns ordered (kh1, kw1, kh2, kw2, co)
    """
    M, Cin = x_flat.shape
    Cenc = enc_r.shape[-1]
    Cout = w_flat.shape[1] // 4
    assert w_flat.shape[0] == Cin and Cenc == Cin - Cout, (Cin, Cenc, Cout)
    out_itemsize = jnp.dtype(out_dtype).itemsize

    # Largest tile that fits the VMEM budget; single grid step whenever possible
    # (no forced multi-step grids for tiny M - per-step overhead dominates there).
    per_row = (2 * (Cin * 2)                      # x block, double buffered (bf16)
               + 2 * (4 * Cenc * 2)               # enc block, double buffered (bf16)
               + 2 * (16 * Cout * out_itemsize)   # out block, double buffered
               + 4 * Cin * 2                      # cat scratch (4 stacked rows, bf16)
               + 4 * Cout * 2                     # h1 intermediate (bf16)
               + 16 * Cout * 4)                   # stacked stage-2 result (f32)
    fixed = 2 * w_flat.size + 4 * b2_eff.size + (1 << 20)
    cap = max(8, ((vmem_limit - fixed) // per_row) // 8 * 8)
    tile_m = min(_round_up(M, 8), 1024, cap)
    Mp = _round_up(M, tile_m)
    x_p = x_flat if Mp == M else jnp.pad(x_flat, ((0, Mp - M), (0, 0)))
    enc_p = enc_r if Mp == M else jnp.pad(enc_r, ((0, 0), (0, Mp - M), (0, 0)))
    grid = (Mp // tile_m,)

    flops = 2 * Mp * Cin * (4 * Cout) + 2 * (4 * Mp) * Cin * (4 * Cout)
    bytes_accessed = (2 * (Mp * Cin + 4 * Mp * Cenc + int(w_flat.size))
                      + 4 * int(b2_eff.size) + out_itemsize * Mp * 16 * Cout)
    cost = pl.CostEstimate(flops=flops, transcendentals=0, bytes_accessed=bytes_accessed)

    out = pl.pallas_call(
        _decoder_iter_kernel,
        out_shape=jax.ShapeDtypeStruct((Mp, 16 * Cout), out_dtype),
        grid_spec=pltpu.PrefetchScalarGridSpec(
            num_scalar_prefetch=0,
            grid=grid,
            in_specs=[
                pl.BlockSpec((tile_m, Cin), lambda i: (i, 0)),
                pl.BlockSpec((4, tile_m, Cenc), lambda i: (0, i, 0)),
                pl.BlockSpec((Cin, 4 * Cout), lambda i: (0, 0)),
                pl.BlockSpec((1, 4 * Cout), lambda i: (0, 0)),
            ],
            out_specs=pl.BlockSpec((tile_m, 16 * Cout), lambda i: (i, 0)),
            scratch_shapes=[pltpu.VMEM((4 * tile_m, Cin), jnp.bfloat16)],
        ),
        compiler_params=pltpu.CompilerParams(
            dimension_semantics=("parallel",),
            vmem_limit_bytes=vmem_limit,
        ),
        cost_estimate=cost,
    )(x_p, enc_p, w_flat, b2_eff)

    if Mp != M:
        out = out[:M]
    return out


# ----------------------- layout helpers (XLA glue, small) ------------------- #

def _center_crop_and_nest(enc_nhwc, N, H0, W0, depth):
    """CenterCrop enc to 2x the current spatial extent and lay it out as (4, M, Cenc):
    plane = current first-convT parity (kh1, kw1); rows follow the nested pixel ordering
    produced by `depth` previous decoder iterations (so no x-side transpose is needed)."""
    Cenc = enc_nhwc.shape[-1]
    Hc = 2 * H0 * (4 ** depth)
    Wc = 2 * W0 * (4 ** depth)
    eh, ew = enc_nhwc.shape[1], enc_nhwc.shape[2]
    # TODO(synk): torchvision CenterCrop pads when the skip feature is SMALLER than the
    # target; that case is not supported here (standard UNet skips are always larger).
    top = int(round((eh - Hc) / 2.0))
    left = int(round((ew - Wc) / 2.0))
    e = enc_nhwc[:, top:top + Hc, left:left + Wc, :].astype(jnp.bfloat16)

    # Factor each spatial axis into (base, per-iteration 2x2 digits..., current parity bit).
    shape = (N, H0) + (2,) * (2 * depth + 1) + (W0,) + (2,) * (2 * depth + 1) + (Cenc,)
    e = e.reshape(shape)
    kh1_ax = 2 * depth + 2
    kw1_ax = 4 * depth + 4
    h0_ax, w0_ax = 1, 2 * depth + 3
    perm = [kh1_ax, kw1_ax, 0, h0_ax, w0_ax]
    for j in range(depth):
        perm += [2 + 2 * j, 2 * depth + 4 + 2 * j, 3 + 2 * j, 2 * depth + 5 + 2 * j]
    perm += [4 * depth + 5]
    e = jnp.transpose(e, perm)
    M = N * H0 * W0 * (16 ** depth)
    return e.reshape(4, M, Cenc)


def _unnest_to_nchw(out_flat, N, H0, W0, L, C):
    """Single final un-shuffle: nested pixel ordering after L iterations -> NCHW."""
    shape = (N, H0, W0) + (2,) * (4 * L) + (C,)
    o = out_flat.reshape(shape)
    c_ax = 3 + 4 * L
    perm = [0, c_ax, 1]
    perm += [ax for j in range(L) for ax in (3 + 4 * j, 5 + 4 * j)]   # H digits (kh1_j, kh2_j)
    perm += [2]
    perm += [ax for j in range(L) for ax in (4 + 4 * j, 6 + 4 * j)]   # W digits (kw1_j, kw2_j)
    o = jnp.transpose(o, perm)
    return o.reshape(N, C, H0 * (4 ** L), W0 * (4 ** L))


# -------------------------- parameter preparation --------------------------- #

def prepare_decoder_params(params):
    """Hoist all weight re-layouts out of the per-call hot path (once per parameter set).

    params: list of (w, b) with w: (Cin, Cout, 2, 2) PyTorch ConvTranspose2d layout.
    Returns list of (w_flat bf16 (Cin, 4*Cout), b2_eff f32 (1, 4*Cout)).
    """
    prepared = []
    for w, b in params:
        cin, cout = int(w.shape[0]), int(w.shape[1])
        # Matmul layout: w_flat[ci, (kh*2+kw)*Cout + co] = W[ci, co, kh, kw].
        w_flat_f32 = jnp.transpose(w, (0, 2, 3, 1)).reshape(cin, 4 * cout)
        # Fold conv1's bias through conv2 (exact - no nonlinearity in between):
        #   b2_eff = tile(b, 4) + b @ W2[:Cout]
        b2_eff = jnp.tile(b, 4) + jnp.dot(b, w_flat_f32[:cout, :])
        prepared.append((w_flat_f32.astype(jnp.bfloat16),
                         b2_eff.reshape(1, 4 * cout).astype(jnp.float32)))
    return prepared


# ------------------------------- full forward ------------------------------- #

@jax.jit
def decoder_forward(x_nchw, enc_features_nchw, prepared_params):
    """Pallas-backed Decoder.forward; NCHW at the boundary to mirror PyTorch."""
    N, C0, H0, W0 = x_nchw.shape
    L = len(prepared_params)
    vmem_limit = _pick_vmem_limit()

    # NCHW -> flat (pixel, channel) rows in the base (n, h, w) ordering, bf16 for the MXU.
    x_flat = jnp.transpose(x_nchw, (0, 2, 3, 1)).reshape(N * H0 * W0, C0).astype(jnp.bfloat16)

    cout = C0
    for i, (w_flat, b2_eff) in enumerate(prepared_params):
        cout = w_flat.shape[1] // 4
        enc_nhwc = jnp.transpose(enc_features_nchw[i], (0, 2, 3, 1))
        enc_r = _center_crop_and_nest(enc_nhwc, N, H0, W0, depth=i)
        out_dtype = jnp.float32 if i == L - 1 else jnp.bfloat16
        out = _decoder_iteration_flat(x_flat, enc_r, w_flat, b2_eff, out_dtype, vmem_limit)
        # (M, 16*Cout) -> (16*M, Cout) is a free row-major reshape and is exactly the next
        # iteration's pixel-row layout: no inter-iteration HBM transpose.
        x_flat = out.reshape(out.shape[0] * 16, cout)

    # One un-shuffle at the very end: nested ordering -> NCHW.
    return _unnest_to_nchw(x_flat, N, H0, W0, L, cout)


# ------------------------- pure-JAX reference (NCHW, f32) ------------------- #

def _ref_conv_transpose(x_nchw, w_torch, b):
    # ConvTranspose2d(k=2, s=2, p=0) == conv(dilate(x,2), rot180(W^T), pad=1)
    k_rot = jnp.flip(jnp.transpose(w_torch, (1, 0, 2, 3)), axis=(2, 3))  # OIHW, O=Cout
    y = lax.conv_general_dilated(
        x_nchw, k_rot, window_strides=(1, 1), padding=[(1, 1), (1, 1)],
        lhs_dilation=(2, 2), dimension_numbers=('NCHW', 'OIHW', 'NCHW'))
    return y + b[None, :, None, None]


def reference_forward(x_nchw, enc_features_nchw, params):
    x = x_nchw
    for i, (w, b) in enumerate(params):
        x = _ref_conv_transpose(x, w, b)
        enc = enc_features_nchw[i]
        H, W = x.shape[2], x.shape[3]
        eh, ew = enc.shape[2], enc.shape[3]
        top = int(round((eh - H) / 2.0))
        left = int(round((ew - W) / 2.0))
        enc = enc[:, :, top:top + H, left:left + W]
        x = jnp.concatenate([x, enc], axis=1)
        x = _ref_conv_transpose(x, w, b)
    return x


# ---------------------------------- main ------------------------------------ #

if __name__ == "__main__":
    key = jax.random.PRNGKey(0)
    keys = jax.random.split(key, 8)

    channels = (64, 32, 16)
    N, H0, W0 = 2, 4, 4

    # ConvTranspose2d parameters, weight layout (Cin, Cout, 2, 2)
    params = []
    for i in range(len(channels) - 1):
        cin, cout = channels[i], channels[i + 1]
        w = jax.random.normal(keys[2 * i], (cin, cout, 2, 2), jnp.float32) * 0.1
        bias = jax.random.normal(keys[2 * i + 1], (cout,), jnp.float32) * 0.1
        params.append((w, bias))

    # x: (N, 64, 4, 4); skip features have channels[i] - channels[i+1] channels (so the cat
    # gives channels[i]) and larger spatial extents so the CenterCrop is real.
    x = jax.random.normal(keys[4], (N, channels[0], H0, W0), jnp.float32)
    enc0 = jax.random.normal(keys[5], (N, channels[0] - channels[1], 12, 12), jnp.float32)  # -> 8x8
    enc1 = jax.random.normal(keys[6], (N, channels[1] - channels[2], 40, 40), jnp.float32)  # -> 32x32
    enc_features = [enc0, enc1]

    prepared = prepare_decoder_params(params)
    out = decoder_forward(x, enc_features, prepared)
    out = jax.block_until_ready(out)

    ref = jax.block_until_ready(reference_forward(x, enc_features, params))
    assert out.shape == ref.shape == (N, channels[-1], 16 * H0, 16 * W0), (out.shape, ref.shape)
    # bf16 matmul inputs with f32 accumulation -> loose-ish tolerance vs the f32 reference
    np.testing.assert_allclose(np.asarray(out), np.asarray(ref), rtol=5e-2, atol=5e-2)

    print("KERNEL_OK")
</pallas_src>

<mosaic_0001>
module attributes {stable_mosaic.version = 11 : i64} {
  func.func @_decoder_iter_kernel(%arg0: i32, %arg1: memref<32x64xbf16, #tpu.memory_space<vmem>>, %arg2: memref<4x32x32xbf16, #tpu.memory_space<vmem>>, %arg3: memref<64x128xbf16, #tpu.memory_space<vmem>>, %arg4: memref<1x128xf32, #tpu.memory_space<vmem>>, %arg5: memref<32x512xbf16, #tpu.memory_space<vmem>>, %arg6: memref<128x64xbf16, #tpu.memory_space<vmem>>) attributes {dimension_semantics = [#tpu.dimension_semantics<parallel>], iteration_bounds = array<i64: 1>, scalar_prefetch = 0 : i64, scratch_operands = 1 : i64, tpu.core_type = #tpu.core_type<tc>, window_params = [{transform_indices = @transform_0, window_bounds = array<i64: 32, 64>}, {transform_indices = @transform_1, window_bounds = array<i64: 4, 32, 32>}, {pipeline_mode = #tpu.pipeline_mode<synchronous>, transform_indices = @transform_2, window_bounds = array<i64: 64, 128>}, {pipeline_mode = #tpu.pipeline_mode<synchronous>, transform_indices = @transform_3, window_bounds = array<i64: 1, 128>}, {transform_indices = @transform_4, window_bounds = array<i64: 32, 512>}]} {
    %c0 = arith.constant 0 : index
    %c0_0 = arith.constant 0 : index
    %0 = vector.load %arg1[%c0, %c0_0] : memref<32x64xbf16, #tpu.memory_space<vmem>>, vector<32x64xbf16>
    %c0_1 = arith.constant 0 : index
    %c0_2 = arith.constant 0 : index
    %1 = vector.load %arg3[%c0_1, %c0_2] : memref<64x128xbf16, #tpu.memory_space<vmem>>, vector<64x128xbf16>
    %cst = arith.constant dense<0.000000e+00> : vector<32x128xf32>
    %2 = tpu.matmul %0, %1, %cst {dimension_numbers = #tpu.dot_dimension_numbers<[1], [0], [0], [1], [0, 0, 1, 1], [], []>} : vector<32x64xbf16>, vector<64x128xbf16>, vector<32x128xf32> -> vector<32x128xf32>
    %3 = arith.truncf %2 : vector<32x128xf32> to vector<32x128xbf16>
    %4 = vector.extract_strided_slice %3 {offsets = [0, 0], sizes = [32, 32], strides = [1, 1]} : vector<32x128xbf16> to vector<32x32xbf16>
    %c0_3 = arith.constant 0 : index
    %c0_4 = arith.constant 0 : index
    %5 = vector.load %arg6[%c0_3, %c0_4] : memref<128x64xbf16, #tpu.memory_space<vmem>>, vector<32x32xbf16>
    tpu.vector_store %arg6[%c0_3, %c0_4], %4 {strides = array<i32>} : memref<128x64xbf16, #tpu.memory_space<vmem>>, vector<32x32xbf16>,
    %c0_5 = arith.constant 0 : index
    %c0_6 = arith.constant 0 : index
    %c0_7 = arith.constant 0 : index
    %6 = vector.load %arg2[%c0_5, %c0_6, %c0_7] : memref<4x32x32xbf16, #tpu.memory_space<vmem>>, vector<1x32x32xbf16>
    %7 = vector.shape_cast %6 : vector<1x32x32xbf16> to vector<32x32xbf16>
    %c0_8 = arith.constant 0 : index
    %c32 = arith.constant 32 : index
    %8 = vector.load %arg6[%c0_8, %c32] : memref<128x64xbf16, #tpu.memory_space<vmem>>, vector<32x32xbf16>
    tpu.vector_store %arg6[%c0_8, %c32], %7 {strides = array<i32>} : memref<128x64xbf16, #tpu.memory_space<vmem>>, vector<32x32xbf16>,
    %9 = vector.extract_strided_slice %3 {offsets = [0, 32], sizes = [32, 32], strides = [1, 1]} : vector<32x128xbf16> to vector<32x32xbf16>
    %c32_9 = arith.constant 32 : index
    %c0_10 = arith.constant 0 : index
    %10 = vector.load %arg6[%c32_9, %c0_10] : memref<128x64xbf16, #tpu.memory_space<vmem>>, vector<32x32xbf16>
    tpu.vector_store %arg6[%c32_9, %c0_10], %9 {strides = array<i32>} : memref<128x64xbf16, #tpu.memory_space<vmem>>, vector<32x32xbf16>,
    %c1 = arith.constant 1 : index
    %c0_11 = arith.constant 0 : index
    %c0_12 = arith.constant 0 : index
    %11 = vector.load %arg2[%c1, %c0_11, %c0_12] : memref<4x32x32xbf16, #tpu.memory_space<vmem>>, vector<1x32x32xbf16>
    %12 = vector.shape_cast %11 : vector<1x32x32xbf16> to vector<32x32xbf16>
    %c32_13 = arith.constant 32 : index
    %c32_14 = arith.constant 32 : index
    %13 = vector.load %arg6[%c32_13, %c32_14] : memref<128x64xbf16, #tpu.memory_space<vmem>>, vector<32x32xbf16>
    tpu.vector_store %arg6[%c32_13, %c32_14], %12 {strides = array<i32>} : memref<128x64xbf16, #tpu.memory_space<vmem>>, vector<32x32xbf16>,
    %14 = vector.extract_strided_slice %3 {offsets = [0, 64], sizes = [32, 32], strides = [1, 1]} : vector<32x128xbf16> to vector<32x32xbf16>
    %c64 = arith.constant 64 : index
    %c0_15 = arith.constant 0 : index
    %15 = vector.load %arg6[%c64, %c0_15] : memref<128x64xbf16, #tpu.memory_space<vmem>>, vector<32x32xbf16>
    tpu.vector_store %arg6[%c64, %c0_15], %14 {strides = array<i32>} : memref<128x64xbf16, #tpu.memory_space<vmem>>, vector<32x32xbf16>,
    %c2 = arith.constant 2 : index
    %c0_16 = arith.constant 0 : index
    %c0_17 = arith.constant 0 : index
    %16 = vector.load %arg2[%c2, %c0_16, %c0_17] : memref<4x32x32xbf16, #tpu.memory_space<vmem>>, vector<1x32x32xbf16>
    %17 = vector.shape_cast %16 : vector<1x32x32xbf16> to vector<32x32xbf16>
    %c64_18 = arith.constant 64 : index
    %c32_19 = arith.constant 32 : index
    %18 = vector.load %arg6[%c64_18, %c32_19] : memref<128x64xbf16, #tpu.memory_space<vmem>>, vector<32x32xbf16>
    tpu.vector_store %arg6[%c64_18, %c32_19], %17 {strides = array<i32>} : memref<128x64xbf16, #tpu.memory_space<vmem>>, vector<32x32xbf16>,
    %19 = vector.extract_strided_slice %3 {offsets = [0, 96], sizes = [32, 32], strides = [1, 1]} : vector<32x128xbf16> to vector<32x32xbf16>
    %c96 = arith.constant 96 : index
    %c0_20 = arith.constant 0 : index
    %20 = vector.load %arg6[%c96, %c0_20] : memref<128x64xbf16, #tpu.memory_space<vmem>>, vector<32x32xbf16>
    tpu.vector_store %arg6[%c96, %c0_20], %19 {strides = array<i32>} : memref<128x64xbf16, #tpu.memory_space<vmem>>, vector<32x32xbf16>,
    %c3 = arith.constant 3 : index
    %c0_21 = arith.constant 0 : index
    %c0_22 = arith.constant 0 : index
    %21 = vector.load %arg2[%c3, %c0_21, %c0_22] : memref<4x32x32xbf16, #tpu.memory_space<vmem>>, vector<1x32x32xbf16>
    %22 = vector.shape_cast %21 : vector<1x32x32xbf16> to vector<32x32xbf16>
    %c96_23 = arith.constant 96 : index
    %c32_24 = arith.constant 32 : index
    %23 = vector.load %arg6[%c96_23, %c32_24] : memref<128x64xbf16, #tpu.memory_space<vmem>>, vector<32x32xbf16>
    tpu.vector_store %arg6[%c96_23, %c32_24], %22 {strides = array<i32>} : memref<128x64xbf16, #tpu.memory_space<vmem>>, vector<32x32xbf16>,
    %c0_25 = arith.constant 0 : index
    %c0_26 = arith.constant 0 : index
    %24 = vector.load %arg6[%c0_25, %c0_26] : memref<128x64xbf16, #tpu.memory_space<vmem>>, vector<128x64xbf16>
    %c0_27 = arith.constant 0 : index
    %c0_28 = arith.constant 0 : index
    %25 = vector.load %arg3[%c0_27, %c0_28] : memref<64x128xbf16, #tpu.memory_space<vmem>>, vector<64x128xbf16>
    %cst_29 = arith.constant dense<0.000000e+00> : vector<128x128xf32>
    %26 = tpu.matmul %24, %25, %cst_29 {dimension_numbers = #tpu.dot_dimension_numbers<[1], [0], [0], [1], [0, 0, 1, 1], [], []>} : vector<128x64xbf16>, vector<64x128xbf16>, vector<128x128xf32> -> vector<128x128xf32>
    %c0_30 = arith.constant 0 : index
    %c0_31 = arith.constant 0 : index
    %27 = vector.load %arg4[%c0_30, %c0_31] : memref<1x128xf32, #tpu.memory_space<vmem>>, vector<1x128xf32>
    %28 = vector.broadcast %27 : vector<1x128xf32> to vector<128x128xf32>
    %29 = arith.addf %26, %28 : vector<128x128xf32>
    %30 = arith.truncf %29 : vector<128x128xf32> to vector<128x128xbf16>
    %31 = vector.extract_strided_slice %30 {offsets = [0, 0], sizes = [32, 128], strides = [1, 1]} : vector<128x128xbf16> to vector<32x128xbf16>
    %c0_32 = arith.constant 0 : index
    %c0_33 = arith.constant 0 : index
    %32 = vector.load %arg5[%c0_32, %c0_33] : memref<32x512xbf16, #tpu.memory_space<vmem>>, vector<32x128xbf16>
    tpu.vector_store %arg5[%c0_32, %c0_33], %31 {strides = array<i32>} : memref<32x512xbf16, #tpu.memory_space<vmem>>, vector<32x128xbf16>,
    %33 = vector.extract_strided_slice %30 {offsets = [32, 0], sizes = [32, 128], strides = [1, 1]} : vector<128x128xbf16> to vector<32x128xbf16>
    %c0_34 = arith.constant 0 : index
    %c128 = arith.constant 128 : index
    %34 = vector.load %arg5[%c0_34, %c128] : memref<32x512xbf16, #tpu.memory_space<vmem>>, vector<32x128xbf16>
    tpu.vector_store %arg5[%c0_34, %c128], %33 {strides = array<i32>} : memref<32x512xbf16, #tpu.memory_space<vmem>>, vector<32x128xbf16>,
    %35 = vector.extract_strided_slice %30 {offsets = [64, 0], sizes = [32, 128], strides = [1, 1]} : vector<128x128xbf16> to vector<32x128xbf16>
    %c0_35 = arith.constant 0 : index
    %c256 = arith.constant 256 : index
    %36 = vector.load %arg5[%c0_35, %c256] : memref<32x512xbf16, #tpu.memory_space<vmem>>, vector<32x128xbf16>
    tpu.vector_store %arg5[%c0_35, %c256], %35 {strides = array<i32>} : memref<32x512xbf16, #tpu.memory_space<vmem>>, vector<32x128xbf16>,
    %37 = vector.extract_strided_slice %30 {offsets = [96, 0], sizes = [32, 128], strides = [1, 1]} : vector<128x128xbf16> to vector<32x128xbf16>
    %c0_36 = arith.constant 0 : index
    %c384 = arith.constant 384 : index
    %38 = vector.load %arg5[%c0_36, %c384] : memref<32x512xbf16, #tpu.memory_space<vmem>>, vector<32x128xbf16>
    tpu.vector_store %arg5[%c0_36, %c384], %37 {strides = array<i32>} : memref<32x512xbf16, #tpu.memory_space<vmem>>, vector<32x128xbf16>,
    return
  }
  func.func @transform_0(%arg0: i32) -> (i32, i32) {
    %c0_i32 = arith.constant 0 : i32
    %c0_i32_0 = arith.constant 0 : i32
    return %arg0, %c0_i32 : i32, i32
  }
  func.func @transform_1(%arg0: i32) -> (i32, i32, i32) {
    %c0_i32 = arith.constant 0 : i32
    %c0_i32_0 = arith.constant 0 : i32
    %c0_i32_1 = arith.constant 0 : i32
    return %c0_i32, %arg0, %c0_i32_0 : i32, i32, i32
  }
  func.func @transform_2(%arg0: i32) -> (i32, i32) {
    %c0_i32 = arith.constant 0 : i32
    %c0_i32_0 = arith.constant 0 : i32
    %c0_i32_1 = arith.constant 0 : i32
    return %c0_i32, %c0_i32_0 : i32, i32
  }
  func.func @transform_3(%arg0: i32) -> (i32, i32) {
    %c0_i32 = arith.constant 0 : i32
    %c0_i32_0 = arith.constant 0 : i32
    %c0_i32_1 = arith.constant 0 : i32
    return %c0_i32, %c0_i32_0 : i32, i32
  }
  func.func @transform_4(%arg0: i32) -> (i32, i32) {
    %c0_i32 = arith.constant 0 : i32
    %c0_i32_0 = arith.constant 0 : i32
    return %arg0, %c0_i32 : i32, i32
  }
}

module attributes {stable_mosaic.version = 11 : i64} {
  func.func @_decoder_iter_kernel(%arg0: i32, %arg1: memref<512x32xbf16, #tpu.memory_space<vmem>>, %arg2: memref<4x512x16xbf16, #tpu.memory_space<vmem>>, %arg3: memref<32x64xbf16, #tpu.memory_space<vmem>>, %arg4: memref<1x64xf32, #tpu.memory_space<vmem>>, %arg5: memref<512x256xf32, #tpu.memory_space<vmem>>, %arg6: memref<2048x32xbf16, #tpu.memory_space<vmem>>) attributes {dimension_semantics = [#tpu.dimension_semantics<parallel>], iteration_bounds = array<i64: 1>, scalar_prefetch = 0 : i64, scratch_operands = 1 : i64, tpu.core_type = #tpu.core_type<tc>, window_params = [{transform_indices = @transform_0, window_bounds = array<i64: 512, 32>}, {transform_indices = @transform_1, window_bounds = array<i64: 4, 512, 16>}, {pipeline_mode = #tpu.pipeline_mode<synchronous>, transform_indices = @transform_2, window_bounds = array<i64: 32, 64>}, {pipeline_mode = #tpu.pipeline_mode<synchronous>, transform_indices = @transform_3, window_bounds = array<i64: 1, 64>}, {transform_indices = @transform_4, window_bounds = array<i64: 512, 256>}]} {
    %c0 = arith.constant 0 : index
    %c0_0 = arith.constant 0 : index
    %0 = vector.load %arg1[%c0, %c0_0] : memref<512x32xbf16, #tpu.memory_space<vmem>>, vector<512x32xbf16>
    %c0_1 = arith.constant 0 : index
    %c0_2 = arith.constant 0 : index
    %1 = vector.load %arg3[%c0_1, %c0_2] : memref<32x64xbf16, #tpu.memory_space<vmem>>, vector<32x64xbf16>
    %cst = arith.constant dense<0.000000e+00> : vector<512x64xf32>
    %2 = tpu.matmul %0, %1, %cst {dimension_numbers = #tpu.dot_dimension_numbers<[1], [0], [0], [1], [0, 0, 1, 1], [], []>} : vector<512x32xbf16>, vector<32x64xbf16>, vector<512x64xf32> -> vector<512x64xf32>
    %3 = arith.truncf %2 : vector<512x64xf32> to vector<512x64xbf16>
    %4 = vector.extract_strided_slice %3 {offsets = [0, 0], sizes = [512, 16], strides = [1, 1]} : vector<512x64xbf16> to vector<512x16xbf16>
    %c0_3 = arith.constant 0 : index
    %c0_4 = arith.constant 0 : index
    %5 = vector.load %arg6[%c0_3, %c0_4] : memref<2048x32xbf16, #tpu.memory_space<vmem>>, vector<512x16xbf16>
    tpu.vector_store %arg6[%c0_3, %c0_4], %4 {strides = array<i32>} : memref<2048x32xbf16, #tpu.memory_space<vmem>>, vector<512x16xbf16>,
    %c0_5 = arith.constant 0 : index
    %c0_6 = arith.constant 0 : index
    %c0_7 = arith.constant 0 : index
    %6 = vector.load %arg2[%c0_5, %c0_6, %c0_7] : memref<4x512x16xbf16, #tpu.memory_space<vmem>>, vector<1x512x16xbf16>
    %7 = vector.shape_cast %6 : vector<1x512x16xbf16> to vector<512x16xbf16>
    %c0_8 = arith.constant 0 : index
    %c16 = arith.constant 16 : index
    %8 = vector.load %arg6[%c0_8, %c16] : memref<2048x32xbf16, #tpu.memory_space<vmem>>, vector<512x16xbf16>
    tpu.vector_store %arg6[%c0_8, %c16], %7 {strides = array<i32>} : memref<2048x32xbf16, #tpu.memory_space<vmem>>, vector<512x16xbf16>,
    %9 = vector.extract_strided_slice %3 {offsets = [0, 16], sizes = [512, 16], strides = [1, 1]} : vector<512x64xbf16> to vector<512x16xbf16>
    %c512 = arith.constant 512 : index
    %c0_9 = arith.constant 0 : index
    %10 = vector.load %arg6[%c512, %c0_9] : memref<2048x32xbf16, #tpu.memory_space<vmem>>, vector<512x16xbf16>
    tpu.vector_store %arg6[%c512, %c0_9], %9 {strides = array<i32>} : memref<2048x32xbf16, #tpu.memory_space<vmem>>, vector<512x16xbf16>,
    %c1 = arith.constant 1 : index
    %c0_10 = arith.constant 0 : index
    %c0_11 = arith.constant 0 : index
    %11 = vector.load %arg2[%c1, %c0_10, %c0_11] : memref<4x512x16xbf16, #tpu.memory_space<vmem>>, vector<1x512x16xbf16>
    %12 = vector.shape_cast %11 : vector<1x512x16xbf16> to vector<512x16xbf16>
    %c512_12 = arith.constant 512 : index
    %c16_13 = arith.constant 16 : index
    %13 = vector.load %arg6[%c512_12, %c16_13] : memref<2048x32xbf16, #tpu.memory_space<vmem>>, vector<512x16xbf16>
    tpu.vector_store %arg6[%c512_12, %c16_13], %12 {strides = array<i32>} : memref<2048x32xbf16, #tpu.memory_space<vmem>>, vector<512x16xbf16>,
    %14 = vector.extract_strided_slice %3 {offsets = [0, 32], sizes = [512, 16], strides = [1, 1]} : vector<512x64xbf16> to vector<512x16xbf16>
    %c1024 = arith.constant 1024 : index
    %c0_14 = arith.constant 0 : index
    %15 = vector.load %arg6[%c1024, %c0_14] : memref<2048x32xbf16, #tpu.memory_space<vmem>>, vector<512x16xbf16>
    tpu.vector_store %arg6[%c1024, %c0_14], %14 {strides = array<i32>} : memref<2048x32xbf16, #tpu.memory_space<vmem>>, vector<512x16xbf16>,
    %c2 = arith.constant 2 : index
    %c0_15 = arith.constant 0 : index
    %c0_16 = arith.constant 0 : index
    %16 = vector.load %arg2[%c2, %c0_15, %c0_16] : memref<4x512x16xbf16, #tpu.memory_space<vmem>>, vector<1x512x16xbf16>
    %17 = vector.shape_cast %16 : vector<1x512x16xbf16> to vector<512x16xbf16>
    %c1024_17 = arith.constant 1024 : index
    %c16_18 = arith.constant 16 : index
    %18 = vector.load %arg6[%c1024_17, %c16_18] : memref<2048x32xbf16, #tpu.memory_space<vmem>>, vector<512x16xbf16>
    tpu.vector_store %arg6[%c1024_17, %c16_18], %17 {strides = array<i32>} : memref<2048x32xbf16, #tpu.memory_space<vmem>>, vector<512x16xbf16>,
    %19 = vector.extract_strided_slice %3 {offsets = [0, 48], sizes = [512, 16], strides = [1, 1]} : vector<512x64xbf16> to vector<512x16xbf16>
    %c1536 = arith.constant 1536 : index
    %c0_19 = arith.constant 0 : index
    %20 = vector.load %arg6[%c1536, %c0_19] : memref<2048x32xbf16, #tpu.memory_space<vmem>>, vector<512x16xbf16>
    tpu.vector_store %arg6[%c1536, %c0_19], %19 {strides = array<i32>} : memref<2048x32xbf16, #tpu.memory_space<vmem>>, vector<512x16xbf16>,
    %c3 = arith.constant 3 : index
    %c0_20 = arith.constant 0 : index
    %c0_21 = arith.constant 0 : index
    %21 = vector.load %arg2[%c3, %c0_20, %c0_21] : memref<4x512x16xbf16, #tpu.memory_space<vmem>>, vector<1x512x16xbf16>
    %22 = vector.shape_cast %21 : vector<1x512x16xbf16> to vector<512x16xbf16>
    %c1536_22 = arith.constant 1536 : index
    %c16_23 = arith.constant 16 : index
    %23 = vector.load %arg6[%c1536_22, %c16_23] : memref<2048x32xbf16, #tpu.memory_space<vmem>>, vector<512x16xbf16>
    tpu.vector_store %arg6[%c1536_22, %c16_23], %22 {strides = array<i32>} : memref<2048x32xbf16, #tpu.memory_space<vmem>>, vector<512x16xbf16>,
    %c0_24 = arith.constant 0 : index
    %c0_25 = arith.constant 0 : index
    %24 = vector.load %arg6[%c0_24, %c0_25] : memref<2048x32xbf16, #tpu.memory_space<vmem>>, vector<2048x32xbf16>
    %c0_26 = arith.constant 0 : index
    %c0_27 = arith.constant 0 : index
    %25 = vector.load %arg3[%c0_26, %c0_27] : memref<32x64xbf16, #tpu.memory_space<vmem>>, vector<32x64xbf16>
    %cst_28 = arith.constant dense<0.000000e+00> : vector<2048x64xf32>
    %26 = tpu.matmul %24, %25, %cst_28 {dimension_numbers = #tpu.dot_dimension_numbers<[1], [0], [0], [1], [0, 0, 1, 1], [], []>} : vector<2048x32xbf16>, vector<32x64xbf16>, vector<2048x64xf32> -> vector<2048x64xf32>
    %c0_29 = arith.constant 0 : index
    %c0_30 = arith.constant 0 : index
    %27 = vector.load %arg4[%c0_29, %c0_30] : memref<1x64xf32, #tpu.memory_space<vmem>>, vector<1x64xf32>
    %28 = vector.broadcast %27 : vector<1x64xf32> to vector<2048x64xf32>
    %29 = arith.addf %26, %28 : vector<2048x64xf32>
    %30 = vector.extract_strided_slice %29 {offsets = [0, 0], sizes = [512, 64], strides = [1, 1]} : vector<2048x64xf32> to vector<512x64xf32>
    %c0_31 = arith.constant 0 : index
    %c0_32 = arith.constant 0 : index
    %31 = vector.load %arg5[%c0_31, %c0_32] : memref<512x256xf32, #tpu.memory_space<vmem>>, vector<512x64xf32>
    tpu.vector_store %arg5[%c0_31, %c0_32], %30 {strides = array<i32>} : memref<512x256xf32, #tpu.memory_space<vmem>>, vector<512x64xf32>,
    %32 = vector.extract_strided_slice %29 {offsets = [512, 0], sizes = [512, 64], strides = [1, 1]} : vector<2048x64xf32> to vector<512x64xf32>
    %c0_33 = arith.constant 0 : index
    %c64 = arith.constant 64 : index
    %33 = vector.load %arg5[%c0_33, %c64] : memref<512x256xf32, #tpu.memory_space<vmem>>, vector<512x64xf32>
    tpu.vector_store %arg5[%c0_33, %c64], %32 {strides = array<i32>} : memref<512x256xf32, #tpu.memory_space<vmem>>, vector<512x64xf32>,
    %34 = vector.extract_strided_slice %29 {offsets = [1024, 0], sizes = [512, 64], strides = [1, 1]} : vector<2048x64xf32> to vector<512x64xf32>
    %c0_34 = arith.constant 0 : index
    %c128 = arith.constant 128 : index
    %35 = vector.load %arg5[%c0_34, %c128] : memref<512x256xf32, #tpu.memory_space<vmem>>, vector<512x64xf32>
    tpu.vector_store %arg5[%c0_34, %c128], %34 {strides = array<i32>} : memref<512x256xf32, #tpu.memory_space<vmem>>, vector<512x64xf32>,
    %36 = vector.extract_strided_slice %29 {offsets = [1536, 0], sizes = [512, 64], strides = [1, 1]} : vector<2048x64xf32> to vector<512x64xf32>
    %c0_35 = arith.constant 0 : index
    %c192 = arith.constant 192 : index
    %37 = vector.load %arg5[%c0_35, %c192] : memref<512x256xf32, #tpu.memory_space<vmem>>, vector<512x64xf32>
    tpu.vector_store %arg5[%c0_35, %c192], %36 {strides = array<i32>} : memref<512x256xf32, #tpu.memory_space<vmem>>, vector<512x64xf32>,
    return
  }
  func.func @transform_0(%arg0: i32) -> (i32, i32) {
    %c0_i32 = arith.constant 0 : i32
    %c0_i32_0 = arith.constant 0 : i32
    return %arg0, %c0_i32 : i32, i32
  }
  func.func @transform_1(%arg0: i32) -> (i32, i32, i32) {
    %c0_i32 = arith.constant 0 : i32
    %c0_i32_0 = arith.constant 0 : i32
    %c0_i32_1 = arith.constant 0 : i32
    return %c0_i32, %arg0, %c0_i32_0 : i32, i32, i32
  }
  func.func @transform_2(%arg0: i32) -> (i32, i32) {
    %c0_i32 = arith.constant 0 : i32
    %c0_i32_0 = arith.constant 0 : i32
    %c0_i32_1 = arith.constant 0 : i32
    return %c0_i32, %c0_i32_0 : i32, i32
  }
  func.func @transform_3(%arg0: i32) -> (i32, i32) {
    %c0_i32 = arith.constant 0 : i32
    %c0_i32_0 = arith.constant 0 : i32
    %c0_i32_1 = arith.constant 0 : i32
    return %c0_i32, %c0_i32_0 : i32, i32
  }
  func.func @transform_4(%arg0: i32) -> (i32, i32) {
    %c0_i32 = arith.constant 0 : i32
    %c0_i32_0 = arith.constant 0 : i32
    return %arg0, %c0_i32 : i32, i32
  }
}

</mosaic_0001>

<llo_original>
// kernel: decoder_forward.2
$region0: #{decoder_forward.2}
  #allocation0 [shape = 'u32[]', space=smem, size = 0x4, offset = 0x4, fixed_abs, tag = 'smem constant byte address 0x4 - core index']
  #allocation1 [shape = 'u32[144,128]{1,0:T(1,128)}', space=vmem, size = 0x12000, scoped, tag = 'internal scratch']
  #allocation2 [shape = 'bf16[128,64]{1,0:T(16,128)(2,1)}', space=vmem, size = 0x8000, scoped, tag = 'scratch operand']
  %s0 = inlined_call_operand.hbm [shape: bf16[32,64], index: 0, kind: input, shape index: {}]
  %s1 = inlined_call_operand.hbm [shape: bf16[4,32,32], index: 1, kind: input, shape index: {}]
  %s2 = inlined_call_operand.hbm [shape: bf16[64,128], index: 2, kind: input, shape index: {}]
  %s3 = inlined_call_operand.hbm [shape: f32[1,128], index: 3, kind: input, shape index: {}]
  %s4 = inlined_call_operand.hbm [shape: bf16[32,512], index: 4, kind: output, shape index: {}]
  %s5 = sld [smem:[#allocation0]]
  $region42: #{decoder_forward.2} parent=0
    _
  %s7 = ssub.s32 1, %s5
  %s8 = scalar_select 0, %s7, %s5
  $region1: #{decoder_forward.2} parent=0
    #allocation3 [shape = 'u8[8192]{0}', space=vmem, size = 0x2000, scoped, tag = 'input window, operand 0, single buffered']
    #allocation4 [shape = 's32[1]{0}', space=sflag, size = 0x4, scoped, tag = 'scoped memory for decoder_forward.2']
    #allocation5 [shape = 's32[1]{0}', space=sflag, size = 0x4, scoped, tag = 'scoped memory for decoder_forward.2']
    #allocation6 [shape = 'u8[32768]{0}', space=vmem, size = 0x8000, scoped, tag = 'input window, operand 1, single buffered']
    #allocation7 [shape = 's32[1]{0}', space=sflag, size = 0x4, scoped, tag = 'scoped memory for decoder_forward.2']
    #allocation8 [shape = 'u8[16384]{0}', space=vmem, size = 0x4000, scoped, tag = 'input window, operand 2, single buffered']
    #allocation9 [shape = 'u8[512]{0}', space=vmem, size = 0x400, scoped, tag = 'input window, operand 3, single buffered']
    #allocation10 [shape = 's32[1]{0}', space=sflag, size = 0x4, scoped, tag = 'scoped memory for decoder_forward.2']
    #allocation11 [shape = 'u8[32768]{0}', space=vmem, size = 0x8000, scoped, tag = 'output window, operand 0, single buffered']
    %9 = vsyncpa [#allocation4], 0
    %10 = vsyncpa [#allocation7], 0
    %11 = vsyncpa [#allocation10], 0
    %12 = vsyncpa [#allocation5], 0
    // Predicated region
    $region2: #{decoder_forward.2} parent=1 // pred_check
      _
    $region3: #{decoder_forward.2} parent=1 // pred_check_branch
      %14 = sbr.rel (0) target = $region5
    $region4: #{decoder_forward.2} parent=1 // pred_region
      %s16 = ssub.s32 256, 256
      %17 = vsyncadd [#allocation4], %s16
      %s18 = sshll.u32 [#allocation3], 4
      %s19 = int_to_ptr.vmem [resolvable:$true] %s18
      %24 = dma.hbm_to_vmem [thread:$0]  %s0, 256, %s19, [#allocation4], 64, 64, 4
    $region5: #{decoder_forward.2} parent=1 // pred_fallthru
      _
    // Predicated region
    $region6: #{decoder_forward.2} parent=1 // pred_check
      _
    $region7: #{decoder_forward.2} parent=1 // pred_check_branch
      %26 = sbr.rel (0) target = $region9
    $region8: #{decoder_forward.2} parent=1 // pred_region
      %s28 = ssub.s32 1024, 1024
      %29 = vsyncadd [#allocation7], %s28
      %s30 = sshll.u32 [#allocation6], 4
      %s31 = int_to_ptr.vmem [resolvable:$true] %s30
      %36 = dma.hbm_to_vmem [thread:$0]  %s1, 1024, %s31, [#allocation7], 64, 64, 4
    $region9: #{decoder_forward.2} parent=1 // pred_fallthru
      _
    // Predicated region
    $region10: #{decoder_forward.2} parent=1 // pred_check
      _
    $region11: #{decoder_forward.2} parent=1 // pred_check_branch
      %38 = sbr.rel (0) target = $region13
    $region12: #{decoder_forward.2} parent=1 // pred_region
      %s40 = ssub.s32 512, 512
      %41 = vsyncadd [#allocation7], %s40
      %s42 = sshll.u32 [#allocation8], 4
      %s43 = int_to_ptr.vmem [resolvable:$true] %s42
      %48 = dma.hbm_to_vmem [thread:$0]  %s2, 512, %s43, [#allocation7], 64, 64, 4
    $region13: #{decoder_forward.2} parent=1 // pred_fallthru
      _
    // Predicated region
    $region14: #{decoder_forward.2} parent=1 // pred_check
      _
    $region15: #{decoder_forward.2} parent=1 // pred_check_branch
      %50 = sbr.rel (0) target = $region17
    $region16: #{decoder_forward.2} parent=1 // pred_region
      %s52 = ssub.s32 16, 16
      %53 = vsyncadd [#allocation10], %s52
      %s55 = sshll.u32 [#allocation9], 4
      %s56 = int_to_ptr.vmem [resolvable:$true] %s55
      %58 = dma.hbm_to_vmem [thread:$0]  %s3, 16, %s56, [#allocation10]
    $region17: #{decoder_forward.2} parent=1 // pred_fallthru
      _
    // Predicated region
    $region18: #{decoder_forward.2} parent=1 // pred_check
      _
    $region19: #{decoder_forward.2} parent=1 // pred_check_branch
      %60 = sbr.rel (0) target = $region21
    $region20: #{decoder_forward.2} parent=1 // pred_region
      %61 = dma.done [#allocation4], 256
    $region21: #{decoder_forward.2} parent=1 // pred_fallthru
      _
    // Predicated region
    $region22: #{decoder_forward.2} parent=1 // pred_check
      _
    $region23: #{decoder_forward.2} parent=1 // pred_check_branch
      %63 = sbr.rel (0) target = $region25
    $region24: #{decoder_forward.2} parent=1 // pred_region
      %64 = dma.done [#allocation7], 1024
    $region25: #{decoder_forward.2} parent=1 // pred_fallthru
      _
    // Predicated region
    $region26: #{decoder_forward.2} parent=1 // pred_check
      _
    $region27: #{decoder_forward.2} parent=1 // pred_check_branch
      %66 = sbr.rel (0) target = $region29
    $region28: #{decoder_forward.2} parent=1 // pred_region
      %67 = dma.done [#allocation7], 512
    $region29: #{decoder_forward.2} parent=1 // pred_fallthru
      _
    // Predicated region
    $region30: #{decoder_forward.2} parent=1 // pred_check
      _
    $region31: #{decoder_forward.2} parent=1 // pred_check_branch
      %69 = sbr.rel (0) target = $region33
    $region32: #{decoder_forward.2} parent=1 // pred_region
      %70 = dma.done [#allocation10], 16
    $region33: #{decoder_forward.2} parent=1 // pred_fallthru
      _
    %v72 = vld [vmem:[#allocation3] sm:$0xf]
    %v73 = vld [vmem:[#allocation3 + $0x4] sm:$0xf]
    %v74 = vld [vmem:[#allocation3 + $0x8] sm:$0xf]
    %v75 = vld [vmem:[#allocation3 + $0xc] sm:$0xf]
    %v76 = vld [vmem:[#allocation8] sm:$0xf]
    %v77 = vld [vmem:[#allocation8 + $0x4] sm:$0xf]
    %v78 = vld [vmem:[#allocation8 + $0x8] sm:$0xf]
    %v79 = vld [vmem:[#allocation8 + $0xc] sm:$0xf]
    %v80 = vld [vmem:[#allocation8 + $0x10] sm:$0xf]
    %v81 = vld [vmem:[#allocation8 + $0x14] sm:$0xf]
    %v82 = vld [vmem:[#allocation8 + $0x18] sm:$0xf]
    %v83 = vld [vmem:[#allocation8 + $0x1c] sm:$0xf]
    %v88 = vunpack.c.l.b16 %v72
    %v89 = vunpack.c.l.b16 %v73
    %v90 = vunpack.c.l.b16 %v74
    %v91 = vunpack.c.l.b16 %v75
    %v92 = vpack.c.b16 %v89, %v88
    %v93 = vpack.c.b16 %v91, %v90
    %v102 = vunpack.c.l.b16 %v76
    %v103 = vunpack.c.l.b16 %v77
    %v104 = vunpack.c.l.b16 %v78
    %v105 = vunpack.c.l.b16 %v79
    %v106 = vunpack.c.l.b16 %v80
    %v107 = vunpack.c.l.b16 %v81
    %v108 = vunpack.c.l.b16 %v82
    %v109 = vunpack.c.l.b16 %v83
    %v110 = vpack.c.b16 %v103, %v102
    %v111 = vpack.c.b16 %v105, %v104
    %v112 = vpack.c.b16 %v107, %v106
    %v113 = vpack.c.b16 %v109, %v108
    %vm118 = vcmask 523264
    %v120 = vsel %vm118, %v92, 0
    %v123 = vsel %vm118, %v93, 0
    %125 = vmatprep.subr.bf16.mxu0 0
    %126 = vmatpush1.bf16.msra.mxu0 %v110
    %127 = vmatprep.subr.bf16.mxu0 0
    %128 = vmatpush1.bf16.msra.mxu0 %v111
    %129 = vmatprep.subr.bf16.mxu0 0
    %130 = vmatpush1.bf16.msra.mxu0 %v112
    %131 = vmatprep.subr.bf16.mxu0 0
    %132 = vmatpush1.bf16.msra.mxu0 %v113
    %133 = vmatprep.subr.bf16.mxu0 0
    %134 = vmatpush1.bf16.msra.mxu0 0
    %135 = vmatprep.subr.bf16.mxu0 0
    %136 = vmatpush1.bf16.msra.mxu0 0
    %137 = vmatprep.subr.bf16.mxu0 0
    %138 = vmatpush1.bf16.msra.mxu0 0
    %139 = vmatprep.subr.bf16.mxu0 0
    %140 = vmatpush1.bf16.msra.mxu0 0
    %141 = vmatprep.subr.bf16.mxu0 0
    %142 = vmatpush1.bf16.msra.mxu0 0
    %143 = vmatprep.subr.bf16.mxu0 0
    %144 = vmatpush1.bf16.msra.mxu0 0
    %145 = vmatprep.subr.bf16.mxu0 0
    %146 = vmatpush1.bf16.msra.mxu0 0
    %147 = vmatprep.subr.bf16.mxu0 0
    %148 = vmatpush1.bf16.msra.mxu0 0
    %149 = vmatprep.subr.bf16.mxu0 0
    %150 = vmatpush1.bf16.msra.mxu0 0
    %151 = vmatprep.subr.bf16.mxu0 0
    %152 = vmatpush1.bf16.msra.mxu0 0
    %153 = vmatprep.subr.bf16.mxu0 0
    %154 = vmatpush1.bf16.msra.mxu0 0
    %155 = vmatprep.subr.bf16.mxu0 0
    %156 = vmatpush1.bf16.msra.mxu0 0
    %157 = vmatprep.mubr.bf16.mxu0 0
    %158 = vmatmul.mubr.bf16.gmra.mrb[0].mxu0 %v120
    %v159 = vpop.f32.mrb[0].mxu0
    %v160 = vadd.f32 0.0, %v159
    %v161 = vpop.f32.mrb[0].mxu0
    %v162 = vpop.f32.mrb[0].mxu0
    %v163 = vadd.f32 0.0, %v162
    %v164 = vpop.f32.mrb[0].mxu0
    %165 = vmatprep.mubr.bf16.mxu0 0
    %166 = vmatmul.mubr.bf16.gmra.mrb[0].mxu0 %v123
    %v167 = vpop.f32.mrb[0].mxu0
    %v168 = vadd.f32 0.0, %v167
    %v169 = vpop.f32.mrb[0].mxu0
    %v170 = vpop.f32.mrb[0].mxu0
    %v171 = vadd.f32 0.0, %v170
    %v172 = vpop.f32.mrb[0].mxu0
    %173 = vdwg.mxu0
    %v174 = vpack.c.bf16 %v163, %v160
    %v175 = vpack.c.bf16 %v171, %v168
    %vm176 = vcmask 261120
    %177 = vst.msk [vmem:[#allocation2] sm:$0xff] %vm176, %v174
    %178 = vst.msk [vmem:[#allocation2 + $0x8] sm:$0xff] %vm176, %v175
    %v179 = vld [vmem:[#allocation6] sm:$0xf]
    %v180 = vld [vmem:[#allocation6 + $0x4] sm:$0xf]
    %v181 = vld [vmem:[#allocation6 + $0x8] sm:$0xf]
    %v182 = vld [vmem:[#allocation6 + $0xc] sm:$0xf]
    %v187 = vunpack.c.l.b16 %v179
    %v188 = vunpack.c.l.b16 %v180
    %v189 = vunpack.c.l.b16 %v181
    %v190 = vunpack.c.l.b16 %v182
    %v191 = vpack.c.b16 %v188, %v187
    %v192 = vpack.c.b16 %v190, %v189
    %193 = vrot.lane.b32.xlu0 %v191, 32
    %v194 = vpop.permute.xlu0 %193
    %195 = vrot.lane.b32.xlu0 %v192, 32
    %v196 = vpop.permute.xlu0 %195
    %vm199 = vcmask 523520
    %200 = vst.msk [vmem:[#allocation2] sm:$0xff] %vm199, %v194
    %201 = vst.msk [vmem:[#allocation2 + $0x8] sm:$0xff] %vm199, %v196
    %204 = vrot.lane.b32.xlu0 %v174, 96
    %v205 = vpop.permute.xlu0 %204
    %206 = vrot.lane.b32.xlu0 %v175, 96
    %v207 = vpop.permute.xlu0 %206
    %210 = vst.msk [vmem:[#allocation2 + $0x10] sm:$0xff] %vm176, %v205
    %211 = vst.msk [vmem:[#allocation2 + $0x18] sm:$0xff] %vm176, %v207
    %s212 = scalar_lea.vmem [#allocation6], 16
    %v213 = vld [vmem:[%s212] sm:$0xf]
    %v214 = vld [vmem:[%s212 + $0x4] sm:$0xf]
    %v215 = vld [vmem:[%s212 + $0x8] sm:$0xf]
    %v216 = vld [vmem:[%s212 + $0xc] sm:$0xf]
    %v221 = vunpack.c.l.b16 %v213
    %v222 = vunpack.c.l.b16 %v214
    %v223 = vunpack.c.l.b16 %v215
    %v224 = vunpack.c.l.b16 %v216
    %v225 = vpack.c.b16 %v222, %v221
    %v226 = vpack.c.b16 %v224, %v223
    %227 = vrot.lane.b32.xlu0 %v225, 32
    %v228 = vpop.permute.xlu0 %227
    %229 = vrot.lane.b32.xlu0 %v226, 32
    %v230 = vpop.permute.xlu0 %229
    %233 = vst.msk [vmem:[#allocation2 + $0x10] sm:$0xff] %vm199, %v228
    %234 = vst.msk [vmem:[#allocation2 + $0x18] sm:$0xff] %vm199, %v230
    %235 = vrot.lane.b32.xlu0 %v174, 64
    %v236 = vpop.permute.xlu0 %235
    %237 = vrot.lane.b32.xlu0 %v175, 64
    %v238 = vpop.permute.xlu0 %237
    %241 = vst.msk [vmem:[#allocation2 + $0x20] sm:$0xff] %vm176, %v236
    %242 = vst.msk [vmem:[#allocation2 + $0x28] sm:$0xff] %vm176, %v238
    %s243 = scalar_lea.vmem [#allocation6], 32
    %v244 = vld [vmem:[%s243] sm:$0xf]
    %v245 = vld [vmem:[%s243 + $0x4] sm:$0xf]
    %v246 = vld [vmem:[%s243 + $0x8] sm:$0xf]
    %v247 = vld [vmem:[%s243 + $0xc] sm:$0xf]
    %v252 = vunpack.c.l.b16 %v244
    %v253 = vunpack.c.l.b16 %v245
    %v254 = vunpack.c.l.b16 %v246
    %v255 = vunpack.c.l.b16 %v247
    %v256 = vpack.c.b16 %v253, %v252
    %v257 = vpack.c.b16 %v255, %v254
    %258 = vrot.lane.b32.xlu0 %v256, 32
    %v259 = vpop.permute.xlu0 %258
    %260 = vrot.lane.b32.xlu0 %v257, 32
    %v261 = vpop.permute.xlu0 %260
    %264 = vst.msk [vmem:[#allocation2 + $0x20] sm:$0xff] %vm199, %v259
    %265 = vst.msk [vmem:[#allocation2 + $0x28] sm:$0xff] %vm199, %v261
    %266 = vrot.lane.b32.xlu0 %v174, 32
    %v267 = vpop.permute.xlu0 %266
    %268 = vrot.lane.b32.xlu0 %v175, 32
    %v269 = vpop.permute.xlu0 %268
    %272 = vst.msk [vmem:[#allocation2 + $0x30] sm:$0xff] %vm176, %v267
    %273 = vst.msk [vmem:[#allocation2 + $0x38] sm:$0xff] %vm176, %v269
    %s274 = scalar_lea.vmem [#allocation6], 48
    %v275 = vld [vmem:[%s274] sm:$0xf]
    %v276 = vld [vmem:[%s274 + $0x4] sm:$0xf]
    %v277 = vld [vmem:[%s274 + $0x8] sm:$0xf]
    %v278 = vld [vmem:[%s274 + $0xc] sm:$0xf]
    %v283 = vunpack.c.l.b16 %v275
    %v284 = vunpack.c.l.b16 %v276
    %v285 = vunpack.c.l.b16 %v277
    %v286 = vunpack.c.l.b16 %v278
    %v287 = vpack.c.b16 %v284, %v283
    %v288 = vpack.c.b16 %v286, %v285
    %289 = vrot.lane.b32.xlu0 %v287, 32
    %v290 = vpop.permute.xlu0 %289
    %291 = vrot.lane.b32.xlu0 %v288, 32
    %v292 = vpop.permute.xlu0 %291
    %295 = vst.msk [vmem:[#allocation2 + $0x30] sm:$0xff] %vm199, %v290
    %296 = vst.msk [vmem:[#allocation2 + $0x38] sm:$0xff] %vm199, %v292
    %v297 = vld [vmem:[#allocation2] sm:$0xff]
    %v298 = vld [vmem:[#allocation2 + $0x8] sm:$0xff]
    %v299 = vld [vmem:[#allocation2 + $0x10] sm:$0xff]
    %v300 = vld [vmem:[#allocation2 + $0x18] sm:$0xff]
    %v301 = vld [vmem:[#allocation2 + $0x20] sm:$0xff]
    %v302 = vld [vmem:[#allocation2 + $0x28] sm:$0xff]
    %v303 = vld [vmem:[#allocation2 + $0x30] sm:$0xff]
    %v304 = vld [vmem:[#allocation2 + $0x38] sm:$0xff]
    %v305 = vld [vmem:[#allocation8] sm:$0xf]
    %v306 = vld [vmem:[#allocation8 + $0x4] sm:$0xf]
    %v307 = vld [vmem:[#allocation8 + $0x8] sm:$0xf]
    %v308 = vld [vmem:[#allocation8 + $0xc] sm:$0xf]
    %v309 = vld [vmem:[#allocation8 + $0x10] sm:$0xf]
    %v310 = vld [vmem:[#allocation8 + $0x14] sm:$0xf]
    %v311 = vld [vmem:[#allocation8 + $0x18] sm:$0xf]
    %v312 = vld [vmem:[#allocation8 + $0x1c] sm:$0xf]
    %v313 = vld [vmem:[#allocation9] sm:$0x1]
    %v315 = vlaneseq
    %v316 = vshrl.u32 %v315, 7
    %v317 = vsub.s32 0, %v316
    %v318 = vrot.slane %v313, %v317
    %v328 = vunpack.c.l.b16 %v305
    %v329 = vunpack.c.l.b16 %v306
    %v330 = vunpack.c.l.b16 %v307
    %v331 = vunpack.c.l.b16 %v308
    %v332 = vunpack.c.l.b16 %v309
    %v333 = vunpack.c.l.b16 %v310
    %v334 = vunpack.c.l.b16 %v311
    %v335 = vunpack.c.l.b16 %v312
    %v336 = vpack.c.b16 %v329, %v328
    %v337 = vpack.c.b16 %v331, %v330
    %v338 = vpack.c.b16 %v333, %v332
    %v339 = vpack.c.b16 %v335, %v334
    %v345 = vsel %vm118, %v297, 0
    %v348 = vsel %vm118, %v298, 0
    %v351 = vsel %vm118, %v299, 0
    %v354 = vsel %vm118, %v300, 0
    %v357 = vsel %vm118, %v301, 0
    %v360 = vsel %vm118, %v302, 0
    %v363 = vsel %vm118, %v303, 0
    %v366 = vsel %vm118, %v304, 0
    %368 = vmatprep.subr.bf16.mxu0 0
    %369 = vmatpush1.bf16.msra.mxu0 %v336
    %370 = vmatprep.subr.bf16.mxu0 0
    %371 = vmatpush1.bf16.msra.mxu0 %v337
    %372 = vmatprep.subr.bf16.mxu0 0
    %373 = vmatpush1.bf16.msra.mxu0 %v338
    %374 = vmatprep.subr.bf16.mxu0 0
    %375 = vmatpush1.bf16.msra.mxu0 %v339
    %376 = vmatprep.subr.bf16.mxu0 0
    %377 = vmatpush1.bf16.msra.mxu0 0
    %378 = vmatprep.subr.bf16.mxu0 0
    %379 = vmatpush1.bf16.msra.mxu0 0
    %380 = vmatprep.subr.bf16.mxu0 0
    %381 = vmatpush1.bf16.msra.mxu0 0
    %382 = vmatprep.subr.bf16.mxu0 0
    %383 = vmatpush1.bf16.msra.mxu0 0
    %384 = vmatprep.subr.bf16.mxu0 0
    %385 = vmatpush1.bf16.msra.mxu0 0
    %386 = vmatprep.subr.bf16.mxu0 0
    %387 = vmatpush1.bf16.msra.mxu0 0
    %388 = vmatprep.subr.bf16.mxu0 0
    %389 = vmatpush1.bf16.msra.mxu0 0
    %390 = vmatprep.subr.bf16.mxu0 0
    %391 = vmatpush1.bf16.msra.mxu0 0
    %392 = vmatprep.subr.bf16.mxu0 0
    %393 = vmatpush1.bf16.msra.mxu0 0
    %394 = vmatprep.subr.bf16.mxu0 0
    %395 = vmatpush1.bf16.msra.mxu0 0
    %396 = vmatprep.subr.bf16.mxu0 0
    %397 = vmatpush1.bf16.msra.mxu0 0
    %398 = vmatprep.subr.bf16.mxu0 0
    %399 = vmatpush1.bf16.msra.mxu0 0
    %400 = vmatprep.mubr.bf16.mxu0 0
    %401 = vmatmul.mubr.bf16.gmra.mrb[0].mxu0 %v345
    %v402 = vpop.f32.mrb[0].mxu0
    %v403 = vadd.f32 %v318, %v402
    %v404 = vpop.f32.mrb[0].mxu0
    %v405 = vpop.f32.mrb[0].mxu0
    %v406 = vadd.f32 %v318, %v405
    %v407 = vpop.f32.mrb[0].mxu0
    %408 = vmatprep.mubr.bf16.mxu0 0
    %409 = vmatmul.mubr.bf16.gmra.mrb[0].mxu0 %v348
    %v410 = vpop.f32.mrb[0].mxu0
    %v411 = vadd.f32 %v318, %v410
    %v412 = vpop.f32.mrb[0].mxu0
    %v413 = vpop.f32.mrb[0].mxu0
    %v414 = vadd.f32 %v318, %v413
    %v415 = vpop.f32.mrb[0].mxu0
    %416 = vmatprep.mubr.bf16.mxu0 0
    %417 = vmatmul.mubr.bf16.gmra.mrb[0].mxu0 %v351
    %v418 = vpop.f32.mrb[0].mxu0
    %v419 = vadd.f32 %v318, %v418
    %v420 = vpop.f32.mrb[0].mxu0
    %v421 = vpop.f32.mrb[0].mxu0
    %v422 = vadd.f32 %v318, %v421
    %v423 = vpop.f32.mrb[0].mxu0
    %424 = vmatprep.mubr.bf16.mxu0 0
    %425 = vmatmul.mubr.bf16.gmra.mrb[0].mxu0 %v354
    %v426 = vpop.f32.mrb[0].mxu0
    %v427 = vadd.f32 %v318, %v426
    %v428 = vpop.f32.mrb[0].mxu0
    %v429 = vpop.f32.mrb[0].mxu0
    %v430 = vadd.f32 %v318, %v429
    %v431 = vpop.f32.mrb[0].mxu0
    %432 = vmatprep.mubr.bf16.mxu0 0
    %433 = vmatmul.mubr.bf16.gmra.mrb[0].mxu0 %v357
    %v434 = vpop.f32.mrb[0].mxu0
    %v435 = vadd.f32 %v318, %v434
    %v436 = vpop.f32.mrb[0].mxu0
    %v437 = vpop.f32.mrb[0].mxu0
    %v438 = vadd.f32 %v318, %v437
    %v439 = vpop.f32.mrb[0].mxu0
    %440 = vmatprep.mubr.bf16.mxu0 0
    %441 = vmatmul.mubr.bf16.gmra.mrb[0].mxu0 %v360
    %v442 = vpop.f32.mrb[0].mxu0
    %v443 = vadd.f32 %v318, %v442
    %v444 = vpop.f32.mrb[0].mxu0
    %v445 = vpop.f32.mrb[0].mxu0
    %v446 = vadd.f32 %v318, %v445
    %v447 = vpop.f32.mrb[0].mxu0
    %448 = vmatprep.mubr.bf16.mxu0 0
    %449 = vmatmul.mubr.bf16.gmra.mrb[0].mxu0 %v363
    %v450 = vpop.f32.mrb[0].mxu0
    %v451 = vadd.f32 %v318, %v450
    %v452 = vpop.f32.mrb[0].mxu0
    %v453 = vpop.f32.mrb[0].mxu0
    %v454 = vadd.f32 %v318, %v453
    %v455 = vpop.f32.mrb[0].mxu0
    %456 = vmatprep.mubr.bf16.mxu0 0
    %457 = vmatmul.mubr.bf16.gmra.mrb[0].mxu0 %v366
    %v458 = vpop.f32.mrb[0].mxu0
    %v459 = vadd.f32 %v318, %v458
    %v460 = vpop.f32.mrb[0].mxu0
    %v461 = vpop.f32.mrb[0].mxu0
    %v462 = vadd.f32 %v318, %v461
    %v463 = vpop.f32.mrb[0].mxu0
    %464 = vdwg.mxu0
    %v465 = vpack.c.bf16 %v406, %v403
    %v466 = vpack.c.bf16 %v414, %v411
    %v467 = vpack.c.bf16 %v422, %v419
    %v468 = vpack.c.bf16 %v430, %v427
    %v469 = vpack.c.bf16 %v438, %v435
    %v470 = vpack.c.bf16 %v446, %v443
    %v471 = vpack.c.bf16 %v454, %v451
    %v472 = vpack.c.bf16 %v462, %v459
    %v475 = vunpack.c.l.b16 %v465
    %v476 = vunpack.c.h.b16 %v465
    %v477 = vunpack.c.l.b16 %v466
    %v478 = vunpack.c.h.b16 %v466
    %v479 = vpack.c.b16 %v475, %v475
    %v480 = vpack.c.b16 %v476, %v476
    %v481 = vpack.c.b16 %v477, %v477
    %v482 = vpack.c.b16 %v478, %v478
    %487 = vst [vmem:[#allocation11] sm:$0xf] %v479
    %488 = vst [vmem:[#allocation11 + $0x10] sm:$0xf] %v480
    %489 = vst [vmem:[#allocation11 + $0x20] sm:$0xf] %v481
    %490 = vst [vmem:[#allocation11 + $0x30] sm:$0xf] %v482
    %v493 = vunpack.c.l.b16 %v467
    %v494 = vunpack.c.h.b16 %v467
    %v495 = vunpack.c.l.b16 %v468
    %v496 = vunpack.c.h.b16 %v468
    %v497 = vpack.c.b16 %v493, %v493
    %v498 = vpack.c.b16 %v494, %v494
    %v499 = vpack.c.b16 %v495, %v495
    %v500 = vpack.c.b16 %v496, %v496
    %505 = vst [vmem:[#allocation11 + $0x4] sm:$0xf] %v497
    %506 = vst [vmem:[#allocation11 + $0x14] sm:$0xf] %v498
    %507 = vst [vmem:[#allocation11 + $0x24] sm:$0xf] %v499
    %508 = vst [vmem:[#allocation11 + $0x34] sm:$0xf] %v500
    %v511 = vunpack.c.l.b16 %v469
    %v512 = vunpack.c.h.b16 %v469
    %v513 = vunpack.c.l.b16 %v470
    %v514 = vunpack.c.h.b16 %v470
    %v515 = vpack.c.b16 %v511, %v511
    %v516 = vpack.c.b16 %v512, %v512
    %v517 = vpack.c.b16 %v513, %v513
    %v518 = vpack.c.b16 %v514, %v514
    %523 = vst [vmem:[#allocation11 + $0x8] sm:$0xf] %v515
    %524 = vst [vmem:[#allocation11 + $0x18] sm:$0xf] %v516
    %525 = vst [vmem:[#allocation11 + $0x28] sm:$0xf] %v517
    %526 = vst [vmem:[#allocation11 + $0x38] sm:$0xf] %v518
    %v529 = vunpack.c.l.b16 %v471
    %v530 = vunpack.c.h.b16 %v471
    %v531 = vunpack.c.l.b16 %v472
    %v532 = vunpack.c.h.b16 %v472
    %v533 = vpack.c.b16 %v529, %v529
    %v534 = vpack.c.b16 %v530, %v530
    %v535 = vpack.c.b16 %v531, %v531
    %v536 = vpack.c.b16 %v532, %v532
    %541 = vst [vmem:[#allocation11 + $0xc] sm:$0xf] %v533
    %542 = vst [vmem:[#allocation11 + $0x1c] sm:$0xf] %v534
    %543 = vst [vmem:[#allocation11 + $0x2c] sm:$0xf] %v535
    %544 = vst [vmem:[#allocation11 + $0x3c] sm:$0xf] %v536
    // Predicated region
    $region34: #{decoder_forward.2} parent=1 // pred_check
      _
    $region35: #{decoder_forward.2} parent=1 // pred_check_branch
      %546 = sbr.rel (0) target = $region37
    $region36: #{decoder_forward.2} parent=1 // pred_region
      %s548 = ssub.s32 1024, 1024
      %549 = vsyncadd [#allocation5], %s548
      %s550 = sshll.u32 [#allocation11], 4
      %s551 = int_to_ptr.vmem [resolvable:$true] %s550
      %556 = dma.vmem_to_hbm [thread:$0]  %s551, 1024, %s4, [#allocation5], 256, 256, 16
    $region37: #{decoder_forward.2} parent=1 // pred_fallthru
      _
    // Predicated region
    $region38: #{decoder_forward.2} parent=1 // pred_check
      _
    $region39: #{decoder_forward.2} parent=1 // pred_check_branch
      %558 = sbr.rel (0) target = $region41
    $region40: #{decoder_forward.2} parent=1 // pred_region
      %559 = dma.done [#allocation5], 1024
    $region41: #{decoder_forward.2} parent=1 // pred_fallthru
      _
    %560 = vsyncpa [#allocation4], 1
    %561 = vsyncpa [#allocation7], 1
    %562 = vsyncpa [#allocation10], 1
    %563 = vsyncpa [#allocation5], 1

// kernel: decoder_forward.3
$region0: #{decoder_forward.3}
  #allocation0 [shape = 'u32[]', space=smem, size = 0x4, offset = 0x4, fixed_abs, tag = 'smem constant byte address 0x4 - core index']
  #allocation1 [shape = 'u32[144,128]{1,0:T(1,128)}', space=vmem, size = 0x12000, scoped, tag = 'internal scratch']
  #allocation2 [shape = 'bf16[2048,32]{1,0:T(16,128)(2,1)}', space=vmem, size = 0x80000, scoped, tag = 'scratch operand']
  %s0 = inlined_call_operand.hbm [shape: bf16[512,32], index: 0, kind: input, shape index: {}]
  %s1 = inlined_call_operand.hbm [shape: bf16[4,512,16], index: 1, kind: input, shape index: {}]
  %s2 = inlined_call_operand.hbm [shape: bf16[32,64], index: 2, kind: input, shape index: {}]
  %s3 = inlined_call_operand.hbm [shape: f32[1,64], index: 3, kind: input, shape index: {}]
  %s4 = inlined_call_operand.hbm [shape: f32[512,256], index: 4, kind: output, shape index: {}]
  %s5 = sld [smem:[#allocation0]]
  $region42: #{decoder_forward.3} parent=0
    _
  %s7 = ssub.s32 1, %s5
  %s8 = scalar_select 0, %s7, %s5
  $region1: #{decoder_forward.3} parent=0
    #allocation3 [shape = 'u8[131072]{0}', space=vmem, size = 0x20000, scoped, tag = 'input window, operand 0, single buffered']
    #allocation4 [shape = 's32[1]{0}', space=sflag, size = 0x4, scoped, tag = 'scoped memory for decoder_forward.3']
    #allocation5 [shape = 's32[1]{0}', space=sflag, size = 0x4, scoped, tag = 'scoped memory for decoder_forward.3']
    #allocation6 [shape = 'u8[524288]{0}', space=vmem, size = 0x80000, scoped, tag = 'input window, operand 1, single buffered']
    #allocation7 [shape = 's32[1]{0}', space=sflag, size = 0x4, scoped, tag = 'scoped memory for decoder_forward.3']
    #allocation8 [shape = 'u8[8192]{0}', space=vmem, size = 0x2000, scoped, tag = 'input window, operand 2, single buffered']
    #allocation9 [shape = 'u8[512]{0}', space=vmem, size = 0x400, scoped, tag = 'input window, operand 3, single buffered']
    #allocation10 [shape = 's32[1]{0}', space=sflag, size = 0x4, scoped, tag = 'scoped memory for decoder_forward.3']
    #allocation11 [shape = 'u8[524288]{0}', space=vmem, size = 0x80000, scoped, tag = 'output window, operand 0, single buffered']
    %9 = vsyncpa [#allocation4], 0
    %10 = vsyncpa [#allocation7], 0
    %11 = vsyncpa [#allocation10], 0
    %12 = vsyncpa [#allocation5], 0
    // Predicated region
    $region2: #{decoder_forward.3} parent=1 // pred_check
      _
    $region3: #{decoder_forward.3} parent=1 // pred_check_branch
      %14 = sbr.rel (0) target = $region5
    $region4: #{decoder_forward.3} parent=1 // pred_region
      %s16 = ssub.s32 4096, 4096
      %17 = vsyncadd [#allocation4], %s16
      %s18 = sshll.u32 [#allocation3], 4
      %s19 = int_to_ptr.vmem [resolvable:$true] %s18
      %24 = dma.hbm_to_vmem [thread:$0]  %s0, 4096, %s19, [#allocation4], 64, 64, 4
    $region5: #{decoder_forward.3} parent=1 // pred_fallthru
      _
    // Predicated region
    $region6: #{decoder_forward.3} parent=1 // pred_check
      _
    $region7: #{decoder_forward.3} parent=1 // pred_check_branch
      %26 = sbr.rel (0) target = $region9
    $region8: #{decoder_forward.3} parent=1 // pred_region
      %s28 = ssub.s32 16384, 16384
      %29 = vsyncadd [#allocation7], %s28
      %s30 = sshll.u32 [#allocation6], 4
      %s31 = int_to_ptr.vmem [resolvable:$true] %s30
      %36 = dma.hbm_to_vmem [thread:$0]  %s1, 16384, %s31, [#allocation7], 64, 64, 4
    $region9: #{decoder_forward.3} parent=1 // pred_fallthru
      _
    // Predicated region
    $region10: #{decoder_forward.3} parent=1 // pred_check
      _
    $region11: #{decoder_forward.3} parent=1 // pred_check_branch
      %38 = sbr.rel (0) target = $region13
    $region12: #{decoder_forward.3} parent=1 // pred_region
      %s40 = ssub.s32 256, 256
      %41 = vsyncadd [#allocation7], %s40
      %s42 = sshll.u32 [#allocation8], 4
      %s43 = int_to_ptr.vmem [resolvable:$true] %s42
      %48 = dma.hbm_to_vmem [thread:$0]  %s2, 256, %s43, [#allocation7], 64, 64, 4
    $region13: #{decoder_forward.3} parent=1 // pred_fallthru
      _
    // Predicated region
    $region14: #{decoder_forward.3} parent=1 // pred_check
      _
    $region15: #{decoder_forward.3} parent=1 // pred_check_branch
      %50 = sbr.rel (0) target = $region17
    $region16: #{decoder_forward.3} parent=1 // pred_region
      %s52 = ssub.s32 16, 16
      %53 = vsyncadd [#allocation10], %s52
      %s55 = sshll.u32 [#allocation9], 4
      %s56 = int_to_ptr.vmem [resolvable:$true] %s55
      %58 = dma.hbm_to_vmem [thread:$0]  %s3, 16, %s56, [#allocation10]
    $region17: #{decoder_forward.3} parent=1 // pred_fallthru
      _
    // Predicated region
    $region18: #{decoder_forward.3} parent=1 // pred_check
      _
    $region19: #{decoder_forward.3} parent=1 // pred_check_branch
      %60 = sbr.rel (0) target = $region21
    $region20: #{decoder_forward.3} parent=1 // pred_region
      %61 = dma.done [#allocation4], 4096
    $region21: #{decoder_forward.3} parent=1 // pred_fallthru
      _
    // Predicated region
    $region22: #{decoder_forward.3} parent=1 // pred_check
      _
    $region23: #{decoder_forward.3} parent=1 // pred_check_branch
      %63 = sbr.rel (0) target = $region25
    $region24: #{decoder_forward.3} parent=1 // pred_region
      %64 = dma.done [#allocation7], 16384
    $region25: #{decoder_forward.3} parent=1 // pred_fallthru
      _
    // Predicated region
    $region26: #{decoder_forward.3} parent=1 // pred_check
      _
    $region27: #{decoder_forward.3} parent=1 // pred_check_branch
      %66 = sbr.rel (0) target = $region29
    $region28: #{decoder_forward.3} parent=1 // pred_region
      %67 = dma.done [#allocation7], 256
    $region29: #{decoder_forward.3} parent=1 // pred_fallthru
      _
    // Predicated region
    $region30: #{decoder_forward.3} parent=1 // pred_check
      _
    $region31: #{decoder_forward.3} parent=1 // pred_check_branch
      %69 = sbr.rel (0) target = $region33
    $region32: #{decoder_forward.3} parent=1 // pred_region
      %70 = dma.done [#allocation10], 16
    $region33: #{decoder_forward.3} parent=1 // pred_fallthru
      _
    %v72 = vld [vmem:[#allocation3] sm:$0xf]
    %v73 = vld [vmem:[#allocation3 + $0x4] sm:$0xf]
    %v74 = vld [vmem:[#allocation3 + $0x8] sm:$0xf]
    %v75 = vld [vmem:[#allocation3 + $0xc] sm:$0xf]
    %v76 = vld [vmem:[#allocation3 + $0x10] sm:$0xf]
    %v77 = vld [vmem:[#allocation3 + $0x14] sm:$0xf]
    %v78 = vld [vmem:[#allocation3 + $0x18] sm:$0xf]
    %v79 = vld [vmem:[#allocation3 + $0x1c] sm:$0xf]
    %v80 = vld [vmem:[#allocation3 + $0x20] sm:$0xf]
    %v81 = vld [vmem:[#allocation3 + $0x24] sm:$0xf]
    %v82 = vld [vmem:[#allocation3 + $0x28] sm:$0xf]
    %v83 = vld [vmem:[#allocation3 + $0x2c] sm:$0xf]
    %v84 = vld [vmem:[#allocation3 + $0x30] sm:$0xf]
    %v85 = vld [vmem:[#allocation3 + $0x34] sm:$0xf]
    %v86 = vld [vmem:[#allocation3 + $0x38] sm:$0xf]
    %v87 = vld [vmem:[#allocation3 + $0x3c] sm:$0xf]
    %v88 = vld [vmem:[#allocation3 + $0x40] sm:$0xf]
    %v89 = vld [vmem:[#allocation3 + $0x44] sm:$0xf]
    %v90 = vld [vmem:[#allocation3 + $0x48] sm:$0xf]
    %v91 = vld [vmem:[#allocation3 + $0x4c] sm:$0xf]
    %v92 = vld [vmem:[#allocation3 + $0x50] sm:$0xf]
    %v93 = vld [vmem:[#allocation3 + $0x54] sm:$0xf]
    %v94 = vld [vmem:[#allocation3 + $0x58] sm:$0xf]
    %v95 = vld [vmem:[#allocation3 + $0x5c] sm:$0xf]
    %v96 = vld [vmem:[#allocation3 + $0x60] sm:$0xf]
    %v97 = vld [vmem:[#allocation3 + $0x64] sm:$0xf]
    %v98 = vld [vmem:[#allocation3 + $0x68] sm:$0xf]
    %v99 = vld [vmem:[#allocation3 + $0x6c] sm:$0xf]
    %v100 = vld [vmem:[#allocation3 + $0x70] sm:$0xf]
    %v101 = vld [vmem:[#allocation3 + $0x74] sm:$0xf]
    %v102 = vld [vmem:[#allocation3 + $0x78] sm:$0xf]
    %v103 = vld [vmem:[#allocation3 + $0x7c] sm:$0xf]
    %v104 = vld [vmem:[#allocation3 + $0x80] sm:$0xf]
    %v105 = vld [vmem:[#allocation3 + $0x84] sm:$0xf]
    %v106 = vld [vmem:[#allocation3 + $0x88] sm:$0xf]
    %v107 = vld [vmem:[#allocation3 + $0x8c] sm:$0xf]
    %v108 = vld [vmem:[#allocation3 + $0x90] sm:$0xf]
    %v109 = vld [vmem:[#allocation3 + $0x94] sm:$0xf]
    %v110 = vld [vmem:[#allocation3 + $0x98] sm:$0xf]
    %v111 = vld [vmem:[#allocation3 + $0x9c] sm:$0xf]
    %v112 = vld [vmem:[#allocation3 + $0xa0] sm:$0xf]
    %v113 = vld [vmem:[#allocation3 + $0xa4] sm:$0xf]
    %v114 = vld [vmem:[#allocation3 + $0xa8] sm:$0xf]
    %v115 = vld [vmem:[#allocation3 + $0xac] sm:$0xf]
    %v116 = vld [vmem:[#allocation3 + $0xb0] sm:$0xf]
    %v117 = vld [vmem:[#allocation3 + $0xb4] sm:$0xf]
    %v118 = vld [vmem:[#allocation3 + $0xb8] sm:$0xf]
    %v119 = vld [vmem:[#allocation3 + $0xbc] sm:$0xf]
    %v120 = vld [vmem:[#allocation3 + $0xc0] sm:$0xf]
    %v121 = vld [vmem:[#allocation3 + $0xc4] sm:$0xf]
    %v122 = vld [vmem:[#allocation3 + $0xc8] sm:$0xf]
    %v123 = vld [vmem:[#allocation3 + $0xcc] sm:$0xf]
    %v124 = vld [vmem:[#allocation3 + $0xd0] sm:$0xf]
    %v125 = vld [vmem:[#allocation3 + $0xd4] sm:$0xf]
    %v126 = vld [vmem:[#allocation3 + $0xd8] sm:$0xf]
    %v127 = vld [vmem:[#allocation3 + $0xdc] sm:$0xf]
    %v128 = vld [vmem:[#allocation3 + $0xe0] sm:$0xf]
    %v129 = vld [vmem:[#allocation3 + $0xe4] sm:$0xf]
    %v130 = vld [vmem:[#allocation3 + $0xe8] sm:$0xf]
    %v131 = vld [vmem:[#allocation3 + $0xec] sm:$0xf]
    %v132 = vld [vmem:[#allocation3 + $0xf0] sm:$0xf]
    %v133 = vld [vmem:[#allocation3 + $0xf4] sm:$0xf]
    %v134 = vld [vmem:[#allocation3 + $0xf8] sm:$0xf]
    %v135 = vld [vmem:[#allocation3 + $0xfc] sm:$0xf]
    %v136 = vld [vmem:[#allocation8] sm:$0xf]
    %v137 = vld [vmem:[#allocation8 + $0x4] sm:$0xf]
    %v138 = vld [vmem:[#allocation8 + $0x8] sm:$0xf]
    %v139 = vld [vmem:[#allocation8 + $0xc] sm:$0xf]
    %v204 = vunpack.c.l.b16 %v72
    %v205 = vunpack.c.l.b16 %v73
    %v206 = vunpack.c.l.b16 %v74
    %v207 = vunpack.c.l.b16 %v75
    %v208 = vunpack.c.l.b16 %v76
    %v209 = vunpack.c.l.b16 %v77
    %v210 = vunpack.c.l.b16 %v78
    %v211 = vunpack.c.l.b16 %v79
    %v212 = vunpack.c.l.b16 %v80
    %v213 = vunpack.c.l.b16 %v81
    %v214 = vunpack.c.l.b16 %v82
    %v215 = vunpack.c.l.b16 %v83
    %v216 = vunpack.c.l.b16 %v84
    %v217 = vunpack.c.l.b16 %v85
    %v218 = vunpack.c.l.b16 %v86
    %v219 = vunpack.c.l.b16 %v87
    %v220 = vunpack.c.l.b16 %v88
    %v221 = vunpack.c.l.b16 %v89
    %v222 = vunpack.c.l.b16 %v90
    %v223 = vunpack.c.l.b16 %v91
    %v224 = vunpack.c.l.b16 %v92
    %v225 = vunpack.c.l.b16 %v93
    %v226 = vunpack.c.l.b16 %v94
    %v227 = vunpack.c.l.b16 %v95
    %v228 = vunpack.c.l.b16 %v96
    %v229 = vunpack.c.l.b16 %v97
    %v230 = vunpack.c.l.b16 %v98
    %v231 = vunpack.c.l.b16 %v99
    %v232 = vunpack.c.l.b16 %v100
    %v233 = vunpack.c.l.b16 %v101
    %v234 = vunpack.c.l.b16 %v102
    %v235 = vunpack.c.l.b16 %v103
    %v236 = vunpack.c.l.b16 %v104
    %v237 = vunpack.c.l.b16 %v105
    %v238 = vunpack.c.l.b16 %v106
    %v239 = vunpack.c.l.b16 %v107
    %v240 = vunpack.c.l.b16 %v108
    %v241 = vunpack.c.l.b16 %v109
    %v242 = vunpack.c.l.b16 %v110
    %v243 = vunpack.c.l.b16 %v111
    %v244 = vunpack.c.l.b16 %v112
    %v245 = vunpack.c.l.b16 %v113
    %v246 = vunpack.c.l.b16 %v114
    %v247 = vunpack.c.l.b16 %v115
    %v248 = vunpack.c.l.b16 %v116
    %v249 = vunpack.c.l.b16 %v117
    %v250 = vunpack.c.l.b16 %v118
    %v251 = vunpack.c.l.b16 %v119
    %v252 = vunpack.c.l.b16 %v120
    %v253 = vunpack.c.l.b16 %v121
    %v254 = vunpack.c.l.b16 %v122
    %v255 = vunpack.c.l.b16 %v123
    %v256 = vunpack.c.l.b16 %v124
    %v257 = vunpack.c.l.b16 %v125
    %v258 = vunpack.c.l.b16 %v126
    %v259 = vunpack.c.l.b16 %v127
    %v260 = vunpack.c.l.b16 %v128
    %v261 = vunpack.c.l.b16 %v129
    %v262 = vunpack.c.l.b16 %v130
    %v263 = vunpack.c.l.b16 %v131
    %v264 = vunpack.c.l.b16 %v132
    %v265 = vunpack.c.l.b16 %v133
    %v266 = vunpack.c.l.b16 %v134
    %v267 = vunpack.c.l.b16 %v135
    %v268 = vpack.c.b16 %v205, %v204
    %v269 = vpack.c.b16 %v207, %v206
    %v270 = vpack.c.b16 %v209, %v208
    %v271 = vpack.c.b16 %v211, %v210
    %v272 = vpack.c.b16 %v213, %v212
    %v273 = vpack.c.b16 %v215, %v214
    %v274 = vpack.c.b16 %v217, %v216
    %v275 = vpack.c.b16 %v219, %v218
    %v276 = vpack.c.b16 %v221, %v220
    %v277 = vpack.c.b16 %v223, %v222
    %v278 = vpack.c.b16 %v225, %v224
    %v279 = vpack.c.b16 %v227, %v226
    %v280 = vpack.c.b16 %v229, %v228
    %v281 = vpack.c.b16 %v231, %v230
    %v282 = vpack.c.b16 %v233, %v232
    %v283 = vpack.c.b16 %v235, %v234
    %v284 = vpack.c.b16 %v237, %v236
    %v285 = vpack.c.b16 %v239, %v238
    %v286 = vpack.c.b16 %v241, %v240
    %v287 = vpack.c.b16 %v243, %v242
    %v288 = vpack.c.b16 %v245, %v244
    %v289 = vpack.c.b16 %v247, %v246
    %v290 = vpack.c.b16 %v249, %v248
    %v291 = vpack.c.b16 %v251, %v250
    %v292 = vpack.c.b16 %v253, %v252
    %v293 = vpack.c.b16 %v255, %v254
    %v294 = vpack.c.b16 %v257, %v256
    %v295 = vpack.c.b16 %v259, %v258
    %v296 = vpack.c.b16 %v261, %v260
    %v297 = vpack.c.b16 %v263, %v262
    %v298 = vpack.c.b16 %v265, %v264
    %v299 = vpack.c.b16 %v267, %v266
    %v304 = vunpack.c.l.b16 %v136
    %v305 = vunpack.c.l.b16 %v137
    %v306 = vunpack.c.l.b16 %v138
    %v307 = vunpack.c.l.b16 %v139
    %v308 = vpack.c.b16 %v305, %v304
    %v309 = vpack.c.b16 %v307, %v306
    %vm312 = vcmask 261120
    %v314 = vsel %vm312, %v268, 0
    %v317 = vsel %vm312, %v269, 0
    %v320 = vsel %vm312, %v270, 0
    %v323 = vsel %vm312, %v271, 0
    %v326 = vsel %vm312, %v272, 0
    %v329 = vsel %vm312, %v273, 0
    %v332 = vsel %vm312, %v274, 0
    %v335 = vsel %vm312, %v275, 0
    %v338 = vsel %vm312, %v276, 0
    %v341 = vsel %vm312, %v277, 0
    %v344 = vsel %vm312, %v278, 0
    %v347 = vsel %vm312, %v279, 0
    %v350 = vsel %vm312, %v280, 0
    %v353 = vsel %vm312, %v281, 0
    %v356 = vsel %vm312, %v282, 0
    %v359 = vsel %vm312, %v283, 0
    %v362 = vsel %vm312, %v284, 0
    %v365 = vsel %vm312, %v285, 0
    %v368 = vsel %vm312, %v286, 0
    %v371 = vsel %vm312, %v287, 0
    %v374 = vsel %vm312, %v288, 0
    %v377 = vsel %vm312, %v289, 0
    %v380 = vsel %vm312, %v290, 0
    %v383 = vsel %vm312, %v291, 0
    %v386 = vsel %vm312, %v292, 0
    %v389 = vsel %vm312, %v293, 0
    %v392 = vsel %vm312, %v294, 0
    %v395 = vsel %vm312, %v295, 0
    %v398 = vsel %vm312, %v296, 0
    %v401 = vsel %vm312, %v297, 0
    %v404 = vsel %vm312, %v298, 0
    %v407 = vsel %vm312, %v299, 0
    %409 = vmatprep.subr.bf16.mxu0 0
    %410 = vmatpush1.bf16.msra.mxu0 %v308
    %411 = vmatprep.subr.bf16.mxu0 0
    %412 = vmatpush1.bf16.msra.mxu0 %v309
    %413 = vmatprep.subr.bf16.mxu0 0
    %414 = vmatpush1.bf16.msra.mxu0 0
    %415 = vmatprep.subr.bf16.mxu0 0
    %416 = vmatpush1.bf16.msra.mxu0 0
    %417 = vmatprep.subr.bf16.mxu0 0
    %418 = vmatpush1.bf16.msra.mxu0 0
    %419 = vmatprep.subr.bf16.mxu0 0
    %420 = vmatpush1.bf16.msra.mxu0 0
    %421 = vmatprep.subr.bf16.mxu0 0
    %422 = vmatpush1.bf16.msra.mxu0 0
    %423 = vmatprep.subr.bf16.mxu0 0
    %424 = vmatpush1.bf16.msra.mxu0 0
    %425 = vmatprep.subr.bf16.mxu0 0
    %426 = vmatpush1.bf16.msra.mxu0 0
    %427 = vmatprep.subr.bf16.mxu0 0
    %428 = vmatpush1.bf16.msra.mxu0 0
    %429 = vmatprep.subr.bf16.mxu0 0
    %430 = vmatpush1.bf16.msra.mxu0 0
    %431 = vmatprep.subr.bf16.mxu0 0
    %432 = vmatpush1.bf16.msra.mxu0 0
    %433 = vmatprep.subr.bf16.mxu0 0
    %434 = vmatpush1.bf16.msra.mxu0 0
    %435 = vmatprep.subr.bf16.mxu0 0
    %436 = vmatpush1.bf16.msra.mxu0 0
    %437 = vmatprep.subr.bf16.mxu0 0
    %438 = vmatpush1.bf16.msra.mxu0 0
    %439 = vmatprep.subr.bf16.mxu0 0
    %440 = vmatpush1.bf16.msra.mxu0 0
    %441 = vmatprep.mubr.bf16.mxu0 0
    %442 = vmatmul.mubr.bf16.gmra.mrb[0].mxu0 %v314
    %v443 = vpop.f32.mrb[0].mxu0
    %v444 = vadd.f32 0.0, %v443
    %v445 = vpop.f32.mrb[0].mxu0
    %v446 = vpop.f32.mrb[0].mxu0
    %v447 = vadd.f32 0.0, %v446
    %v448 = vpop.f32.mrb[0].mxu0
    %449 = vmatprep.mubr.bf16.mxu0 0
    %450 = vmatmul.mubr.bf16.gmra.mrb[0].mxu0 %v317
    %v451 = vpop.f32.mrb[0].mxu0
    %v452 = vadd.f32 0.0, %v451
    %v453 = vpop.f32.mrb[0].mxu0
    %v454 = vpop.f32.mrb[0].mxu0
    %v455 = vadd.f32 0.0, %v454
    %v456 = vpop.f32.mrb[0].mxu0
    %457 = vmatprep.mubr.bf16.mxu0 0
    %458 = vmatmul.mubr.bf16.gmra.mrb[0].mxu0 %v320
    %v459 = vpop.f32.mrb[0].mxu0
    %v460 = vadd.f32 0.0, %v459
    %v461 = vpop.f32.mrb[0].mxu0
    %v462 = vpop.f32.mrb[0].mxu0
    %v463 = vadd.f32 0.0, %v462
    %v464 = vpop.f32.mrb[0].mxu0
    %465 = vmatprep.mubr.bf16.mxu0 0
    %466 = vmatmul.mubr.bf16.gmra.mrb[0].mxu0 %v323
    %v467 = vpop.f32.mrb[0].mxu0
    %v468 = vadd.f32 0.0, %v467
    %v469 = vpop.f32.mrb[0].mxu0
    %v470 = vpop.f32.mrb[0].mxu0
    %v471 = vadd.f32 0.0, %v470
    %v472 = vpop.f32.mrb[0].mxu0
    %473 = vmatprep.mubr.bf16.mxu0 0
    %474 = vmatmul.mubr.bf16.gmra.mrb[0].mxu0 %v326
    %v475 = vpop.f32.mrb[0].mxu0
    %v476 = vadd.f32 0.0, %v475
    %v477 = vpop.f32.mrb[0].mxu0
    %v478 = vpop.f32.mrb[0].mxu0
    %v479 = vadd.f32 0.0, %v478
    %v480 = vpop.f32.mrb[0].mxu0
    %481 = vmatprep.mubr.bf16.mxu0 0
    %482 = vmatmul.mubr.bf16.gmra.mrb[0].mxu0 %v329
    %v483 = vpop.f32.mrb[0].mxu0
    %v484 = vadd.f32 0.0, %v483
    %v485 = vpop.f32.mrb[0].mxu0
    %v486 = vpop.f32.mrb[0].mxu0
    %v487 = vadd.f32 0.0, %v486
    %v488 = vpop.f32.mrb[0].mxu0
    %489 = vmatprep.mubr.bf16.mxu0 0
    %490 = vmatmul.mubr.bf16.gmra.mrb[0].mxu0 %v332
    %v491 = vpop.f32.mrb[0].mxu0
    %v492 = vadd.f32 0.0, %v491
    %v493 = vpop.f32.mrb[0].mxu0
    %v494 = vpop.f32.mrb[0].mxu0
    %v495 = vadd.f32 0.0, %v494
    %v496 = vpop.f32.mrb[0].mxu0
    %497 = vmatprep.mubr.bf16.mxu0 0
    %498 = vmatmul.mubr.bf16.gmra.mrb[0].mxu0 %v335
    %v499 = vpop.f32.mrb[0].mxu0
    %v500 = vadd.f32 0.0, %v499
    %v501 = vpop.f32.mrb[0].mxu0
    %v502 = vpop.f32.mrb[0].mxu0
    %v503 = vadd.f32 0.0, %v502
    %v504 = vpop.f32.mrb[0].mxu0
    %505 = vmatprep.mubr.bf16.mxu0 0
    %506 = vmatmul.mubr.bf16.gmra.mrb[0].mxu0 %v338
    %v507 = vpop.f32.mrb[0].mxu0
    %v508 = vadd.f32 0.0, %v507
    %v509 = vpop.f32.mrb[0].mxu0
    %v510 = vpop.f32.mrb[0].mxu0
    %v511 = vadd.f32 0.0, %v510
    %v512 = vpop.f32.mrb[0].mxu0
    %513 = vmatprep.mubr.bf16.mxu0 0
    %514 = vmatmul.mubr.bf16.gmra.mrb[0].mxu0 %v341
    %v515 = vpop.f32.mrb[0].mxu0
    %v516 = vadd.f32 0.0, %v515
    %v517 = vpop.f32.mrb[0].mxu0
    %v518 = vpop.f32.mrb[0].mxu0
    %v519 = vadd.f32 0.0, %v518
    %v520 = vpop.f32.mrb[0].mxu0
    %521 = vmatprep.mubr.bf16.mxu0 0
    %522 = vmatmul.mubr.bf16.gmra.mrb[0].mxu0 %v344
    %v523 = vpop.f32.mrb[0].mxu0
    %v524 = vadd.f32 0.0, %v523
    %v525 = vpop.f32.mrb[0].mxu0
    %v526 = vpop.f32.mrb[0].mxu0
    %v527 = vadd.f32 0.0, %v526
    %v528 = vpop.f32.mrb[0].mxu0
    %529 = vmatprep.mubr.bf16.mxu0 0
    %530 = vmatmul.mubr.bf16.gmra.mrb[0].mxu0 %v347
    %v531 = vpop.f32.mrb[0].mxu0
    %v532 = vadd.f32 0.0, %v531
    %v533 = vpop.f32.mrb[0].mxu0
    %v534 = vpop.f32.mrb[0].mxu0
    %v535 = vadd.f32 0.0, %v534
    %v536 = vpop.f32.mrb[0].mxu0
    %537 = vmatprep.mubr.bf16.mxu0 0
    %538 = vmatmul.mubr.bf16.gmra.mrb[0].mxu0 %v350
    %v539 = vpop.f32.mrb[0].mxu0
    %v540 = vadd.f32 0.0, %v539
    %v541 = vpop.f32.mrb[0].mxu0
    %v542 = vpop.f32.mrb[0].mxu0
    %v543 = vadd.f32 0.0, %v542
    %v544 = vpop.f32.mrb[0].mxu0
    %545 = vmatprep.mubr.bf16.mxu0 0
    %546 = vmatmul.mubr.bf16.gmra.mrb[0].mxu0 %v353
    %v547 = vpop.f32.mrb[0].mxu0
    %v548 = vadd.f32 0.0, %v547
    %v549 = vpop.f32.mrb[0].mxu0
    %v550 = vpop.f32.mrb[0].mxu0
    %v551 = vadd.f32 0.0, %v550
    %v552 = vpop.f32.mrb[0].mxu0
    %553 = vmatprep.mubr.bf16.mxu0 0
    %554 = vmatmul.mubr.bf16.gmra.mrb[0].mxu0 %v356
    %v555 = vpop.f32.mrb[0].mxu0
    %v556 = vadd.f32 0.0, %v555
    %v557 = vpop.f32.mrb[0].mxu0
    %v558 = vpop.f32.mrb[0].mxu0
    %v559 = vadd.f32 0.0, %v558
    %v560 = vpop.f32.mrb[0].mxu0
    %561 = vmatprep.mubr.bf16.mxu0 0
    %562 = vmatmul.mubr.bf16.gmra.mrb[0].mxu0 %v359
    %v563 = vpop.f32.mrb[0].mxu0
    %v564 = vadd.f32 0.0, %v563
    %v565 = vpop.f32.mrb[0].mxu0
    %v566 = vpop.f32.mrb[0].mxu0
    %v567 = vadd.f32 0.0, %v566
    %v568 = vpop.f32.mrb[0].mxu0
    %569 = vmatprep.mubr.bf16.mxu0 0
    %570 = vmatmul.mubr.bf16.gmra.mrb[0].mxu0 %v362
    %v571 = vpop.f32.mrb[0].mxu0
    %v572 = vadd.f32 0.0, %v571
    %v573 = vpop.f32.mrb[0].mxu0
    %v574 = vpop.f32.mrb[0].mxu0
    %v575 = vadd.f32 0.0, %v574
    %v576 = vpop.f32.mrb[0].mxu0
    %577 = vmatprep.mubr.bf16.mxu0 0
    %578 = vmatmul.mubr.bf16.gmra.mrb[0].mxu0 %v365
    %v579 = vpop.f32.mrb[0].mxu0
    %v580 = vadd.f32 0.0, %v579
    %v581 = vpop.f32.mrb[0].mxu0
    %v582 = vpop.f32.mrb[0].mxu0
    %v583 = vadd.f32 0.0, %v582
    %v584 = vpop.f32.mrb[0].mxu0
    %585 = vmatprep.mubr.bf16.mxu0 0
    %586 = vmatmul.mubr.bf16.gmra.mrb[0].mxu0 %v368
    %v587 = vpop.f32.mrb[0].mxu0
    %v588 = vadd.f32 0.0, %v587
    %v589 = vpop.f32.mrb[0].mxu0
    %v590 = vpop.f32.mrb[0].mxu0
    %v591 = vadd.f32 0.0, %v590
    %v592 = vpop.f32.mrb[0].mxu0
    %593 = vmatprep.mubr.bf16.mxu0 0
    %594 = vmatmul.mubr.bf16.gmra.mrb[0].mxu0 %v371
    %v595 = vpop.f32.mrb[0].mxu0
    %v596 = vadd.f32 0.0, %v595
    %v597 = vpop.f32.mrb[0].mxu0
    %v598 = vpop.f32.mrb[0].mxu0
    %v599 = vadd.f32 0.0, %v598
    %v600 = vpop.f32.mrb[0].mxu0
    %601 = vmatprep.mubr.bf16.mxu0 0
    %602 = vmatmul.mubr.bf16.gmra.mrb[0].mxu0 %v374
    %v603 = vpop.f32.mrb[0].mxu0
    %v604 = vadd.f32 0.0, %v603
    %v605 = vpop.f32.mrb[0].mxu0
    %v606 = vpop.f32.mrb[0].mxu0
    %v607 = vadd.f32 0.0, %v606
    %v608 = vpop.f32.mrb[0].mxu0
    %609 = vmatprep.mubr.bf16.mxu0 0
    %610 = vmatmul.mubr.bf16.gmra.mrb[0].mxu0 %v377
    %v611 = vpop.f32.mrb[0].mxu0
    %v612 = vadd.f32 0.0, %v611
    %v613 = vpop.f32.mrb[0].mxu0
    %v614 = vpop.f32.mrb[0].mxu0
    %v615 = vadd.f32 0.0, %v614
    %v616 = vpop.f32.mrb[0].mxu0
    %617 = vmatprep.mubr.bf16.mxu0 0
    %618 = vmatmul.mubr.bf16.gmra.mrb[0].mxu0 %v380
    %v619 = vpop.f32.mrb[0].mxu0
    %v620 = vadd.f32 0.0, %v619
    %v621 = vpop.f32.mrb[0].mxu0
    %v622 = vpop.f32.mrb[0].mxu0
    %v623 = vadd.f32 0.0, %v622
    %v624 = vpop.f32.mrb[0].mxu0
    %625 = vmatprep.mubr.bf16.mxu0 0
    %626 = vmatmul.mubr.bf16.gmra.mrb[0].mxu0 %v383
    %v627 = vpop.f32.mrb[0].mxu0
    %v628 = vadd.f32 0.0, %v627
    %v629 = vpop.f32.mrb[0].mxu0
    %v630 = vpop.f32.mrb[0].mxu0
    %v631 = vadd.f32 0.0, %v630
    %v632 = vpop.f32.mrb[0].mxu0
    %633 = vmatprep.mubr.bf16.mxu0 0
    %634 = vmatmul.mubr.bf16.gmra.mrb[0].mxu0 %v386
    %v635 = vpop.f32.mrb[0].mxu0
    %v636 = vadd.f32 0.0, %v635
    %v637 = vpop.f32.mrb[0].mxu0
    %v638 = vpop.f32.mrb[0].mxu0
    %v639 = vadd.f32 0.0, %v638
    %v640 = vpop.f32.mrb[0].mxu0
    %641 = vmatprep.mubr.bf16.mxu0 0
    %642 = vmatmul.mubr.bf16.gmra.mrb[0].mxu0 %v389
    %v643 = vpop.f32.mrb[0].mxu0
    %v644 = vadd.f32 0.0, %v643
    %v645 = vpop.f32.mrb[0].mxu0
    %v646 = vpop.f32.mrb[0].mxu0
    %v647 = vadd.f32 0.0, %v646
    %v648 = vpop.f32.mrb[0].mxu0
    %649 = vmatprep.mubr.bf16.mxu0 0
    %650 = vmatmul.mubr.bf16.gmra.mrb[0].mxu0 %v392
    %v651 = vpop.f32.mrb[0].mxu0
    %v652 = vadd.f32 0.0, %v651
    %v653 = vpop.f32.mrb[0].mxu0
    %v654 = vpop.f32.mrb[0].mxu0
    %v655 = vadd.f32 0.0, %v654
    %v656 = vpop.f32.mrb[0].mxu0
    %657 = vmatprep.mubr.bf16.mxu0 0
    %658 = vmatmul.mubr.bf16.gmra.mrb[0].mxu0 %v395
    %v659 = vpop.f32.mrb[0].mxu0
    %v660 = vadd.f32 0.0, %v659
    %v661 = vpop.f32.mrb[0].mxu0
    %v662 = vpop.f32.mrb[0].mxu0
    %v663 = vadd.f32 0.0, %v662
    %v664 = vpop.f32.mrb[0].mxu0
    %665 = vmatprep.mubr.bf16.mxu0 0
    %666 = vmatmul.mubr.bf16.gmra.mrb[0].mxu0 %v398
    %v667 = vpop.f32.mrb[0].mxu0
    %v668 = vadd.f32 0.0, %v667
    %v669 = vpop.f32.mrb[0].mxu0
    %v670 = vpop.f32.mrb[0].mxu0
    %v671 = vadd.f32 0.0, %v670
    %v672 = vpop.f32.mrb[0].mxu0
    %673 = vmatprep.mubr.bf16.mxu0 0
    %674 = vmatmul.mubr.bf16.gmra.mrb[0].mxu0 %v401
    %v675 = vpop.f32.mrb[0].mxu0
    %v676 = vadd.f32 0.0, %v675
    %v677 = vpop.f32.mrb[0].mxu0
    %v678 = vpop.f32.mrb[0].mxu0
    %v679 = vadd.f32 0.0, %v678
    %v680 = vpop.f32.mrb[0].mxu0
    %681 = vmatprep.mubr.bf16.mxu0 0
    %682 = vmatmul.mubr.bf16.gmra.mrb[0].mxu0 %v404
    %v683 = vpop.f32.mrb[0].mxu0
    %v684 = vadd.f32 0.0, %v683
    %v685 = vpop.f32.mrb[0].mxu0
    %v686 = vpop.f32.mrb[0].mxu0
    %v687 = vadd.f32 0.0, %v686
    %v688 = vpop.f32.mrb[0].mxu0
    %689 = vmatprep.mubr.bf16.mxu0 0
    %690 = vmatmul.mubr.bf16.gmra.mrb[0].mxu0 %v407
    %v691 = vpop.f32.mrb[0].mxu0
    %v692 = vadd.f32 0.0, %v691
    %v693 = vpop.f32.mrb[0].mxu0
    %v694 = vpop.f32.mrb[0].mxu0
    %v695 = vadd.f32 0.0, %v694
    %v696 = vpop.f32.mrb[0].mxu0
    %697 = vdwg.mxu0
    %v698 = vpack.c.bf16 %v447, %v444
    %v699 = vpack.c.bf16 %v455, %v452
    %v700 = vpack.c.bf16 %v463, %v460
    %v701 = vpack.c.bf16 %v471, %v468
    %v702 = vpack.c.bf16 %v479, %v476
    %v703 = vpack.c.bf16 %v487, %v484
    %v704 = vpack.c.bf16 %v495, %v492
    %v705 = vpack.c.bf16 %v503, %v500
    %v706 = vpack.c.bf16 %v511, %v508
    %v707 = vpack.c.bf16 %v519, %v516
    %v708 = vpack.c.bf16 %v527, %v524
    %v709 = vpack.c.bf16 %v535, %v532
    %v710 = vpack.c.bf16 %v543, %v540
    %v711 = vpack.c.bf16 %v551, %v548
    %v712 = vpack.c.bf16 %v559, %v556
    %v713 = vpack.c.bf16 %v567, %v564
    %v714 = vpack.c.bf16 %v575, %v572
    %v715 = vpack.c.bf16 %v583, %v580
    %v716 = vpack.c.bf16 %v591, %v588
    %v717 = vpack.c.bf16 %v599, %v596
    %v718 = vpack.c.bf16 %v607, %v604
    %v719 = vpack.c.bf16 %v615, %v612
    %v720 = vpack.c.bf16 %v623, %v620
    %v721 = vpack.c.bf16 %v631, %v628
    %v722 = vpack.c.bf16 %v639, %v636
    %v723 = vpack.c.bf16 %v647, %v644
    %v724 = vpack.c.bf16 %v655, %v652
    %v725 = vpack.c.bf16 %v663, %v660
    %v726 = vpack.c.bf16 %v671, %v668
    %v727 = vpack.c.bf16 %v679, %v676
    %v728 = vpack.c.bf16 %v687, %v684
    %v729 = vpack.c.bf16 %v695, %v692
    %vm730 = vcmask 130048
    %731 = vst.msk [vmem:[#allocation2] sm:$0xff] %vm730, %v698
    %732 = vst.msk [vmem:[#allocation2 + $0x8] sm:$0xff] %vm730, %v699
    %733 = vst.msk [vmem:[#allocation2 + $0x10] sm:$0xff] %vm730, %v700
    %734 = vst.msk [vmem:[#allocation2 + $0x18] sm:$0xff] %vm730, %v701
    %735 = vst.msk [vmem:[#allocation2 + $0x20] sm:$0xff] %vm730, %v702
    %736 = vst.msk [vmem:[#allocation2 + $0x28] sm:$0xff] %vm730, %v703
    %737 = vst.msk [vmem:[#allocation2 + $0x30] sm:$0xff] %vm730, %v704
    %738 = vst.msk [vmem:[#allocation2 + $0x38] sm:$0xff] %vm730, %v705
    %739 = vst.msk [vmem:[#allocation2 + $0x40] sm:$0xff] %vm730, %v706
    %740 = vst.msk [vmem:[#allocation2 + $0x48] sm:$0xff] %vm730, %v707
    %741 = vst.msk [vmem:[#allocation2 + $0x50] sm:$0xff] %vm730, %v708
    %742 = vst.msk [vmem:[#allocation2 + $0x58] sm:$0xff] %vm730, %v709
    %743 = vst.msk [vmem:[#allocation2 + $0x60] sm:$0xff] %vm730, %v710
    %744 = vst.msk [vmem:[#allocation2 + $0x68] sm:$0xff] %vm730, %v711
    %745 = vst.msk [vmem:[#allocation2 + $0x70] sm:$0xff] %vm730, %v712
    %746 = vst.msk [vmem:[#allocation2 + $0x78] sm:$0xff] %vm730, %v713
    %747 = vst.msk [vmem:[#allocation2 + $0x80] sm:$0xff] %vm730, %v714
    %748 = vst.msk [vmem:[#allocation2 + $0x88] sm:$0xff] %vm730, %v715
    %749 = vst.msk [vmem:[#allocation2 + $0x90] sm:$0xff] %vm730, %v716
    %750 = vst.msk [vmem:[#allocation2 + $0x98] sm:$0xff] %vm730, %v717
    %751 = vst.msk [vmem:[#allocation2 + $0xa0] sm:$0xff] %vm730, %v718
    %752 = vst.msk [vmem:[#allocation2 + $0xa8] sm:$0xff] %vm730, %v719
    %753 = vst.msk [vmem:[#allocation2 + $0xb0] sm:$0xff] %vm730, %v720
    %754 = vst.msk [vmem:[#allocation2 + $0xb8] sm:$0xff] %vm730, %v721
    %755 = vst.msk [vmem:[#allocation2 + $0xc0] sm:$0xff] %vm730, %v722
    %756 = vst.msk [vmem:[#allocation2 + $0xc8] sm:$0xff] %vm730, %v723
    %757 = vst.msk [vmem:[#allocation2 + $0xd0] sm:$0xff] %vm730, %v724
    %758 = vst.msk [vmem:[#allocation2 + $0xd8] sm:$0xff] %vm730, %v725
    %759 = vst.msk [vmem:[#allocation2 + $0xe0] sm:$0xff] %vm730, %v726
    %760 = vst.msk [vmem:[#allocation2 + $0xe8] sm:$0xff] %vm730, %v727
    %761 = vst.msk [vmem:[#allocation2 + $0xf0] sm:$0xff] %vm730, %v728
    %762 = vst.msk [vmem:[#allocation2 + $0xf8] sm:$0xff] %vm730, %v729
    %v763 = vld [vmem:[#allocation6] sm:$0xf]
    %v764 = vld [vmem:[#allocation6 + $0x4] sm:$0xf]
    %v765 = vld [vmem:[#allocation6 + $0x8] sm:$0xf]
    %v766 = vld [vmem:[#allocation6 + $0xc] sm:$0xf]
    %v767 = vld [vmem:[#allocation6 + $0x10] sm:$0xf]
    %v768 = vld [vmem:[#allocation6 + $0x14] sm:$0xf]
    %v769 = vld [vmem:[#allocation6 + $0x18] sm:$0xf]
    %v770 = vld [vmem:[#allocation6 + $0x1c] sm:$0xf]
    %v771 = vld [vmem:[#allocation6 + $0x20] sm:$0xf]
    %v772 = vld [vmem:[#allocation6 + $0x24] sm:$0xf]
    %v773 = vld [vmem:[#allocation6 + $0x28] sm:$0xf]
    %v774 = vld [vmem:[#allocation6 + $0x2c] sm:$0xf]
    %v775 = vld [vmem:[#allocation6 + $0x30] sm:$0xf]
    %v776 = vld [vmem:[#allocation6 + $0x34] sm:$0xf]
    %v777 = vld [vmem:[#allocation6 + $0x38] sm:$0xf]
    %v778 = vld [vmem:[#allocation6 + $0x3c] sm:$0xf]
    %v779 = vld [vmem:[#allocation6 + $0x40] sm:$0xf]
    %v780 = vld [vmem:[#allocation6 + $0x44] sm:$0xf]
    %v781 = vld [vmem:[#allocation6 + $0x48] sm:$0xf]
    %v782 = vld [vmem:[#allocation6 + $0x4c] sm:$0xf]
    %v783 = vld [vmem:[#allocation6 + $0x50] sm:$0xf]
    %v784 = vld [vmem:[#allocation6 + $0x54] sm:$0xf]
    %v785 = vld [vmem:[#allocation6 + $0x58] sm:$0xf]
    %v786 = vld [vmem:[#allocation6 + $0x5c] sm:$0xf]
    %v787 = vld [vmem:[#allocation6 + $0x60] sm:$0xf]
    %v788 = vld [vmem:[#allocation6 + $0x64] sm:$0xf]
    %v789 = vld [vmem:[#allocation6 + $0x68] sm:$0xf]
    %v790 = vld [vmem:[#allocation6 + $0x6c] sm:$0xf]
    %v791 = vld [vmem:[#allocation6 + $0x70] sm:$0xf]
    %v792 = vld [vmem:[#allocation6 + $0x74] sm:$0xf]
    %v793 = vld [vmem:[#allocation6 + $0x78] sm:$0xf]
    %v794 = vld [vmem:[#allocation6 + $0x7c] sm:$0xf]
    %v795 = vld [vmem:[#allocation6 + $0x80] sm:$0xf]
    %v796 = vld [vmem:[#allocation6 + $0x84] sm:$0xf]
    %v797 = vld [vmem:[#allocation6 + $0x88] sm:$0xf]
    %v798 = vld [vmem:[#allocation6 + $0x8c] sm:$0xf]
    %v799 = vld [vmem:[#allocation6 + $0x90] sm:$0xf]
    %v800 = vld [vmem:[#allocation6 + $0x94] sm:$0xf]
    %v801 = vld [vmem:[#allocation6 + $0x98] sm:$0xf]
    %v802 = vld [vmem:[#allocation6 + $0x9c] sm:$0xf]
    %v803 = vld [vmem:[#allocation6 + $0xa0] sm:$0xf]
    %v804 = vld [vmem:[#allocation6 + $0xa4] sm:$0xf]
    %v805 = vld [vmem:[#allocation6 + $0xa8] sm:$0xf]
    %v806 = vld [vmem:[#allocation6 + $0xac] sm:$0xf]
    %v807 = vld [vmem:[#allocation6 + $0xb0] sm:$0xf]
    %v808 = vld [vmem:[#allocation6 + $0xb4] sm:$0xf]
    %v809 = vld [vmem:[#allocation6 + $0xb8] sm:$0xf]
    %v810 = vld [vmem:[#allocation6 + $0xbc] sm:$0xf]
    %v811 = vld [vmem:[#allocation6 + $0xc0] sm:$0xf]
    %v812 = vld [vmem:[#allocation6 + $0xc4] sm:$0xf]
    %v813 = vld [vmem:[#allocation6 + $0xc8] sm:$0xf]
    %v814 = vld [vmem:[#allocation6 + $0xcc] sm:$0xf]
    %v815 = vld [vmem:[#allocation6 + $0xd0] sm:$0xf]
    %v816 = vld [vmem:[#allocation6 + $0xd4] sm:$0xf]
    %v817 = vld [vmem:[#allocation6 + $0xd8] sm:$0xf]
    %v818 = vld [vmem:[#allocation6 + $0xdc] sm:$0xf]
    %v819 = vld [vmem:[#allocation6 + $0xe0] sm:$0xf]
    %v820 = vld [vmem:[#allocation6 + $0xe4] sm:$0xf]
    %v821 = vld [vmem:[#allocation6 + $0xe8] sm:$0xf]
    %v822 = vld [vmem:[#allocation6 + $0xec] sm:$0xf]
    %v823 = vld [vmem:[#allocation6 + $0xf0] sm:$0xf]
    %v824 = vld [vmem:[#allocation6 + $0xf4] sm:$0xf]
    %v825 = vld [vmem:[#allocation6 + $0xf8] sm:$0xf]
    %v826 = vld [vmem:[#allocation6 + $0xfc] sm:$0xf]
    %v891 = vunpack.c.l.b16 %v763
    %v892 = vunpack.c.l.b16 %v764
    %v893 = vunpack.c.l.b16 %v765
    %v894 = vunpack.c.l.b16 %v766
    %v895 = vunpack.c.l.b16 %v767
    %v896 = vunpack.c.l.b16 %v768
    %v897 = vunpack.c.l.b16 %v769
    %v898 = vunpack.c.l.b16 %v770
    %v899 = vunpack.c.l.b16 %v771
    %v900 = vunpack.c.l.b16 %v772
    %v901 = vunpack.c.l.b16 %v773
    %v902 = vunpack.c.l.b16 %v774
    %v903 = vunpack.c.l.b16 %v775
    %v904 = vunpack.c.l.b16 %v776
    %v905 = vunpack.c.l.b16 %v777
    %v906 = vunpack.c.l.b16 %v778
    %v907 = vunpack.c.l.b16 %v779
    %v908 = vunpack.c.l.b16 %v780
    %v909 = vunpack.c.l.b16 %v781
    %v910 = vunpack.c.l.b16 %v782
    %v911 = vunpack.c.l.b16 %v783
    %v912 = vunpack.c.l.b16 %v784
    %v913 = vunpack.c.l.b16 %v785
    %v914 = vunpack.c.l.b16 %v786
    %v915 = vunpack.c.l.b16 %v787
    %v916 = vunpack.c.l.b16 %v788
    %v917 = vunpack.c.l.b16 %v789
    %v918 = vunpack.c.l.b16 %v790
    %v919 = vunpack.c.l.b16 %v791
    %v920 = vunpack.c.l.b16 %v792
    %v921 = vunpack.c.l.b16 %v793
    %v922 = vunpack.c.l.b16 %v794
    %v923 = vunpack.c.l.b16 %v795
    %v924 = vunpack.c.l.b16 %v796
    %v925 = vunpack.c.l.b16 %v797
    %v926 = vunpack.c.l.b16 %v798
    %v927 = vunpack.c.l.b16 %v799
    %v928 = vunpack.c.l.b16 %v800
    %v929 = vunpack.c.l.b16 %v801
    %v930 = vunpack.c.l.b16 %v802
    %v931 = vunpack.c.l.b16 %v803
    %v932 = vunpack.c.l.b16 %v804
    %v933 = vunpack.c.l.b16 %v805
    %v934 = vunpack.c.l.b16 %v806
    %v935 = vunpack.c.l.b16 %v807
    %v936 = vunpack.c.l.b16 %v808
    %v937 = vunpack.c.l.b16 %v809
    %v938 = vunpack.c.l.b16 %v810
    %v939 = vunpack.c.l.b16 %v811
    %v940 = vunpack.c.l.b16 %v812
    %v941 = vunpack.c.l.b16 %v813
    %v942 = vunpack.c.l.b16 %v814
    %v943 = vunpack.c.l.b16 %v815
    %v944 = vunpack.c.l.b16 %v816
    %v945 = vunpack.c.l.b16 %v817
    %v946 = vunpack.c.l.b16 %v818
    %v947 = vunpack.c.l.b16 %v819
    %v948 = vunpack.c.l.b16 %v820
    %v949 = vunpack.c.l.b16 %v821
    %v950 = vunpack.c.l.b16 %v822
    %v951 = vunpack.c.l.b16 %v823
    %v952 = vunpack.c.l.b16 %v824
    %v953 = vunpack.c.l.b16 %v825
    %v954 = vunpack.c.l.b16 %v826
    %v955 = vpack.c.b16 %v892, %v891
    %v956 = vpack.c.b16 %v894, %v893
    %v957 = vpack.c.b16 %v896, %v895
    %v958 = vpack.c.b16 %v898, %v897
    %v959 = vpack.c.b16 %v900, %v899
    %v960 = vpack.c.b16 %v902, %v901
    %v961 = vpack.c.b16 %v904, %v903
    %v962 = vpack.c.b16 %v906, %v905
    %v963 = vpack.c.b16 %v908, %v907
    %v964 = vpack.c.b16 %v910, %v909
    %v965 = vpack.c.b16 %v912, %v911
    %v966 = vpack.c.b16 %v914, %v913
    %v967 = vpack.c.b16 %v916, %v915
    %v968 = vpack.c.b16 %v918, %v917
    %v969 = vpack.c.b16 %v920, %v919
    %v970 = vpack.c.b16 %v922, %v921
    %v971 = vpack.c.b16 %v924, %v923
    %v972 = vpack.c.b16 %v926, %v925
    %v973 = vpack.c.b16 %v928, %v927
    %v974 = vpack.c.b16 %v930, %v929
    %v975 = vpack.c.b16 %v932, %v931
    %v976 = vpack.c.b16 %v934, %v933
    %v977 = vpack.c.b16 %v936, %v935
    %v978 = vpack.c.b16 %v938, %v937
    %v979 = vpack.c.b16 %v940, %v939
    %v980 = vpack.c.b16 %v942, %v941
    %v981 = vpack.c.b16 %v944, %v943
    %v982 = vpack.c.b16 %v946, %v945
    %v983 = vpack.c.b16 %v948, %v947
    %v984 = vpack.c.b16 %v950, %v949
    %v985 = vpack.c.b16 %v952, %v951
    %v986 = vpack.c.b16 %v954, %v953
    %987 = vrot.lane.b32.xlu0 %v955, 16
    %v988 = vpop.permute.xlu0 %987
    %989 = vrot.lane.b32.xlu0 %v956, 16
    %v990 = vpop.permute.xlu0 %989
    %991 = vrot.lane.b32.xlu0 %v957, 16
    %v992 = vpop.permute.xlu0 %991
    %993 = vrot.lane.b32.xlu0 %v958, 16
    %v994 = vpop.permute.xlu0 %993
    %995 = vrot.lane.b32.xlu0 %v959, 16
    %v996 = vpop.permute.xlu0 %995
    %997 = vrot.lane.b32.xlu0 %v960, 16
    %v998 = vpop.permute.xlu0 %997
    %999 = vrot.lane.b32.xlu0 %v961, 16
    %v1000 = vpop.permute.xlu0 %999
    %1001 = vrot.lane.b32.xlu0 %v962, 16
    %v1002 = vpop.permute.xlu0 %1001
    %1003 = vrot.lane.b32.xlu0 %v963, 16
    %v1004 = vpop.permute.xlu0 %1003
    %1005 = vrot.lane.b32.xlu0 %v964, 16
    %v1006 = vpop.permute.xlu0 %1005
    %1007 = vrot.lane.b32.xlu0 %v965, 16
    %v1008 = vpop.permute.xlu0 %1007
    %1009 = vrot.lane.b32.xlu0 %v966, 16
    %v1010 = vpop.permute.xlu0 %1009
    %1011 = vrot.lane.b32.xlu0 %v967, 16
    %v1012 = vpop.permute.xlu0 %1011
    %1013 = vrot.lane.b32.xlu0 %v968, 16
    %v1014 = vpop.permute.xlu0 %1013
    %1015 = vrot.lane.b32.xlu0 %v969, 16
    %v1016 = vpop.permute.xlu0 %1015
    %1017 = vrot.lane.b32.xlu0 %v970, 16
    %v1018 = vpop.permute.xlu0 %1017
    %1019 = vrot.lane.b32.xlu0 %v971, 16
    %v1020 = vpop.permute.xlu0 %1019
    %1021 = vrot.lane.b32.xlu0 %v972, 16
    %v1022 = vpop.permute.xlu0 %1021
    %1023 = vrot.lane.b32.xlu0 %v973, 16
    %v1024 = vpop.permute.xlu0 %1023
    %1025 = vrot.lane.b32.xlu0 %v974, 16
    %v1026 = vpop.permute.xlu0 %1025
    %1027 = vrot.lane.b32.xlu0 %v975, 16
    %v1028 = vpop.permute.xlu0 %1027
    %1029 = vrot.lane.b32.xlu0 %v976, 16
    %v1030 = vpop.permute.xlu0 %1029
    %1031 = vrot.lane.b32.xlu0 %v977, 16
    %v1032 = vpop.permute.xlu0 %1031
    %1033 = vrot.lane.b32.xlu0 %v978, 16
    %v1034 = vpop.permute.xlu0 %1033
    %1035 = vrot.lane.b32.xlu0 %v979, 16
    %v1036 = vpop.permute.xlu0 %1035
    %1037 = vrot.lane.b32.xlu0 %v980, 16
    %v1038 = vpop.permute.xlu0 %1037
    %1039 = vrot.lane.b32.xlu0 %v981, 16
    %v1040 = vpop.permute.xlu0 %1039
    %1041 = vrot.lane.b32.xlu0 %v982, 16
    %v1042 = vpop.permute.xlu0 %1041
    %1043 = vrot.lane.b32.xlu0 %v983, 16
    %v1044 = vpop.permute.xlu0 %1043
    %1045 = vrot.lane.b32.xlu0 %v984, 16
    %v1046 = vpop.permute.xlu0 %1045
    %1047 = vrot.lane.b32.xlu0 %v985, 16
    %v1048 = vpop.permute.xlu0 %1047
    %1049 = vrot.lane.b32.xlu0 %v986, 16
    %v1050 = vpop.permute.xlu0 %1049
    %vm1083 = vcmask 261248
    %1084 = vst.msk [vmem:[#allocation2] sm:$0xff] %vm1083, %v988
    %1085 = vst.msk [vmem:[#allocation2 + $0x8] sm:$0xff] %vm1083, %v990
    %1086 = vst.msk [vmem:[#allocation2 + $0x10] sm:$0xff] %vm1083, %v992
    %1087 = vst.msk [vmem:[#allocation2 + $0x18] sm:$0xff] %vm1083, %v994
    %1088 = vst.msk [vmem:[#allocation2 + $0x20] sm:$0xff] %vm1083, %v996
    %1089 = vst.msk [vmem:[#allocation2 + $0x28] sm:$0xff] %vm1083, %v998
    %1090 = vst.msk [vmem:[#allocation2 + $0x30] sm:$0xff] %vm1083, %v1000
    %1091 = vst.msk [vmem:[#allocation2 + $0x38] sm:$0xff] %vm1083, %v1002
    %1092 = vst.msk [vmem:[#allocation2 + $0x40] sm:$0xff] %vm1083, %v1004
    %1093 = vst.msk [vmem:[#allocation2 + $0x48] sm:$0xff] %vm1083, %v1006
    %1094 = vst.msk [vmem:[#allocation2 + $0x50] sm:$0xff] %vm1083, %v1008
    %1095 = vst.msk [vmem:[#allocation2 + $0x58] sm:$0xff] %vm1083, %v1010
    %1096 = vst.msk [vmem:[#allocation2 + $0x60] sm:$0xff] %vm1083, %v1012
    %1097 = vst.msk [vmem:[#allocation2 + $0x68] sm:$0xff] %vm1083, %v1014
    %1098 = vst.msk [vmem:[#allocation2 + $0x70] sm:$0xff] %vm1083, %v1016
    %1099 = vst.msk [vmem:[#allocation2 + $0x78] sm:$0xff] %vm1083, %v1018
    %1100 = vst.msk [vmem:[#allocation2 + $0x80] sm:$0xff] %vm1083, %v1020
    %1101 = vst.msk [vmem:[#allocation2 + $0x88] sm:$0xff] %vm1083, %v1022
    %1102 = vst.msk [vmem:[#allocation2 + $0x90] sm:$0xff] %vm1083, %v1024
    %1103 = vst.msk [vmem:[#allocation2 + $0x98] sm:$0xff] %vm1083, %v1026
    %1104 = vst.msk [vmem:[#allocation2 + $0xa0] sm:$0xff] %vm1083, %v1028
    %1105 = vst.msk [vmem:[#allocation2 + $0xa8] sm:$0xff] %vm1083, %v1030
    %1106 = vst.msk [vmem:[#allocation2 + $0xb0] sm:$0xff] %vm1083, %v1032
    %1107 = vst.msk [vmem:[#allocation2 + $0xb8] sm:$0xff] %vm1083, %v1034
    %1108 = vst.msk [vmem:[#allocation2 + $0xc0] sm:$0xff] %vm1083, %v1036
    %1109 = vst.msk [vmem:[#allocation2 + $0xc8] sm:$0xff] %vm1083, %v1038
    %1110 = vst.msk [vmem:[#allocation2 + $0xd0] sm:$0xff] %vm1083, %v1040
    %1111 = vst.msk [vmem:[#allocation2 + $0xd8] sm:$0xff] %vm1083, %v1042
    %1112 = vst.msk [vmem:[#allocation2 + $0xe0] sm:$0xff] %vm1083, %v1044
    %1113 = vst.msk [vmem:[#allocation2 + $0xe8] sm:$0xff] %vm1083, %v1046
    %1114 = vst.msk [vmem:[#allocation2 + $0xf0] sm:$0xff] %vm1083, %v1048
    %1115 = vst.msk [vmem:[#allocation2 + $0xf8] sm:$0xff] %vm1083, %v1050
    %1148 = vrot.lane.b32.xlu0 %v698, 112
    %v1149 = vpop.permute.xlu0 %1148
    %1150 = vrot.lane.b32.xlu0 %v699, 112
    %v1151 = vpop.permute.xlu0 %1150
    %1152 = vrot.lane.b32.xlu0 %v700, 112
    %v1153 = vpop.permute.xlu0 %1152
    %1154 = vrot.lane.b32.xlu0 %v701, 112
    %v1155 = vpop.permute.xlu0 %1154
    %1156 = vrot.lane.b32.xlu0 %v702, 112
    %v1157 = vpop.permute.xlu0 %1156
    %1158 = vrot.lane.b32.xlu0 %v703, 112
    %v1159 = vpop.permute.xlu0 %1158
    %1160 = vrot.lane.b32.xlu0 %v704, 112
    %v1161 = vpop.permute.xlu0 %1160
    %1162 = vrot.lane.b32.xlu0 %v705, 112
    %v1163 = vpop.permute.xlu0 %1162
    %1164 = vrot.lane.b32.xlu0 %v706, 112
    %v1165 = vpop.permute.xlu0 %1164
    %1166 = vrot.lane.b32.xlu0 %v707, 112
    %v1167 = vpop.permute.xlu0 %1166
    %1168 = vrot.lane.b32.xlu0 %v708, 112
    %v1169 = vpop.permute.xlu0 %1168
    %1170 = vrot.lane.b32.xlu0 %v709, 112
    %v1171 = vpop.permute.xlu0 %1170
    %1172 = vrot.lane.b32.xlu0 %v710, 112
    %v1173 = vpop.permute.xlu0 %1172
    %1174 = vrot.lane.b32.xlu0 %v711, 112
    %v1175 = vpop.permute.xlu0 %1174
    %1176 = vrot.lane.b32.xlu0 %v712, 112
    %v1177 = vpop.permute.xlu0 %1176
    %1178 = vrot.lane.b32.xlu0 %v713, 112
    %v1179 = vpop.permute.xlu0 %1178
    %1180 = vrot.lane.b32.xlu0 %v714, 112
    %v1181 = vpop.permute.xlu0 %1180
    %1182 = vrot.lane.b32.xlu0 %v715, 112
    %v1183 = vpop.permute.xlu0 %1182
    %1184 = vrot.lane.b32.xlu0 %v716, 112
    %v1185 = vpop.permute.xlu0 %1184
    %1186 = vrot.lane.b32.xlu0 %v717, 112
    %v1187 = vpop.permute.xlu0 %1186
    %1188 = vrot.lane.b32.xlu0 %v718, 112
    %v1189 = vpop.permute.xlu0 %1188
    %1190 = vrot.lane.b32.xlu0 %v719, 112
    %v1191 = vpop.permute.xlu0 %1190
    %1192 = vrot.lane.b32.xlu0 %v720, 112
    %v1193 = vpop.permute.xlu0 %1192
    %1194 = vrot.lane.b32.xlu0 %v721, 112
    %v1195 = vpop.permute.xlu0 %1194
    %1196 = vrot.lane.b32.xlu0 %v722, 112
    %v1197 = vpop.permute.xlu0 %1196
    %1198 = vrot.lane.b32.xlu0 %v723, 112
    %v1199 = vpop.permute.xlu0 %1198
    %1200 = vrot.lane.b32.xlu0 %v724, 112
    %v1201 = vpop.permute.xlu0 %1200
    %1202 = vrot.lane.b32.xlu0 %v725, 112
    %v1203 = vpop.permute.xlu0 %1202
    %1204 = vrot.lane.b32.xlu0 %v726, 112
    %v1205 = vpop.permute.xlu0 %1204
    %1206 = vrot.lane.b32.xlu0 %v727, 112
    %v1207 = vpop.permute.xlu0 %1206
    %1208 = vrot.lane.b32.xlu0 %v728, 112
    %v1209 = vpop.permute.xlu0 %1208
    %1210 = vrot.lane.b32.xlu0 %v729, 112
    %v1211 = vpop.permute.xlu0 %1210
    %1244 = vst.msk [vmem:[#allocation2 + $0x100] sm:$0xff] %vm730, %v1149
    %1245 = vst.msk [vmem:[#allocation2 + $0x108] sm:$0xff] %vm730, %v1151
    %1246 = vst.msk [vmem:[#allocation2 + $0x110] sm:$0xff] %vm730, %v1153
    %1247 = vst.msk [vmem:[#allocation2 + $0x118] sm:$0xff] %vm730, %v1155
    %1248 = vst.msk [vmem:[#allocation2 + $0x120] sm:$0xff] %vm730, %v1157
    %1249 = vst.msk [vmem:[#allocation2 + $0x128] sm:$0xff] %vm730, %v1159
    %1250 = vst.msk [vmem:[#allocation2 + $0x130] sm:$0xff] %vm730, %v1161
    %1251 = vst.msk [vmem:[#allocation2 + $0x138] sm:$0xff] %vm730, %v1163
    %1252 = vst.msk [vmem:[#allocation2 + $0x140] sm:$0xff] %vm730, %v1165
    %1253 = vst.msk [vmem:[#allocation2 + $0x148] sm:$0xff] %vm730, %v1167
    %1254 = vst.msk [vmem:[#allocation2 + $0x150] sm:$0xff] %vm730, %v1169
    %1255 = vst.msk [vmem:[#allocation2 + $0x158] sm:$0xff] %vm730, %v1171
    %1256 = vst.msk [vmem:[#allocation2 + $0x160] sm:$0xff] %vm730, %v1173
    %1257 = vst.msk [vmem:[#allocation2 + $0x168] sm:$0xff] %vm730, %v1175
    %1258 = vst.msk [vmem:[#allocation2 + $0x170] sm:$0xff] %vm730, %v1177
    %1259 = vst.msk [vmem:[#allocation2 + $0x178] sm:$0xff] %vm730, %v1179
    %1260 = vst.msk [vmem:[#allocation2 + $0x180] sm:$0xff] %vm730, %v1181
    %1261 = vst.msk [vmem:[#allocation2 + $0x188] sm:$0xff] %vm730, %v1183
    %1262 = vst.msk [vmem:[#allocation2 + $0x190] sm:$0xff] %vm730, %v1185
    %1263 = vst.msk [vmem:[#allocation2 + $0x198] sm:$0xff] %vm730, %v1187
    %1264 = vst.msk [vmem:[#allocation2 + $0x1a0] sm:$0xff] %vm730, %v1189
    %1265 = vst.msk [vmem:[#allocation2 + $0x1a8] sm:$0xff] %vm730, %v1191
    %1266 = vst.msk [vmem:[#allocation2 + $0x1b0] sm:$0xff] %vm730, %v1193
    %1267 = vst.msk [vmem:[#allocation2 + $0x1b8] sm:$0xff] %vm730, %v1195
    %1268 = vst.msk [vmem:[#allocation2 + $0x1c0] sm:$0xff] %vm730, %v1197
    %1269 = vst.msk [vmem:[#allocation2 + $0x1c8] sm:$0xff] %vm730, %v1199
    %1270 = vst.msk [vmem:[#allocation2 + $0x1d0] sm:$0xff] %vm730, %v1201
    %1271 = vst.msk [vmem:[#allocation2 + $0x1d8] sm:$0xff] %vm730, %v1203
    %1272 = vst.msk [vmem:[#allocation2 + $0x1e0] sm:$0xff] %vm730, %v1205
    %1273 = vst.msk [vmem:[#allocation2 + $0x1e8] sm:$0xff] %vm730, %v1207
    %1274 = vst.msk [vmem:[#allocation2 + $0x1f0] sm:$0xff] %vm730, %v1209
    %1275 = vst.msk [vmem:[#allocation2 + $0x1f8] sm:$0xff] %vm730, %v1211
    %s1276 = scalar_lea.vmem [#allocation6], 256
    %v1277 = vld [vmem:[%s1276] sm:$0xf]
    %v1278 = vld [vmem:[%s1276 + $0x4] sm:$0xf]
    %v1279 = vld [vmem:[%s1276 + $0x8] sm:$0xf]
    %v1280 = vld [vmem:[%s1276 + $0xc] sm:$0xf]
    %v1281 = vld [vmem:[%s1276 + $0x10] sm:$0xf]
    %v1282 = vld [vmem:[%s1276 + $0x14] sm:$0xf]
    %v1283 = vld [vmem:[%s1276 + $0x18] sm:$0xf]
    %v1284 = vld [vmem:[%s1276 + $0x1c] sm:$0xf]
    %v1285 = vld [vmem:[%s1276 + $0x20] sm:$0xf]
    %v1286 = vld [vmem:[%s1276 + $0x24] sm:$0xf]
    %v1287 = vld [vmem:[%s1276 + $0x28] sm:$0xf]
    %v1288 = vld [vmem:[%s1276 + $0x2c] sm:$0xf]
    %v1289 = vld [vmem:[%s1276 + $0x30] sm:$0xf]
    %v1290 = vld [vmem:[%s1276 + $0x34] sm:$0xf]
    %v1291 = vld [vmem:[%s1276 + $0x38] sm:$0xf]
    %v1292 = vld [vmem:[%s1276 + $0x3c] sm:$0xf]
    %v1293 = vld [vmem:[%s1276 + $0x40] sm:$0xf]
    %v1294 = vld [vmem:[%s1276 + $0x44] sm:$0xf]
    %v1295 = vld [vmem:[%s1276 + $0x48] sm:$0xf]
    %v1296 = vld [vmem:[%s1276 + $0x4c] sm:$0xf]
    %v1297 = vld [vmem:[%s1276 + $0x50] sm:$0xf]
    %v1298 = vld [vmem:[%s1276 + $0x54] sm:$0xf]
    %v1299 = vld [vmem:[%s1276 + $0x58] sm:$0xf]
    %v1300 = vld [vmem:[%s1276 + $0x5c] sm:$0xf]
    %v1301 = vld [vmem:[%s1276 + $0x60] sm:$0xf]
    %v1302 = vld [vmem:[%s1276 + $0x64] sm:$0xf]
    %v1303 = vld [vmem:[%s1276 + $0x68] sm:$0xf]
    %v1304 = vld [vmem:[%s1276 + $0x6c] sm:$0xf]
    %v1305 = vld [vmem:[%s1276 + $0x70] sm:$0xf]
    %v1306 = vld [vmem:[%s1276 + $0x74] sm:$0xf]
    %v1307 = vld [vmem:[%s1276 + $0x78] sm:$0xf]
    %v1308 = vld [vmem:[%s1276 + $0x7c] sm:$0xf]
    %v1309 = vld [vmem:[%s1276 + $0x80] sm:$0xf]
    %v1310 = vld [vmem:[%s1276 + $0x84] sm:$0xf]
    %v1311 = vld [vmem:[%s1276 + $0x88] sm:$0xf]
    %v1312 = vld [vmem:[%s1276 + $0x8c] sm:$0xf]
    %v1313 = vld [vmem:[%s1276 + $0x90] sm:$0xf]
    %v1314 = vld [vmem:[%s1276 + $0x94] sm:$0xf]
    %v1315 = vld [vmem:[%s1276 + $0x98] sm:$0xf]
    %v1316 = vld [vmem:[%s1276 + $0x9c] sm:$0xf]
    %v1317 = vld [vmem:[%s1276 + $0xa0] sm:$0xf]
    %v1318 = vld [vmem:[%s1276 + $0xa4] sm:$0xf]
    %v1319 = vld [vmem:[%s1276 + $0xa8] sm:$0xf]
    %v1320 = vld [vmem:[%s1276 + $0xac] sm:$0xf]
    %v1321 = vld [vmem:[%s1276 + $0xb0] sm:$0xf]
    %v1322 = vld [vmem:[%s1276 + $0xb4] sm:$0xf]
    %v1323 = vld [vmem:[%s1276 + $0xb8] sm:$0xf]
    %v1324 = vld [vmem:[%s1276 + $0xbc] sm:$0xf]
    %v1325 = vld [vmem:[%s1276 + $0xc0] sm:$0xf]
    %v1326 = vld [vmem:[%s1276 + $0xc4] sm:$0xf]
    %v1327 = vld [vmem:[%s1276 + $0xc8] sm:$0xf]
    %v1328 = vld [vmem:[%s1276 + $0xcc] sm:$0xf]
    %v1329 = vld [vmem:[%s1276 + $0xd0] sm:$0xf]
    %v1330 = vld [vmem:[%s1276 + $0xd4] sm:$0xf]
    %v1331 = vld [vmem:[%s1276 + $0xd8] sm:$0xf]
    %v1332 = vld [vmem:[%s1276 + $0xdc] sm:$0xf]
    %v1333 = vld [vmem:[%s1276 + $0xe0] sm:$0xf]
    %v1334 = vld [vmem:[%s1276 + $0xe4] sm:$0xf]
    %v1335 = vld [vmem:[%s1276 + $0xe8] sm:$0xf]
    %v1336 = vld [vmem:[%s1276 + $0xec] sm:$0xf]
    %v1337 = vld [vmem:[%s1276 + $0xf0] sm:$0xf]
    %v1338 = vld [vmem:[%s1276 + $0xf4] sm:$0xf]
    %v1339 = vld [vmem:[%s1276 + $0xf8] sm:$0xf]
    %v1340 = vld [vmem:[%s1276 + $0xfc] sm:$0xf]
    %v1405 = vunpack.c.l.b16 %v1277
    %v1406 = vunpack.c.l.b16 %v1278
    %v1407 = vunpack.c.l.b16 %v1279
    %v1408 = vunpack.c.l.b16 %v1280
    %v1409 = vunpack.c.l.b16 %v1281
    %v1410 = vunpack.c.l.b16 %v1282
    %v1411 = vunpack.c.l.b16 %v1283
    %v1412 = vunpack.c.l.b16 %v1284
    %v1413 = vunpack.c.l.b16 %v1285
    %v1414 = vunpack.c.l.b16 %v1286
    %v1415 = vunpack.c.l.b16 %v1287
    %v1416 = vunpack.c.l.b16 %v1288
    %v1417 = vunpack.c.l.b16 %v1289
    %v1418 = vunpack.c.l.b16 %v1290
    %v1419 = vunpack.c.l.b16 %v1291
    %v1420 = vunpack.c.l.b16 %v1292
    %v1421 = vunpack.c.l.b16 %v1293
    %v1422 = vunpack.c.l.b16 %v1294
    %v1423 = vunpack.c.l.b16 %v1295
    %v1424 = vunpack.c.l.b16 %v1296
    %v1425 = vunpack.c.l.b16 %v1297
    %v1426 = vunpack.c.l.b16 %v1298
    %v1427 = vunpack.c.l.b16 %v1299
    %v1428 = vunpack.c.l.b16 %v1300
    %v1429 = vunpack.c.l.b16 %v1301
    %v1430 = vunpack.c.l.b16 %v1302
    %v1431 = vunpack.c.l.b16 %v1303
    %v1432 = vunpack.c.l.b16 %v1304
    %v1433 = vunpack.c.l.b16 %v1305
    %v1434 = vunpack.c.l.b16 %v1306
    %v1435 = vunpack.c.l.b16 %v1307
    %v1436 = vunpack.c.l.b16 %v1308
    %v1437 = vunpack.c.l.b16 %v1309
    %v1438 = vunpack.c.l.b16 %v1310
    %v1439 = vunpack.c.l.b16 %v1311
    %v1440 = vunpack.c.l.b16 %v1312
    %v1441 = vunpack.c.l.b16 %v1313
    %v1442 = vunpack.c.l.b16 %v1314
    %v1443 = vunpack.c.l.b16 %v1315
    %v1444 = vunpack.c.l.b16 %v1316
    %v1445 = vunpack.c.l.b16 %v1317
    %v1446 = vunpack.c.l.b16 %v1318
    %v1447 = vunpack.c.l.b16 %v1319
    %v1448 = vunpack.c.l.b16 %v1320
    %v1449 = vunpack.c.l.b16 %v1321
    %v1450 = vunpack.c.l.b16 %v1322
    %v1451 = vunpack.c.l.b16 %v1323
    %v1452 = vunpack.c.l.b16 %v1324
    %v1453 = vunpack.c.l.b16 %v1325
    %v1454 = vunpack.c.l.b16 %v1326
    %v1455 = vunpack.c.l.b16 %v1327
    %v1456 = vunpack.c.l.b16 %v1328
    %v1457 = vunpack.c.l.b16 %v1329
    %v1458 = vunpack.c.l.b16 %v1330
    %v1459 = vunpack.c.l.b16 %v1331
    %v1460 = vunpack.c.l.b16 %v1332
    %v1461 = vunpack.c.l.b16 %v1333
    %v1462 = vunpack.c.l.b16 %v1334
    %v1463 = vunpack.c.l.b16 %v1335
    %v1464 = vunpack.c.l.b16 %v1336
    %v1465 = vunpack.c.l.b16 %v1337
    %v1466 = vunpack.c.l.b16 %v1338
    %v1467 = vunpack.c.l.b16 %v1339
    %v1468 = vunpack.c.l.b16 %v1340
    %v1469 = vpack.c.b16 %v1406, %v1405
    %v1470 = vpack.c.b16 %v1408, %v1407
    %v1471 = vpack.c.b16 %v1410, %v1409
    %v1472 = vpack.c.b16 %v1412, %v1411
    %v1473 = vpack.c.b16 %v1414, %v1413
    %v1474 = vpack.c.b16 %v1416, %v1415
    %v1475 = vpack.c.b16 %v1418, %v1417
    %v1476 = vpack.c.b16 %v1420, %v1419
    %v1477 = vpack.c.b16 %v1422, %v1421
    %v1478 = vpack.c.b16 %v1424, %v1423
    %v1479 = vpack.c.b16 %v1426, %v1425
    %v1480 = vpack.c.b16 %v1428, %v1427
    %v1481 = vpack.c.b16 %v1430, %v1429
    %v1482 = vpack.c.b16 %v1432, %v1431
    %v1483 = vpack.c.b16 %v1434, %v1433
    %v1484 = vpack.c.b16 %v1436, %v1435
    %v1485 = vpack.c.b16 %v1438, %v1437
    %v1486 = vpack.c.b16 %v1440, %v1439
    %v1487 = vpack.c.b16 %v1442, %v1441
    %v1488 = vpack.c.b16 %v1444, %v1443
    %v1489 = vpack.c.b16 %v1446, %v1445
    %v1490 = vpack.c.b16 %v1448, %v1447
    %v1491 = vpack.c.b16 %v1450, %v1449
    %v1492 = vpack.c.b16 %v1452, %v1451
    %v1493 = vpack.c.b16 %v1454, %v1453
    %v1494 = vpack.c.b16 %v1456, %v1455
    %v1495 = vpack.c.b16 %v1458, %v1457
    %v1496 = vpack.c.b16 %v1460, %v1459
    %v1497 = vpack.c.b16 %v1462, %v1461
    %v1498 = vpack.c.b16 %v1464, %v1463
    %v1499 = vpack.c.b16 %v1466, %v1465
    %v1500 = vpack.c.b16 %v1468, %v1467
    %1501 = vrot.lane.b32.xlu0 %v1469, 16
    %v1502 = vpop.permute.xlu0 %1501
    %1503 = vrot.lane.b32.xlu0 %v1470, 16
    %v1504 = vpop.permute.xlu0 %1503
    %1505 = vrot.lane.b32.xlu0 %v1471, 16
    %v1506 = vpop.permute.xlu0 %1505
    %1507 = vrot.lane.b32.xlu0 %v1472, 16
    %v1508 = vpop.permute.xlu0 %1507
    %1509 = vrot.lane.b32.xlu0 %v1473, 16
    %v1510 = vpop.permute.xlu0 %1509
    %1511 = vrot.lane.b32.xlu0 %v1474, 16
    %v1512 = vpop.permute.xlu0 %1511
    %1513 = vrot.lane.b32.xlu0 %v1475, 16
    %v1514 = vpop.permute.xlu0 %1513
    %1515 = vrot.lane.b32.xlu0 %v1476, 16
    %v1516 = vpop.permute.xlu0 %1515
    %1517 = vrot.lane.b32.xlu0 %v1477, 16
    %v1518 = vpop.permute.xlu0 %1517
    %1519 = vrot.lane.b32.xlu0 %v1478, 16
    %v1520 = vpop.permute.xlu0 %1519
    %1521 = vrot.lane.b32.xlu0 %v1479, 16
    %v1522 = vpop.permute.xlu0 %1521
    %1523 = vrot.lane.b32.xlu0 %v1480, 16
    %v1524 = vpop.permute.xlu0 %1523
    %1525 = vrot.lane.b32.xlu0 %v1481, 16
    %v1526 = vpop.permute.xlu0 %1525
    %1527 = vrot.lane.b32.xlu0 %v1482, 16
    %v1528 = vpop.permute.xlu0 %1527
    %1529 = vrot.lane.b32.xlu0 %v1483, 16
    %v1530 = vpop.permute.xlu0 %1529
    %1531 = vrot.lane.b32.xlu0 %v1484, 16
    %v1532 = vpop.permute.xlu0 %1531
    %1533 = vrot.lane.b32.xlu0 %v1485, 16
    %v1534 = vpop.permute.xlu0 %1533
    %1535 = vrot.lane.b32.xlu0 %v1486, 16
    %v1536 = vpop.permute.xlu0 %1535
    %1537 = vrot.lane.b32.xlu0 %v1487, 16
    %v1538 = vpop.permute.xlu0 %1537
    %1539 = vrot.lane.b32.xlu0 %v1488, 16
    %v1540 = vpop.permute.xlu0 %1539
    %1541 = vrot.lane.b32.xlu0 %v1489, 16
    %v1542 = vpop.permute.xlu0 %1541
    %1543 = vrot.lane.b32.xlu0 %v1490, 16
    %v1544 = vpop.permute.xlu0 %1543
    %1545 = vrot.lane.b32.xlu0 %v1491, 16
    %v1546 = vpop.permute.xlu0 %1545
    %1547 = vrot.lane.b32.xlu0 %v1492, 16
    %v1548 = vpop.permute.xlu0 %1547
    %1549 = vrot.lane.b32.xlu0 %v1493, 16
    %v1550 = vpop.permute.xlu0 %1549
    %1551 = vrot.lane.b32.xlu0 %v1494, 16
    %v1552 = vpop.permute.xlu0 %1551
    %1553 = vrot.lane.b32.xlu0 %v1495, 16
    %v1554 = vpop.permute.xlu0 %1553
    %1555 = vrot.lane.b32.xlu0 %v1496, 16
    %v1556 = vpop.permute.xlu0 %1555
    %1557 = vrot.lane.b32.xlu0 %v1497, 16
    %v1558 = vpop.permute.xlu0 %1557
    %1559 = vrot.lane.b32.xlu0 %v1498, 16
    %v1560 = vpop.permute.xlu0 %1559
    %1561 = vrot.lane.b32.xlu0 %v1499, 16
    %v1562 = vpop.permute.xlu0 %1561
    %1563 = vrot.lane.b32.xlu0 %v1500, 16
    %v1564 = vpop.permute.xlu0 %1563
    %1597 = vst.msk [vmem:[#allocation2 + $0x100] sm:$0xff] %vm1083, %v1502
    %1598 = vst.msk [vmem:[#allocation2 + $0x108] sm:$0xff] %vm1083, %v1504
    %1599 = vst.msk [vmem:[#allocation2 + $0x110] sm:$0xff] %vm1083, %v1506
    %1600 = vst.msk [vmem:[#allocation2 + $0x118] sm:$0xff] %vm1083, %v1508
    %1601 = vst.msk [vmem:[#allocation2 + $0x120] sm:$0xff] %vm1083, %v1510
    %1602 = vst.msk [vmem:[#allocation2 + $0x128] sm:$0xff] %vm1083, %v1512
    %1603 = vst.msk [vmem:[#allocation2 + $0x130] sm:$0xff] %vm1083, %v1514
    %1604 = vst.msk [vmem:[#allocation2 + $0x138] sm:$0xff] %vm1083, %v1516
    %1605 = vst.msk [vmem:[#allocation2 + $0x140] sm:$0xff] %vm1083, %v1518
    %1606 = vst.msk [vmem:[#allocation2 + $0x148] sm:$0xff] %vm1083, %v1520
    %1607 = vst.msk [vmem:[#allocation2 + $0x150] sm:$0xff] %vm1083, %v1522
    %1608 = vst.msk [vmem:[#allocation2 + $0x158] sm:$0xff] %vm1083, %v1524
    %1609 = vst.msk [vmem:[#allocation2 + $0x160] sm:$0xff] %vm1083, %v1526
    %1610 = vst.msk [vmem:[#allocation2 + $0x168] sm:$0xff] %vm1083, %v1528
    %1611 = vst.msk [vmem:[#allocation2 + $0x170] sm:$0xff] %vm1083, %v1530
    %1612 = vst.msk [vmem:[#allocation2 + $0x178] sm:$0xff] %vm1083, %v1532
    %1613 = vst.msk [vmem:[#allocation2 + $0x180] sm:$0xff] %vm1083, %v1534
    %1614 = vst.msk [vmem:[#allocation2 + $0x188] sm:$0xff] %vm1083, %v1536
    %1615 = vst.msk [vmem:[#allocation2 + $0x190] sm:$0xff] %vm1083, %v1538
    %1616 = vst.msk [vmem:[#allocation2 + $0x198] sm:$0xff] %vm1083, %v1540
    %1617 = vst.msk [vmem:[#allocation2 + $0x1a0] sm:$0xff] %vm1083, %v1542
    %1618 = vst.msk [vmem:[#allocation2 + $0x1a8] sm:$0xff] %vm1083, %v1544
    %1619 = vst.msk [vmem:[#allocation2 + $0x1b0] sm:$0xff] %vm1083, %v1546
    %1620 = vst.msk [vmem:[#allocation2 + $0x1b8] sm:$0xff] %vm1083, %v1548
    %1621 = vst.msk [vmem:[#allocation2 + $0x1c0] sm:$0xff] %vm1083, %v1550
    %1622 = vst.msk [vmem:[#allocation2 + $0x1c8] sm:$0xff] %vm1083, %v1552
    %1623 = vst.msk [vmem:[#allocation2 + $0x1d0] sm:$0xff] %vm1083, %v1554
    %1624 = vst.msk [vmem:[#allocation2 + $0x1d8] sm:$0xff] %vm1083, %v1556
    %1625 = vst.msk [vmem:[#allocation2 + $0x1e0] sm:$0xff] %vm1083, %v1558
    %1626 = vst.msk [vmem:[#allocation2 + $0x1e8] sm:$0xff] %vm1083, %v1560
    %1627 = vst.msk [vmem:[#allocation2 + $0x1f0] sm:$0xff] %vm1083, %v1562
    %1628 = vst.msk [vmem:[#allocation2 + $0x1f8] sm:$0xff] %vm1083, %v1564
    %1629 = vrot.lane.b32.xlu0 %v698, 96
    %v1630 = vpop.permute.xlu0 %1629
    %1631 = vrot.lane.b32.xlu0 %v699, 96
    %v1632 = vpop.permute.xlu0 %1631
    %1633 = vrot.lane.b32.xlu0 %v700, 96
    %v1634 = vpop.permute.xlu0 %1633
    %1635 = vrot.lane.b32.xlu0 %v701, 96
    %v1636 = vpop.permute.xlu0 %1635
    %1637 = vrot.lane.b32.xlu0 %v702, 96
    %v1638 = vpop.permute.xlu0 %1637
    %1639 = vrot.lane.b32.xlu0 %v703, 96
    %v1640 = vpop.permute.xlu0 %1639
    %1641 = vrot.lane.b32.xlu0 %v704, 96
    %v1642 = vpop.permute.xlu0 %1641
    %1643 = vrot.lane.b32.xlu0 %v705, 96
    %v1644 = vpop.permute.xlu0 %1643
    %1645 = vrot.lane.b32.xlu0 %v706, 96
    %v1646 = vpop.permute.xlu0 %1645
    %1647 = vrot.lane.b32.xlu0 %v707, 96
    %v1648 = vpop.permute.xlu0 %1647
    %1649 = vrot.lane.b32.xlu0 %v708, 96
    %v1650 = vpop.permute.xlu0 %1649
    %1651 = vrot.lane.b32.xlu0 %v709, 96
    %v1652 = vpop.permute.xlu0 %1651
    %1653 = vrot.lane.b32.xlu0 %v710, 96
    %v1654 = vpop.permute.xlu0 %1653
    %1655 = vrot.lane.b32.xlu0 %v711, 96
    %v1656 = vpop.permute.xlu0 %1655
    %1657 = vrot.lane.b32.xlu0 %v712, 96
    %v1658 = vpop.permute.xlu0 %1657
    %1659 = vrot.lane.b32.xlu0 %v713, 96
    %v1660 = vpop.permute.xlu0 %1659
    %1661 = vrot.lane.b32.xlu0 %v714, 96
    %v1662 = vpop.permute.xlu0 %1661
    %1663 = vrot.lane.b32.xlu0 %v715, 96
    %v1664 = vpop.permute.xlu0 %1663
    %1665 = vrot.lane.b32.xlu0 %v716, 96
    %v1666 = vpop.permute.xlu0 %1665
    %1667 = vrot.lane.b32.xlu0 %v717, 96
    %v1668 = vpop.permute.xlu0 %1667
    %1669 = vrot.lane.b32.xlu0 %v718, 96
    %v1670 = vpop.permute.xlu0 %1669
    %1671 = vrot.lane.b32.xlu0 %v719, 96
    %v1672 = vpop.permute.xlu0 %1671
    %1673 = vrot.lane.b32.xlu0 %v720, 96
    %v1674 = vpop.permute.xlu0 %1673
    %1675 = vrot.lane.b32.xlu0 %v721, 96
    %v1676 = vpop.permute.xlu0 %1675
    %1677 = vrot.lane.b32.xlu0 %v722, 96
    %v1678 = vpop.permute.xlu0 %1677
    %1679 = vrot.lane.b32.xlu0 %v723, 96
    %v1680 = vpop.permute.xlu0 %1679
    %1681 = vrot.lane.b32.xlu0 %v724, 96
    %v1682 = vpop.permute.xlu0 %1681
    %1683 = vrot.lane.b32.xlu0 %v725, 96
    %v1684 = vpop.permute.xlu0 %1683
    %1685 = vrot.lane.b32.xlu0 %v726, 96
    %v1686 = vpop.permute.xlu0 %1685
    %1687 = vrot.lane.b32.xlu0 %v727, 96
    %v1688 = vpop.permute.xlu0 %1687
    %1689 = vrot.lane.b32.xlu0 %v728, 96
    %v1690 = vpop.permute.xlu0 %1689
    %1691 = vrot.lane.b32.xlu0 %v729, 96
    %v1692 = vpop.permute.xlu0 %1691
    %1725 = vst.msk [vmem:[#allocation2 + $0x200] sm:$0xff] %vm730, %v1630
    %1726 = vst.msk [vmem:[#allocation2 + $0x208] sm:$0xff] %vm730, %v1632
    %1727 = vst.msk [vmem:[#allocation2 + $0x210] sm:$0xff] %vm730, %v1634
    %1728 = vst.msk [vmem:[#allocation2 + $0x218] sm:$0xff] %vm730, %v1636
    %1729 = vst.msk [vmem:[#allocation2 + $0x220] sm:$0xff] %vm730, %v1638
    %1730 = vst.msk [vmem:[#allocation2 + $0x228] sm:$0xff] %vm730, %v1640
    %1731 = vst.msk [vmem:[#allocation2 + $0x230] sm:$0xff] %vm730, %v1642
    %1732 = vst.msk [vmem:[#allocation2 + $0x238] sm:$0xff] %vm730, %v1644
    %1733 = vst.msk [vmem:[#allocation2 + $0x240] sm:$0xff] %vm730, %v1646
    %1734 = vst.msk [vmem:[#allocation2 + $0x248] sm:$0xff] %vm730, %v1648
    %1735 = vst.msk [vmem:[#allocation2 + $0x250] sm:$0xff] %vm730, %v1650
    %1736 = vst.msk [vmem:[#allocation2 + $0x258] sm:$0xff] %vm730, %v1652
    %1737 = vst.msk [vmem:[#allocation2 + $0x260] sm:$0xff] %vm730, %v1654
    %1738 = vst.msk [vmem:[#allocation2 + $0x268] sm:$0xff] %vm730, %v1656
    %1739 = vst.msk [vmem:[#allocation2 + $0x270] sm:$0xff] %vm730, %v1658
    %1740 = vst.msk [vmem:[#allocation2 + $0x278] sm:$0xff] %vm730, %v1660
    %1741 = vst.msk [vmem:[#allocation2 + $0x280] sm:$0xff] %vm730, %v1662
    %1742 = vst.msk [vmem:[#allocation2 + $0x288] sm:$0xff] %vm730, %v1664
    %1743 = vst.msk [vmem:[#allocation2 + $0x290] sm:$0xff] %vm730, %v1666
    %1744 = vst.msk [vmem:[#allocation2 + $0x298] sm:$0xff] %vm730, %v1668
    %1745 = vst.msk [vmem:[#allocation2 + $0x2a0] sm:$0xff] %vm730, %v1670
    %1746 = vst.msk [vmem:[#allocation2 + $0x2a8] sm:$0xff] %vm730, %v1672
    %1747 = vst.msk [vmem:[#allocation2 + $0x2b0] sm:$0xff] %vm730, %v1674
    %1748 = vst.msk [vmem:[#allocation2 + $0x2b8] sm:$0xff] %vm730, %v1676
    %1749 = vst.msk [vmem:[#allocation2 + $0x2c0] sm:$0xff] %vm730, %v1678
    %1750 = vst.msk [vmem:[#allocation2 + $0x2c8] sm:$0xff] %vm730, %v1680
    %1751 = vst.msk [vmem:[#allocation2 + $0x2d0] sm:$0xff] %vm730, %v1682
    %1752 = vst.msk [vmem:[#allocation2 + $0x2d8] sm:$0xff] %vm730, %v1684
    %1753 = vst.msk [vmem:[#allocation2 + $0x2e0] sm:$0xff] %vm730, %v1686
    %1754 = vst.msk [vmem:[#allocation2 + $0x2e8] sm:$0xff] %vm730, %v1688
    %1755 = vst.msk [vmem:[#allocation2 + $0x2f0] sm:$0xff] %vm730, %v1690
    %1756 = vst.msk [vmem:[#allocation2 + $0x2f8] sm:$0xff] %vm730, %v1692
    %s1757 = scalar_lea.vmem [#allocation6], 512
    %v1758 = vld [vmem:[%s1757] sm:$0xf]
    %v1759 = vld [vmem:[%s1757 + $0x4] sm:$0xf]
    %v1760 = vld [vmem:[%s1757 + $0x8] sm:$0xf]
    %v1761 = vld [vmem:[%s1757 + $0xc] sm:$0xf]
    %v1762 = vld [vmem:[%s1757 + $0x10] sm:$0xf]
    %v1763 = vld [vmem:[%s1757 + $0x14] sm:$0xf]
    %v1764 = vld [vmem:[%s1757 + $0x18] sm:$0xf]
    %v1765 = vld [vmem:[%s1757 + $0x1c] sm:$0xf]
    %v1766 = vld [vmem:[%s1757 + $0x20] sm:$0xf]
    %v1767 = vld [vmem:[%s1757 + $0x24] sm:$0xf]
    %v1768 = vld [vmem:[%s1757 + $0x28] sm:$0xf]
    %v1769 = vld [vmem:[%s1757 + $0x2c] sm:$0xf]
    %v1770 = vld [vmem:[%s1757 + $0x30] sm:$0xf]
    %v1771 = vld [vmem:[%s1757 + $0x34] sm:$0xf]
    %v1772 = vld [vmem:[%s1757 + $0x38] sm:$0xf]
    %v1773 = vld [vmem:[%s1757 + $0x3c] sm:$0xf]
    %v1774 = vld [vmem:[%s1757 + $0x40] sm:$0xf]
    %v1775 = vld [vmem:[%s1757 + $0x44] sm:$0xf]
    %v1776 = vld [vmem:[%s1757 + $0x48] sm:$0xf]
    %v1777 = vld [vmem:[%s1757 + $0x4c] sm:$0xf]
    %v1778 = vld [vmem:[%s1757 + $0x50] sm:$0xf]
    %v1779 = vld [vmem:[%s1757 + $0x54] sm:$0xf]
    %v1780 = vld [vmem:[%s1757 + $0x58] sm:$0xf]
    %v1781 = vld [vmem:[%s1757 + $0x5c] sm:$0xf]
    %v1782 = vld [vmem:[%s1757 + $0x60] sm:$0xf]
    %v1783 = vld [vmem:[%s1757 + $0x64] sm:$0xf]
    %v1784 = vld [vmem:[%s1757 + $0x68] sm:$0xf]
    %v1785 = vld [vmem:[%s1757 + $0x6c] sm:$0xf]
    %v1786 = vld [vmem:[%s1757 + $0x70] sm:$0xf]
    %v1787 = vld [vmem:[%s1757 + $0x74] sm:$0xf]
    %v1788 = vld [vmem:[%s1757 + $0x78] sm:$0xf]
    %v1789 = vld [vmem:[%s1757 + $0x7c] sm:$0xf]
    %v1790 = vld [vmem:[%s1757 + $0x80] sm:$0xf]
    %v1791 = vld [vmem:[%s1757 + $0x84] sm:$0xf]
    %v1792 = vld [vmem:[%s1757 + $0x88] sm:$0xf]
    %v1793 = vld [vmem:[%s1757 + $0x8c] sm:$0xf]
    %v1794 = vld [vmem:[%s1757 + $0x90] sm:$0xf]
    %v1795 = vld [vmem:[%s1757 + $0x94] sm:$0xf]
    %v1796 = vld [vmem:[%s1757 + $0x98] sm:$0xf]
    %v1797 = vld [vmem:[%s1757 + $0x9c] sm:$0xf]
    %v1798 = vld [vmem:[%s1757 + $0xa0] sm:$0xf]
    %v1799 = vld [vmem:[%s1757 + $0xa4] sm:$0xf]
    %v1800 = vld [vmem:[%s1757 + $0xa8] sm:$0xf]
    %v1801 = vld [vmem:[%s1757 + $0xac] sm:$0xf]
    %v1802 = vld [vmem:[%s1757 + $0xb0] sm:$0xf]
    %v1803 = vld [vmem:[%s1757 + $0xb4] sm:$0xf]
    %v1804 = vld [vmem:[%s1757 + $0xb8] sm:$0xf]
    %v1805 = vld [vmem:[%s1757 + $0xbc] sm:$0xf]
    %v1806 = vld [vmem:[%s1757 + $0xc0] sm:$0xf]
    %v1807 = vld [vmem:[%s1757 + $0xc4] sm:$0xf]
    %v1808 = vld [vmem:[%s1757 + $0xc8] sm:$0xf]
    %v1809 = vld [vmem:[%s1757 + $0xcc] sm:$0xf]
    %v1810 = vld [vmem:[%s1757 + $0xd0] sm:$0xf]
    %v1811 = vld [vmem:[%s1757 + $0xd4] sm:$0xf]
    %v1812 = vld [vmem:[%s1757 + $0xd8] sm:$0xf]
    %v1813 = vld [vmem:[%s1757 + $0xdc] sm:$0xf]
    %v1814 = vld [vmem:[%s1757 + $0xe0] sm:$0xf]
    %v1815 = vld [vmem:[%s1757 + $0xe4] sm:$0xf]
    %v1816 = vld [vmem:[%s1757 + $0xe8] sm:$0xf]
    %v1817 = vld [vmem:[%s1757 + $0xec] sm:$0xf]
    %v1818 = vld [vmem:[%s1757 + $0xf0] sm:$0xf]
    %v1819 = vld [vmem:[%s1757 + $0xf4] sm:$0xf]
    %v1820 = vld [vmem:[%s1757 + $0xf8] sm:$0xf]
    %v1821 = vld [vmem:[%s1757 + $0xfc] sm:$0xf]
    %v1886 = vunpack.c.l.b16 %v1758
    %v1887 = vunpack.c.l.b16 %v1759
    %v1888 = vunpack.c.l.b16 %v1760
    %v1889 = vunpack.c.l.b16 %v1761
    %v1890 = vunpack.c.l.b16 %v1762
    %v1891 = vunpack.c.l.b16 %v1763
    %v1892 = vunpack.c.l.b16 %v1764
    %v1893 = vunpack.c.l.b16 %v1765
    %v1894 = vunpack.c.l.b16 %v1766
    %v1895 = vunpack.c.l.b16 %v1767
    %v1896 = vunpack.c.l.b16 %v1768
    %v1897 = vunpack.c.l.b16 %v1769
    %v1898 = vunpack.c.l.b16 %v1770
    %v1899 = vunpack.c.l.b16 %v1771
    %v1900 = vunpack.c.l.b16 %v1772
    %v1901 = vunpack.c.l.b16 %v1773
    %v1902 = vunpack.c.l.b16 %v1774
    %v1903 = vunpack.c.l.b16 %v1775
    %v1904 = vunpack.c.l.b16 %v1776
    %v1905 = vunpack.c.l.b16 %v1777
    %v1906 = vunpack.c.l.b16 %v1778
    %v1907 = vunpack.c.l.b16 %v1779
    %v1908 = vunpack.c.l.b16 %v1780
    %v1909 = vunpack.c.l.b16 %v1781
    %v1910 = vunpack.c.l.b16 %v1782
    %v1911 = vunpack.c.l.b16 %v1783
    %v1912 = vunpack.c.l.b16 %v1784
    %v1913 = vunpack.c.l.b16 %v1785
    %v1914 = vunpack.c.l.b16 %v1786
    %v1915 = vunpack.c.l.b16 %v1787
    %v1916 = vunpack.c.l.b16 %v1788
    %v1917 = vunpack.c.l.b16 %v1789
    %v1918 = vunpack.c.l.b16 %v1790
    %v1919 = vunpack.c.l.b16 %v1791
    %v1920 = vunpack.c.l.b16 %v1792
    %v1921 = vunpack.c.l.b16 %v1793
    %v1922 = vunpack.c.l.b16 %v1794
    %v1923 = vunpack.c.l.b16 %v1795
    %v1924 = vunpack.c.l.b16 %v1796
    %v1925 = vunpack.c.l.b16 %v1797
    %v1926 = vunpack.c.l.b16 %v1798
    %v1927 = vunpack.c.l.b16 %v1799
    %v1928 = vunpack.c.l.b16 %v1800
    %v1929 = vunpack.c.l.b16 %v1801
    %v1930 = vunpack.c.l.b16 %v1802
    %v1931 = vunpack.c.l.b16 %v1803
    %v1932 = vunpack.c.l.b16 %v1804
    %v1933 = vunpack.c.l.b16 %v1805
    %v1934 = vunpack.c.l.b16 %v1806
    %v1935 = vunpack.c.l.b16 %v1807
    %v1936 = vunpack.c.l.b16 %v1808
    %v1937 = vunpack.c.l.b16 %v1809
    %v1938 = vunpack.c.l.b16 %v1810
    %v1939 = vunpack.c.l.b16 %v1811
    %v1940 = vunpack.c.l.b16 %v1812
    %v1941 = vunpack.c.l.b16 %v1813
    %v1942 = vunpack.c.l.b16 %v1814
    %v1943 = vunpack.c.l.b16 %v1815
    %v1944 = vunpack.c.l.b16 %v1816
    %v1945 = vunpack.c.l.b16 %v1817
    %v1946 = vunpack.c.l.b16 %v1818
    %v1947 = vunpack.c.l.b16 %v1819
    %v1948 = vunpack.c.l.b16 %v1820
    %v1949 = vunpack.c.l.b16 %v1821
    %v1950 = vpack.c.b16 %v1887, %v1886
    %v1951 = vpack.c.b16 %v1889, %v1888
    %v1952 = vpack.c.b16 %v1891, %v1890
    %v1953 = vpack.c.b16 %v1893, %v1892
    %v1954 = vpack.c.b16 %v1895, %v1894
    %v1955 = vpack.c.b16 %v1897, %v1896
    %v1956 = vpack.c.b16 %v1899, %v1898
    %v1957 = vpack.c.b16 %v1901, %v1900
    %v1958 = vpack.c.b16 %v1903, %v1902
    %v1959 = vpack.c.b16 %v1905, %v1904
    %v1960 = vpack.c.b16 %v1907, %v1906
    %v1961 = vpack.c.b16 %v1909, %v1908
    %v1962 = vpack.c.b16 %v1911, %v1910
    %v1963 = vpack.c.b16 %v1913, %v1912
    %v1964 = vpack.c.b16 %v1915, %v1914
    %v1965 = vpack.c.b16 %v1917, %v1916
    %v1966 = vpack.c.b16 %v1919, %v1918
    %v1967 = vpack.c.b16 %v1921, %v1920
    %v1968 = vpack.c.b16 %v1923, %v1922
    %v1969 = vpack.c.b16 %v1925, %v1924
    %v1970 = vpack.c.b16 %v1927, %v1926
    %v1971 = vpack.c.b16 %v1929, %v1928
    %v1972 = vpack.c.b16 %v1931, %v1930
    %v1973 = vpack.c.b16 %v1933, %v1932
    %v1974 = vpack.c.b16 %v1935, %v1934
    %v1975 = vpack.c.b16 %v1937, %v1936
    %v1976 = vpack.c.b16 %v1939, %v1938
    %v1977 = vpack.c.b16 %v1941, %v1940
    %v1978 = vpack.c.b16 %v1943, %v1942
    %v1979 = vpack.c.b16 %v1945, %v1944
    %v1980 = vpack.c.b16 %v1947, %v1946
    %v1981 = vpack.c.b16 %v1949, %v1948
    %1982 = vrot.lane.b32.xlu0 %v1950, 16
    %v1983 = vpop.permute.xlu0 %1982
    %1984 = vrot.lane.b32.xlu0 %v1951, 16
    %v1985 = vpop.permute.xlu0 %1984
    %1986 = vrot.lane.b32.xlu0 %v1952, 16
    %v1987 = vpop.permute.xlu0 %1986
    %1988 = vrot.lane.b32.xlu0 %v1953, 16
    %v1989 = vpop.permute.xlu0 %1988
    %1990 = vrot.lane.b32.xlu0 %v1954, 16
    %v1991 = vpop.permute.xlu0 %1990
    %1992 = vrot.lane.b32.xlu0 %v1955, 16
    %v1993 = vpop.permute.xlu0 %1992
    %1994 = vrot.lane.b32.xlu0 %v1956, 16
    %v1995 = vpop.permute.xlu0 %1994
    %1996 = vrot.lane.b32.xlu0 %v1957, 16
    %v1997 = vpop.permute.xlu0 %1996
    %1998 = vrot.lane.b32.xlu0 %v1958, 16
    %v1999 = vpop.permute.xlu0 %1998
    %2000 = vrot.lane.b32.xlu0 %v1959, 16
    %v2001 = vpop.permute.xlu0 %2000
    %2002 = vrot.lane.b32.xlu0 %v1960, 16
    %v2003 = vpop.permute.xlu0 %2002
    %2004 = vrot.lane.b32.xlu0 %v1961, 16
    %v2005 = vpop.permute.xlu0 %2004
    %2006 = vrot.lane.b32.xlu0 %v1962, 16
    %v2007 = vpop.permute.xlu0 %2006
    %2008 = vrot.lane.b32.xlu0 %v1963, 16
    %v2009 = vpop.permute.xlu0 %2008
    %2010 = vrot.lane.b32.xlu0 %v1964, 16
    %v2011 = vpop.permute.xlu0 %2010
    %2012 = vrot.lane.b32.xlu0 %v1965, 16
    %v2013 = vpop.permute.xlu0 %2012
    %2014 = vrot.lane.b32.xlu0 %v1966, 16
    %v2015 = vpop.permute.xlu0 %2014
    %2016 = vrot.lane.b32.xlu0 %v1967, 16
    %v2017 = vpop.permute.xlu0 %2016
    %2018 = vrot.lane.b32.xlu0 %v1968, 16
    %v2019 = vpop.permute.xlu0 %2018
    %2020 = vrot.lane.b32.xlu0 %v1969, 16
    %v2021 = vpop.permute.xlu0 %2020
    %2022 = vrot.lane.b32.xlu0 %v1970, 16
    %v2023 = vpop.permute.xlu0 %2022
    %2024 = vrot.lane.b32.xlu0 %v1971, 16
    %v2025 = vpop.permute.xlu0 %2024
    %2026 = vrot.lane.b32.xlu0 %v1972, 16
    %v2027 = vpop.permute.xlu0 %2026
    %2028 = vrot.lane.b32.xlu0 %v1973, 16
    %v2029 = vpop.permute.xlu0 %2028
    %2030 = vrot.lane.b32.xlu0 %v1974, 16
    %v2031 = vpop.permute.xlu0 %2030
    %2032 = vrot.lane.b32.xlu0 %v1975, 16
    %v2033 = vpop.permute.xlu0 %2032
    %2034 = vrot.lane.b32.xlu0 %v1976, 16
    %v2035 = vpop.permute.xlu0 %2034
    %2036 = vrot.lane.b32.xlu0 %v1977, 16
    %v2037 = vpop.permute.xlu0 %2036
    %2038 = vrot.lane.b32.xlu0 %v1978, 16
    %v2039 = vpop.permute.xlu0 %2038
    %2040 = vrot.lane.b32.xlu0 %v1979, 16
    %v2041 = vpop.permute.xlu0 %2040
    %2042 = vrot.lane.b32.xlu0 %v1980, 16
    %v2043 = vpop.permute.xlu0 %2042
    %2044 = vrot.lane.b32.xlu0 %v1981, 16
    %v2045 = vpop.permute.xlu0 %2044
    %2078 = vst.msk [vmem:[#allocation2 + $0x200] sm:$0xff] %vm1083, %v1983
    %2079 = vst.msk [vmem:[#allocation2 + $0x208] sm:$0xff] %vm1083, %v1985
    %2080 = vst.msk [vmem:[#allocation2 + $0x210] sm:$0xff] %vm1083, %v1987
    %2081 = vst.msk [vmem:[#allocation2 + $0x218] sm:$0xff] %vm1083, %v1989
    %2082 = vst.msk [vmem:[#allocation2 + $0x220] sm:$0xff] %vm1083, %v1991
    %2083 = vst.msk [vmem:[#allocation2 + $0x228] sm:$0xff] %vm1083, %v1993
    %2084 = vst.msk [vmem:[#allocation2 + $0x230] sm:$0xff] %vm1083, %v1995
    %2085 = vst.msk [vmem:[#allocation2 + $0x238] sm:$0xff] %vm1083, %v1997
    %2086 = vst.msk [vmem:[#allocation2 + $0x240] sm:$0xff] %vm1083, %v1999
    %2087 = vst.msk [vmem:[#allocation2 + $0x248] sm:$0xff] %vm1083, %v2001
    %2088 = vst.msk [vmem:[#allocation2 + $0x250] sm:$0xff] %vm1083, %v2003
    %2089 = vst.msk [vmem:[#allocation2 + $0x258] sm:$0xff] %vm1083, %v2005
    %2090 = vst.msk [vmem:[#allocation2 + $0x260] sm:$0xff] %vm1083, %v2007
    %2091 = vst.msk [vmem:[#allocation2 + $0x268] sm:$0xff] %vm1083, %v2009
    %2092 = vst.msk [vmem:[#allocation2 + $0x270] sm:$0xff] %vm1083, %v2011
    %2093 = vst.msk [vmem:[#allocation2 + $0x278] sm:$0xff] %vm1083, %v2013
    %2094 = vst.msk [vmem:[#allocation2 + $0x280] sm:$0xff] %vm1083, %v2015
    %2095 = vst.msk [vmem:[#allocation2 + $0x288] sm:$0xff] %vm1083, %v2017
    %2096 = vst.msk [vmem:[#allocation2 + $0x290] sm:$0xff] %vm1083, %v2019
    %2097 = vst.msk [vmem:[#allocation2 + $0x298] sm:$0xff] %vm1083, %v2021
    %2098 = vst.msk [vmem:[#allocation2 + $0x2a0] sm:$0xff] %vm1083, %v2023
    %2099 = vst.msk [vmem:[#allocation2 + $0x2a8] sm:$0xff] %vm1083, %v2025
    %2100 = vst.msk [vmem:[#allocation2 + $0x2b0] sm:$0xff] %vm1083, %v2027
    %2101 = vst.msk [vmem:[#allocation2 + $0x2b8] sm:$0xff] %vm1083, %v2029
    %2102 = vst.msk [vmem:[#allocation2 + $0x2c0] sm:$0xff] %vm1083, %v2031
    %2103 = vst.msk [vmem:[#allocation2 + $0x2c8] sm:$0xff] %vm1083, %v2033
    %2104 = vst.msk [vmem:[#allocation2 + $0x2d0] sm:$0xff] %vm1083, %v2035
    %2105 = vst.msk [vmem:[#allocation2 + $0x2d8] sm:$0xff] %vm1083, %v2037
    %2106 = vst.msk [vmem:[#allocation2 + $0x2e0] sm:$0xff] %vm1083, %v2039
    %2107 = vst.msk [vmem:[#allocation2 + $0x2e8] sm:$0xff] %vm1083, %v2041
    %2108 = vst.msk [vmem:[#allocation2 + $0x2f0] sm:$0xff] %vm1083, %v2043
    %2109 = vst.msk [vmem:[#allocation2 + $0x2f8] sm:$0xff] %vm1083, %v2045
    %2110 = vrot.lane.b32.xlu0 %v698, 80
    %v2111 = vpop.permute.xlu0 %2110
    %2112 = vrot.lane.b32.xlu0 %v699, 80
    %v2113 = vpop.permute.xlu0 %2112
    %2114 = vrot.lane.b32.xlu0 %v700, 80
    %v2115 = vpop.permute.xlu0 %2114
    %2116 = vrot.lane.b32.xlu0 %v701, 80
    %v2117 = vpop.permute.xlu0 %2116
    %2118 = vrot.lane.b32.xlu0 %v702, 80
    %v2119 = vpop.permute.xlu0 %2118
    %2120 = vrot.lane.b32.xlu0 %v703, 80
    %v2121 = vpop.permute.xlu0 %2120
    %2122 = vrot.lane.b32.xlu0 %v704, 80
    %v2123 = vpop.permute.xlu0 %2122
    %2124 = vrot.lane.b32.xlu0 %v705, 80
    %v2125 = vpop.permute.xlu0 %2124
    %2126 = vrot.lane.b32.xlu0 %v706, 80
    %v2127 = vpop.permute.xlu0 %2126
    %2128 = vrot.lane.b32.xlu0 %v707, 80
    %v2129 = vpop.permute.xlu0 %2128
    %2130 = vrot.lane.b32.xlu0 %v708, 80
    %v2131 = vpop.permute.xlu0 %2130
    %2132 = vrot.lane.b32.xlu0 %v709, 80
    %v2133 = vpop.permute.xlu0 %2132
    %2134 = vrot.lane.b32.xlu0 %v710, 80
    %v2135 = vpop.permute.xlu0 %2134
    %2136 = vrot.lane.b32.xlu0 %v711, 80
    %v2137 = vpop.permute.xlu0 %2136
    %2138 = vrot.lane.b32.xlu0 %v712, 80
    %v2139 = vpop.permute.xlu0 %2138
    %2140 = vrot.lane.b32.xlu0 %v713, 80
    %v2141 = vpop.permute.xlu0 %2140
    %2142 = vrot.lane.b32.xlu0 %v714, 80
    %v2143 = vpop.permute.xlu0 %2142
    %2144 = vrot.lane.b32.xlu0 %v715, 80
    %v2145 = vpop.permute.xlu0 %2144
    %2146 = vrot.lane.b32.xlu0 %v716, 80
    %v2147 = vpop.permute.xlu0 %2146
    %2148 = vrot.lane.b32.xlu0 %v717, 80
    %v2149 = vpop.permute.xlu0 %2148
    %2150 = vrot.lane.b32.xlu0 %v718, 80
    %v2151 = vpop.permute.xlu0 %2150
    %2152 = vrot.lane.b32.xlu0 %v719, 80
    %v2153 = vpop.permute.xlu0 %2152
    %2154 = vrot.lane.b32.xlu0 %v720, 80
    %v2155 = vpop.permute.xlu0 %2154
    %2156 = vrot.lane.b32.xlu0 %v721, 80
    %v2157 = vpop.permute.xlu0 %2156
    %2158 = vrot.lane.b32.xlu0 %v722, 80
    %v2159 = vpop.permute.xlu0 %2158
    %2160 = vrot.lane.b32.xlu0 %v723, 80
    %v2161 = vpop.permute.xlu0 %2160
    %2162 = vrot.lane.b32.xlu0 %v724, 80
    %v2163 = vpop.permute.xlu0 %2162
    %2164 = vrot.lane.b32.xlu0 %v725, 80
    %v2165 = vpop.permute.xlu0 %2164
    %2166 = vrot.lane.b32.xlu0 %v726, 80
    %v2167 = vpop.permute.xlu0 %2166
    %2168 = vrot.lane.b32.xlu0 %v727, 80
    %v2169 = vpop.permute.xlu0 %2168
    %2170 = vrot.lane.b32.xlu0 %v728, 80
    %v2171 = vpop.permute.xlu0 %2170
    %2172 = vrot.lane.b32.xlu0 %v729, 80
    %v2173 = vpop.permute.xlu0 %2172
    %2206 = vst.msk [vmem:[#allocation2 + $0x300] sm:$0xff] %vm730, %v2111
    %2207 = vst.msk [vmem:[#allocation2 + $0x308] sm:$0xff] %vm730, %v2113
    %2208 = vst.msk [vmem:[#allocation2 + $0x310] sm:$0xff] %vm730, %v2115
    %2209 = vst.msk [vmem:[#allocation2 + $0x318] sm:$0xff] %vm730, %v2117
    %2210 = vst.msk [vmem:[#allocation2 + $0x320] sm:$0xff] %vm730, %v2119
    %2211 = vst.msk [vmem:[#allocation2 + $0x328] sm:$0xff] %vm730, %v2121
    %2212 = vst.msk [vmem:[#allocation2 + $0x330] sm:$0xff] %vm730, %v2123
    %2213 = vst.msk [vmem:[#allocation2 + $0x338] sm:$0xff] %vm730, %v2125
    %2214 = vst.msk [vmem:[#allocation2 + $0x340] sm:$0xff] %vm730, %v2127
    %2215 = vst.msk [vmem:[#allocation2 + $0x348] sm:$0xff] %vm730, %v2129
    %2216 = vst.msk [vmem:[#allocation2 + $0x350] sm:$0xff] %vm730, %v2131
    %2217 = vst.msk [vmem:[#allocation2 + $0x358] sm:$0xff] %vm730, %v2133
    %2218 = vst.msk [vmem:[#allocation2 + $0x360] sm:$0xff] %vm730, %v2135
    %2219 = vst.msk [vmem:[#allocation2 + $0x368] sm:$0xff] %vm730, %v2137
    %2220 = vst.msk [vmem:[#allocation2 + $0x370] sm:$0xff] %vm730, %v2139
    %2221 = vst.msk [vmem:[#allocation2 + $0x378] sm:$0xff] %vm730, %v2141
    %2222 = vst.msk [vmem:[#allocation2 + $0x380] sm:$0xff] %vm730, %v2143
    %2223 = vst.msk [vmem:[#allocation2 + $0x388] sm:$0xff] %vm730, %v2145
    %2224 = vst.msk [vmem:[#allocation2 + $0x390] sm:$0xff] %vm730, %v2147
    %2225 = vst.msk [vmem:[#allocation2 + $0x398] sm:$0xff] %vm730, %v2149
    %2226 = vst.msk [vmem:[#allocation2 + $0x3a0] sm:$0xff] %vm730, %v2151
    %2227 = vst.msk [vmem:[#allocation2 + $0x3a8] sm:$0xff] %vm730, %v2153
    %2228 = vst.msk [vmem:[#allocation2 + $0x3b0] sm:$0xff] %vm730, %v2155
    %2229 = vst.msk [vmem:[#allocation2 + $0x3b8] sm:$0xff] %vm730, %v2157
    %2230 = vst.msk [vmem:[#allocation2 + $0x3c0] sm:$0xff] %vm730, %v2159
    %2231 = vst.msk [vmem:[#allocation2 + $0x3c8] sm:$0xff] %vm730, %v2161
    %2232 = vst.msk [vmem:[#allocation2 + $0x3d0] sm:$0xff] %vm730, %v2163
    %2233 = vst.msk [vmem:[#allocation2 + $0x3d8] sm:$0xff] %vm730, %v2165
    %2234 = vst.msk [vmem:[#allocation2 + $0x3e0] sm:$0xff] %vm730, %v2167
    %2235 = vst.msk [vmem:[#allocation2 + $0x3e8] sm:$0xff] %vm730, %v2169
    %2236 = vst.msk [vmem:[#allocation2 + $0x3f0] sm:$0xff] %vm730, %v2171
    %2237 = vst.msk [vmem:[#allocation2 + $0x3f8] sm:$0xff] %vm730, %v2173
    %s2238 = scalar_lea.vmem [#allocation6], 768
    %v2239 = vld [vmem:[%s2238] sm:$0xf]
    %v2240 = vld [vmem:[%s2238 + $0x4] sm:$0xf]
    %v2241 = vld [vmem:[%s2238 + $0x8] sm:$0xf]
    %v2242 = vld [vmem:[%s2238 + $0xc] sm:$0xf]
    %v2243 = vld [vmem:[%s2238 + $0x10] sm:$0xf]
    %v2244 = vld [vmem:[%s2238 + $0x14] sm:$0xf]
    %v2245 = vld [vmem:[%s2238 + $0x18] sm:$0xf]
    %v2246 = vld [vmem:[%s2238 + $0x1c] sm:$0xf]
    %v2247 = vld [vmem:[%s2238 + $0x20] sm:$0xf]
    %v2248 = vld [vmem:[%s2238 + $0x24] sm:$0xf]
    %v2249 = vld [vmem:[%s2238 + $0x28] sm:$0xf]
    %v2250 = vld [vmem:[%s2238 + $0x2c] sm:$0xf]
    %v2251 = vld [vmem:[%s2238 + $0x30] sm:$0xf]
    %v2252 = vld [vmem:[%s2238 + $0x34] sm:$0xf]
    %v2253 = vld [vmem:[%s2238 + $0x38] sm:$0xf]
    %v2254 = vld [vmem:[%s2238 + $0x3c] sm:$0xf]
    %v2255 = vld [vmem:[%s2238 + $0x40] sm:$0xf]
    %v2256 = vld [vmem:[%s2238 + $0x44] sm:$0xf]
    %v2257 = vld [vmem:[%s2238 + $0x48] sm:$0xf]
    %v2258 = vld [vmem:[%s2238 + $0x4c] sm:$0xf]
    %v2259 = vld [vmem:[%s2238 + $0x50] sm:$0xf]
    %v2260 = vld [vmem:[%s2238 + $0x54] sm:$0xf]
    %v2261 = vld [vmem:[%s2238 + $0x58] sm:$0xf]
    %v2262 = vld [vmem:[%s2238 + $0x5c] sm:$0xf]
    %v2263 = vld [vmem:[%s2238 + $0x60] sm:$0xf]
    %v2264 = vld [vmem:[%s2238 + $0x64] sm:$0xf]
    %v2265 = vld [vmem:[%s2238 + $0x68] sm:$0xf]
    %v2266 = vld [vmem:[%s2238 + $0x6c] sm:$0xf]
    %v2267 = vld [vmem:[%s2238 + $0x70] sm:$0xf]
    %v2268 = vld [vmem:[%s2238 + $0x74] sm:$0xf]
    %v2269 = vld [vmem:[%s2238 + $0x78] sm:$0xf]
    %v2270 = vld [vmem:[%s2238 + $0x7c] sm:$0xf]
    %v2271 = vld [vmem:[%s2238 + $0x80] sm:$0xf]
    %v2272 = vld [vmem:[%s2238 + $0x84] sm:$0xf]
    %v2273 = vld [vmem:[%s2238 + $0x88] sm:$0xf]
    %v2274 = vld [vmem:[%s2238 + $0x8c] sm:$0xf]
    %v2275 = vld [vmem:[%s2238 + $0x90] sm:$0xf]
    %v2276 = vld [vmem:[%s2238 + $0x94] sm:$0xf]
    %v2277 = vld [vmem:[%s2238 + $0x98] sm:$0xf]
    %v2278 = vld [vmem:[%s2238 + $0x9c] sm:$0xf]
    %v2279 = vld [vmem:[%s2238 + $0xa0] sm:$0xf]
    %v2280 = vld [vmem:[%s2238 + $0xa4] sm:$0xf]
    %v2281 = vld [vmem:[%s2238 + $0xa8] sm:$0xf]
    %v2282 = vld [vmem:[%s2238 + $0xac] sm:$0xf]
    %v2283 = vld [vmem:[%s2238 + $0xb0] sm:$0xf]
    %v2284 = vld [vmem:[%s2238 + $0xb4] sm:$0xf]
    %v2285 = vld [vmem:[%s2238 + $0xb8] sm:$0xf]
    %v2286 = vld [vmem:[%s2238 + $0xbc] sm:$0xf]
    %v2287 = vld [vmem:[%s2238 + $0xc0] sm:$0xf]
    %v2288 = vld [vmem:[%s2238 + $0xc4] sm:$0xf]
    %v2289 = vld [vmem:[%s2238 + $0xc8] sm:$0xf]
    %v2290 = vld [vmem:[%s2238 + $0xcc] sm:$0xf]
    %v2291 = vld [vmem:[%s2238 + $0xd0] sm:$0xf]
    %v2292 = vld [vmem:[%s2238 + $0xd4] sm:$0xf]
    %v2293 = vld [vmem:[%s2238 + $0xd8] sm:$0xf]
    %v2294 = vld [vmem:[%s2238 + $0xdc] sm:$0xf]
    %v2295 = vld [vmem:[%s2238 + $0xe0] sm:$0xf]
    %v2296 = vld [vmem:[%s2238 + $0xe4] sm:$0xf]
    %v2297 = vld [vmem:[%s2238 + $0xe8] sm:$0xf]
    %v2298 = vld [vmem:[%s2238 + $0xec] sm:$0xf]
    %v2299 = vld [vmem:[%s2238 + $0xf0] sm:$0xf]
    %v2300 = vld [vmem:[%s2238 + $0xf4] sm:$0xf]
    %v2301 = vld [vmem:[%s2238 + $0xf8] sm:$0xf]
    %v2302 = vld [vmem:[%s2238 + $0xfc] sm:$0xf]
    %v2367 = vunpack.c.l.b16 %v2239
    %v2368 = vunpack.c.l.b16 %v2240
    %v2369 = vunpack.c.l.b16 %v2241
    %v2370 = vunpack.c.l.b16 %v2242
    %v2371 = vunpack.c.l.b16 %v2243
    %v2372 = vunpack.c.l.b16 %v2244
    %v2373 = vunpack.c.l.b16 %v2245
    %v2374 = vunpack.c.l.b16 %v2246
    %v2375 = vunpack.c.l.b16 %v2247
    %v2376 = vunpack.c.l.b16 %v2248
    %v2377 = vunpack.c.l.b16 %v2249
    %v2378 = vunpack.c.l.b16 %v2250
    %v2379 = vunpack.c.l.b16 %v2251
    %v2380 = vunpack.c.l.b16 %v2252
    %v2381 = vunpack.c.l.b16 %v2253
    %v2382 = vunpack.c.l.b16 %v2254
    %v2383 = vunpack.c.l.b16 %v2255
    %v2384 = vunpack.c.l.b16 %v2256
    %v2385 = vunpack.c.l.b16 %v2257
    %v2386 = vunpack.c.l.b16 %v2258
    %v2387 = vunpack.c.l.b16 %v2259
    %v2388 = vunpack.c.l.b16 %v2260
    %v2389 = vunpack.c.l.b16 %v2261
    %v2390 = vunpack.c.l.b16 %v2262
    %v2391 = vunpack.c.l.b16 %v2263
    %v2392 = vunpack.c.l.b16 %v2264
    %v2393 = vunpack.c.l.b16 %v2265
    %v2394 = vunpack.c.l.b16 %v2266
    %v2395 = vunpack.c.l.b16 %v2267
    %v2396 = vunpack.c.l.b16 %v2268
    %v2397 = vunpack.c.l.b16 %v2269
    %v2398 = vunpack.c.l.b16 %v2270
    %v2399 = vunpack.c.l.b16 %v2271
    %v2400 = vunpack.c.l.b16 %v2272
    %v2401 = vunpack.c.l.b16 %v2273
    %v2402 = vunpack.c.l.b16 %v2274
    %v2403 = vunpack.c.l.b16 %v2275
    %v2404 = vunpack.c.l.b16 %v2276
    %v2405 = vunpack.c.l.b16 %v2277
    %v2406 = vunpack.c.l.b16 %v2278
    %v2407 = vunpack.c.l.b16 %v2279
    %v2408 = vunpack.c.l.b16 %v2280
    %v2409 = vunpack.c.l.b16 %v2281
    %v2410 = vunpack.c.l.b16 %v2282
    %v2411 = vunpack.c.l.b16 %v2283
    %v2412 = vunpack.c.l.b16 %v2284
    %v2413 = vunpack.c.l.b16 %v2285
    %v2414 = vunpack.c.l.b16 %v2286
    %v2415 = vunpack.c.l.b16 %v2287
    %v2416 = vunpack.c.l.b16 %v2288
    %v2417 = vunpack.c.l.b16 %v2289
    %v2418 = vunpack.c.l.b16 %v2290
    %v2419 = vunpack.c.l.b16 %v2291
    %v2420 = vunpack.c.l.b16 %v2292
    %v2421 = vunpack.c.l.b16 %v2293
    %v2422 = vunpack.c.l.b16 %v2294
    %v2423 = vunpack.c.l.b16 %v2295
    %v2424 = vunpack.c.l.b16 %v2296
    %v2425 = vunpack.c.l.b16 %v2297
    %v2426 = vunpack.c.l.b16 %v2298
    %v2427 = vunpack.c.l.b16 %v2299
    %v2428 = vunpack.c.l.b16 %v2300
    %v2429 = vunpack.c.l.b16 %v2301
    %v2430 = vunpack.c.l.b16 %v2302
    %v2431 = vpack.c.b16 %v2368, %v2367
    %v2432 = vpack.c.b16 %v2370, %v2369
    %v2433 = vpack.c.b16 %v2372, %v2371
    %v2434 = vpack.c.b16 %v2374, %v2373
    %v2435 = vpack.c.b16 %v2376, %v2375
    %v2436 = vpack.c.b16 %v2378, %v2377
    %v2437 = vpack.c.b16 %v2380, %v2379
    %v2438 = vpack.c.b16 %v2382, %v2381
    %v2439 = vpack.c.b16 %v2384, %v2383
    %v2440 = vpack.c.b16 %v2386, %v2385
    %v2441 = vpack.c.b16 %v2388, %v2387
    %v2442 = vpack.c.b16 %v2390, %v2389
    %v2443 = vpack.c.b16 %v2392, %v2391
    %v2444 = vpack.c.b16 %v2394, %v2393
    %v2445 = vpack.c.b16 %v2396, %v2395
    %v2446 = vpack.c.b16 %v2398, %v2397
    %v2447 = vpack.c.b16 %v2400, %v2399
    %v2448 = vpack.c.b16 %v2402, %v2401
    %v2449 = vpack.c.b16 %v2404, %v2403
    %v2450 = vpack.c.b16 %v2406, %v2405
    %v2451 = vpack.c.b16 %v2408, %v2407
    %v2452 = vpack.c.b16 %v2410, %v2409
    %v2453 = vpack.c.b16 %v2412, %v2411
    %v2454 = vpack.c.b16 %v2414, %v2413
    %v2455 = vpack.c.b16 %v2416, %v2415
    %v2456 = vpack.c.b16 %v2418, %v2417
    %v2457 = vpack.c.b16 %v2420, %v2419
    %v2458 = vpack.c.b16 %v2422, %v2421
    %v2459 = vpack.c.b16 %v2424, %v2423
    %v2460 = vpack.c.b16 %v2426, %v2425
    %v2461 = vpack.c.b16 %v2428, %v2427
    %v2462 = vpack.c.b16 %v2430, %v2429
    %2463 = vrot.lane.b32.xlu0 %v2431, 16
    %v2464 = vpop.permute.xlu0 %2463
    %2465 = vrot.lane.b32.xlu0 %v2432, 16
    %v2466 = vpop.permute.xlu0 %2465
    %2467 = vrot.lane.b32.xlu0 %v2433, 16
    %v2468 = vpop.permute.xlu0 %2467
    %2469 = vrot.lane.b32.xlu0 %v2434, 16
    %v2470 = vpop.permute.xlu0 %2469
    %2471 = vrot.lane.b32.xlu0 %v2435, 16
    %v2472 = vpop.permute.xlu0 %2471
    %2473 = vrot.lane.b32.xlu0 %v2436, 16
    %v2474 = vpop.permute.xlu0 %2473
    %2475 = vrot.lane.b32.xlu0 %v2437, 16
    %v2476 = vpop.permute.xlu0 %2475
    %2477 = vrot.lane.b32.xlu0 %v2438, 16
    %v2478 = vpop.permute.xlu0 %2477
    %2479 = vrot.lane.b32.xlu0 %v2439, 16
    %v2480 = vpop.permute.xlu0 %2479
    %2481 = vrot.lane.b32.xlu0 %v2440, 16
    %v2482 = vpop.permute.xlu0 %2481
    %2483 = vrot.lane.b32.xlu0 %v2441, 16
    %v2484 = vpop.permute.xlu0 %2483
    %2485 = vrot.lane.b32.xlu0 %v2442, 16
    %v2486 = vpop.permute.xlu0 %2485
    %2487 = vrot.lane.b32.xlu0 %v2443, 16
    %v2488 = vpop.permute.xlu0 %2487
    %2489 = vrot.lane.b32.xlu0 %v2444, 16
    %v2490 = vpop.permute.xlu0 %2489
    %2491 = vrot.lane.b32.xlu0 %v2445, 16
    %v2492 = vpop.permute.xlu0 %2491
    %2493 = vrot.lane.b32.xlu0 %v2446, 16
    %v2494 = vpop.permute.xlu0 %2493
    %2495 = vrot.lane.b32.xlu0 %v2447, 16
    %v2496 = vpop.permute.xlu0 %2495
    %2497 = vrot.lane.b32.xlu0 %v2448, 16
    %v2498 = vpop.permute.xlu0 %2497
    %2499 = vrot.lane.b32.xlu0 %v2449, 16
    %v2500 = vpop.permute.xlu0 %2499
    %2501 = vrot.lane.b32.xlu0 %v2450, 16
    %v2502 = vpop.permute.xlu0 %2501
    %2503 = vrot.lane.b32.xlu0 %v2451, 16
    %v2504 = vpop.permute.xlu0 %2503
    %2505 = vrot.lane.b32.xlu0 %v2452, 16
    %v2506 = vpop.permute.xlu0 %2505
    %2507 = vrot.lane.b32.xlu0 %v2453, 16
    %v2508 = vpop.permute.xlu0 %2507
    %2509 = vrot.lane.b32.xlu0 %v2454, 16
    %v2510 = vpop.permute.xlu0 %2509
    %2511 = vrot.lane.b32.xlu0 %v2455, 16
    %v2512 = vpop.permute.xlu0 %2511
    %2513 = vrot.lane.b32.xlu0 %v2456, 16
    %v2514 = vpop.permute.xlu0 %2513
    %2515 = vrot.lane.b32.xlu0 %v2457, 16
    %v2516 = vpop.permute.xlu0 %2515
    %2517 = vrot.lane.b32.xlu0 %v2458, 16
    %v2518 = vpop.permute.xlu0 %2517
    %2519 = vrot.lane.b32.xlu0 %v2459, 16
    %v2520 = vpop.permute.xlu0 %2519
    %2521 = vrot.lane.b32.xlu0 %v2460, 16
    %v2522 = vpop.permute.xlu0 %2521
    %2523 = vrot.lane.b32.xlu0 %v2461, 16
    %v2524 = vpop.permute.xlu0 %2523
    %2525 = vrot.lane.b32.xlu0 %v2462, 16
    %v2526 = vpop.permute.xlu0 %2525
    %2559 = vst.msk [vmem:[#allocation2 + $0x300] sm:$0xff] %vm1083, %v2464
    %2560 = vst.msk [vmem:[#allocation2 + $0x308] sm:$0xff] %vm1083, %v2466
    %2561 = vst.msk [vmem:[#allocation2 + $0x310] sm:$0xff] %vm1083, %v2468
    %2562 = vst.msk [vmem:[#allocation2 + $0x318] sm:$0xff] %vm1083, %v2470
    %2563 = vst.msk [vmem:[#allocation2 + $0x320] sm:$0xff] %vm1083, %v2472
    %2564 = vst.msk [vmem:[#allocation2 + $0x328] sm:$0xff] %vm1083, %v2474
    %2565 = vst.msk [vmem:[#allocation2 + $0x330] sm:$0xff] %vm1083, %v2476
    %2566 = vst.msk [vmem:[#allocation2 + $0x338] sm:$0xff] %vm1083, %v2478
    %2567 = vst.msk [vmem:[#allocation2 + $0x340] sm:$0xff] %vm1083, %v2480
    %2568 = vst.msk [vmem:[#allocation2 + $0x348] sm:$0xff] %vm1083, %v2482
    %2569 = vst.msk [vmem:[#allocation2 + $0x350] sm:$0xff] %vm1083, %v2484
    %2570 = vst.msk [vmem:[#allocation2 + $0x358] sm:$0xff] %vm1083, %v2486
    %2571 = vst.msk [vmem:[#allocation2 + $0x360] sm:$0xff] %vm1083, %v2488
    %2572 = vst.msk [vmem:[#allocation2 + $0x368] sm:$0xff] %vm1083, %v2490
    %2573 = vst.msk [vmem:[#allocation2 + $0x370] sm:$0xff] %vm1083, %v2492
    %2574 = vst.msk [vmem:[#allocation2 + $0x378] sm:$0xff] %vm1083, %v2494
    %2575 = vst.msk [vmem:[#allocation2 + $0x380] sm:$0xff] %vm1083, %v2496
    %2576 = vst.msk [vmem:[#allocation2 + $0x388] sm:$0xff] %vm1083, %v2498
    %2577 = vst.msk [vmem:[#allocation2 + $0x390] sm:$0xff] %vm1083, %v2500
    %2578 = vst.msk [vmem:[#allocation2 + $0x398] sm:$0xff] %vm1083, %v2502
    %2579 = vst.msk [vmem:[#allocation2 + $0x3a0] sm:$0xff] %vm1083, %v2504
    %2580 = vst.msk [vmem:[#allocation2 + $0x3a8] sm:$0xff] %vm1083, %v2506
    %2581 = vst.msk [vmem:[#allocation2 + $0x3b0] sm:$0xff] %vm1083, %v2508
    %2582 = vst.msk [vmem:[#allocation2 + $0x3b8] sm:$0xff] %vm1083, %v2510
    %2583 = vst.msk [vmem:[#allocation2 + $0x3c0] sm:$0xff] %vm1083, %v2512
    %2584 = vst.msk [vmem:[#allocation2 + $0x3c8] sm:$0xff] %vm1083, %v2514
    %2585 = vst.msk [vmem:[#allocation2 + $0x3d0] sm:$0xff] %vm1083, %v2516
    %2586 = vst.msk [vmem:[#allocation2 + $0x3d8] sm:$0xff] %vm1083, %v2518
    %2587 = vst.msk [vmem:[#allocation2 + $0x3e0] sm:$0xff] %vm1083, %v2520
    %2588 = vst.msk [vmem:[#allocation2 + $0x3e8] sm:$0xff] %vm1083, %v2522
    %2589 = vst.msk [vmem:[#allocation2 + $0x3f0] sm:$0xff] %vm1083, %v2524
    %2590 = vst.msk [vmem:[#allocation2 + $0x3f8] sm:$0xff] %vm1083, %v2526
    %v2591 = vld [vmem:[#allocation2] sm:$0xff]
    %v2592 = vld [vmem:[#allocation2 + $0x8] sm:$0xff]
    %v2593 = vld [vmem:[#allocation2 + $0x10] sm:$0xff]
    %v2594 = vld [vmem:[#allocation2 + $0x18] sm:$0xff]
    %v2595 = vld [vmem:[#allocation2 + $0x20] sm:$0xff]
    %v2596 = vld [vmem:[#allocation2 + $0x28] sm:$0xff]
    %v2597 = vld [vmem:[#allocation2 + $0x30] sm:$0xff]
    %v2598 = vld [vmem:[#allocation2 + $0x38] sm:$0xff]
    %v2599 = vld [vmem:[#allocation2 + $0x40] sm:$0xff]
    %v2600 = vld [vmem:[#allocation2 + $0x48] sm:$0xff]
    %v2601 = vld [vmem:[#allocation2 + $0x50] sm:$0xff]
    %v2602 = vld [vmem:[#allocation2 + $0x58] sm:$0xff]
    %v2603 = vld [vmem:[#allocation2 + $0x60] sm:$0xff]
    %v2604 = vld [vmem:[#allocation2 + $0x68] sm:$0xff]
    %v2605 = vld [vmem:[#allocation2 + $0x70] sm:$0xff]
    %v2606 = vld [vmem:[#allocation2 + $0x78] sm:$0xff]
    %v2607 = vld [vmem:[#allocation2 + $0x80] sm:$0xff]
    %v2608 = vld [vmem:[#allocation2 + $0x88] sm:$0xff]
    %v2609 = vld [vmem:[#allocation2 + $0x90] sm:$0xff]
    %v2610 = vld [vmem:[#allocation2 + $0x98] sm:$0xff]
    %v2611 = vld [vmem:[#allocation2 + $0xa0] sm:$0xff]
    %v2612 = vld [vmem:[#allocation2 + $0xa8] sm:$0xff]
    %v2613 = vld [vmem:[#allocation2 + $0xb0] sm:$0xff]
    %v2614 = vld [vmem:[#allocation2 + $0xb8] sm:$0xff]
    %v2615 = vld [vmem:[#allocation2 + $0xc0] sm:$0xff]
    %v2616 = vld [vmem:[#allocation2 + $0xc8] sm:$0xff]
    %v2617 = vld [vmem:[#allocation2 + $0xd0] sm:$0xff]
    %v2618 = vld [vmem:[#allocation2 + $0xd8] sm:$0xff]
    %v2619 = vld [vmem:[#allocation2 + $0xe0] sm:$0xff]
    %v2620 = vld [vmem:[#allocation2 + $0xe8] sm:$0xff]
    %v2621 = vld [vmem:[#allocation2 + $0xf0] sm:$0xff]
    %v2622 = vld [vmem:[#allocation2 + $0xf8] sm:$0xff]
    %v2623 = vld [vmem:[#allocation2 + $0x100] sm:$0xff]
    %v2624 = vld [vmem:[#allocation2 + $0x108] sm:$0xff]
    %v2625 = vld [vmem:[#allocation2 + $0x110] sm:$0xff]
    %v2626 = vld [vmem:[#allocation2 + $0x118] sm:$0xff]
    %v2627 = vld [vmem:[#allocation2 + $0x120] sm:$0xff]
    %v2628 = vld [vmem:[#allocation2 + $0x128] sm:$0xff]
    %v2629 = vld [vmem:[#allocation2 + $0x130] sm:$0xff]
    %v2630 = vld [vmem:[#allocation2 + $0x138] sm:$0xff]
    %v2631 = vld [vmem:[#allocation2 + $0x140] sm:$0xff]
    %v2632 = vld [vmem:[#allocation2 + $0x148] sm:$0xff]
    %v2633 = vld [vmem:[#allocation2 + $0x150] sm:$0xff]
    %v2634 = vld [vmem:[#allocation2 + $0x158] sm:$0xff]
    %v2635 = vld [vmem:[#allocation2 + $0x160] sm:$0xff]
    %v2636 = vld [vmem:[#allocation2 + $0x168] sm:$0xff]
    %v2637 = vld [vmem:[#allocation2 + $0x170] sm:$0xff]
    %v2638 = vld [vmem:[#allocation2 + $0x178] sm:$0xff]
    %v2639 = vld [vmem:[#allocation2 + $0x180] sm:$0xff]
    %v2640 = vld [vmem:[#allocation2 + $0x188] sm:$0xff]
    %v2641 = vld [vmem:[#allocation2 + $0x190] sm:$0xff]
    %v2642 = vld [vmem:[#allocation2 + $0x198] sm:$0xff]
    %v2643 = vld [vmem:[#allocation2 + $0x1a0] sm:$0xff]
    %v2644 = vld [vmem:[#allocation2 + $0x1a8] sm:$0xff]
    %v2645 = vld [vmem:[#allocation2 + $0x1b0] sm:$0xff]
    %v2646 = vld [vmem:[#allocation2 + $0x1b8] sm:$0xff]
    %v2647 = vld [vmem:[#allocation2 + $0x1c0] sm:$0xff]
    %v2648 = vld [vmem:[#allocation2 + $0x1c8] sm:$0xff]
    %v2649 = vld [vmem:[#allocation2 + $0x1d0] sm:$0xff]
    %v2650 = vld [vmem:[#allocation2 + $0x1d8] sm:$0xff]
    %v2651 = vld [vmem:[#allocation2 + $0x1e0] sm:$0xff]
    %v2652 = vld [vmem:[#allocation2 + $0x1e8] sm:$0xff]
    %v2653 = vld [vmem:[#allocation2 + $0x1f0] sm:$0xff]
    %v2654 = vld [vmem:[#allocation2 + $0x1f8] sm:$0xff]
    %v2655 = vld [vmem:[#allocation2 + $0x200] sm:$0xff]
    %v2656 = vld [vmem:[#allocation2 + $0x208] sm:$0xff]
    %v2657 = vld [vmem:[#allocation2 + $0x210] sm:$0xff]
    %v2658 = vld [vmem:[#allocation2 + $0x218] sm:$0xff]
    %v2659 = vld [vmem:[#allocation2 + $0x220] sm:$0xff]
    %v2660 = vld [vmem:[#allocation2 + $0x228] sm:$0xff]
    %v2661 = vld [vmem:[#allocation2 + $0x230] sm:$0xff]
    %v2662 = vld [vmem:[#allocation2 + $0x238] sm:$0xff]
    %v2663 = vld [vmem:[#allocation2 + $0x240] sm:$0xff]
    %v2664 = vld [vmem:[#allocation2 + $0x248] sm:$0xff]
    %v2665 = vld [vmem:[#allocation2 + $0x250] sm:$0xff]
    %v2666 = vld [vmem:[#allocation2 + $0x258] sm:$0xff]
    %v2667 = vld [vmem:[#allocation2 + $0x260] sm:$0xff]
    %v2668 = vld [vmem:[#allocation2 + $0x268] sm:$0xff]
    %v2669 = vld [vmem:[#allocation2 + $0x270] sm:$0xff]
    %v2670 = vld [vmem:[#allocation2 + $0x278] sm:$0xff]
    %v2671 = vld [vmem:[#allocation2 + $0x280] sm:$0xff]
    %v2672 = vld [vmem:[#allocation2 + $0x288] sm:$0xff]
    %v2673 = vld [vmem:[#allocation2 + $0x290] sm:$0xff]
    %v2674 = vld [vmem:[#allocation2 + $0x298] sm:$0xff]
    %v2675 = vld [vmem:[#allocation2 + $0x2a0] sm:$0xff]
    %v2676 = vld [vmem:[#allocation2 + $0x2a8] sm:$0xff]
    %v2677 = vld [vmem:[#allocation2 + $0x2b0] sm:$0xff]
    %v2678 = vld [vmem:[#allocation2 + $0x2b8] sm:$0xff]
    %v2679 = vld [vmem:[#allocation2 + $0x2c0] sm:$0xff]
    %v2680 = vld [vmem:[#allocation2 + $0x2c8] sm:$0xff]
    %v2681 = vld [vmem:[#allocation2 + $0x2d0] sm:$0xff]
    %v2682 = vld [vmem:[#allocation2 + $0x2d8] sm:$0xff]
    %v2683 = vld [vmem:[#allocation2 + $0x2e0] sm:$0xff]
    %v2684 = vld [vmem:[#allocation2 + $0x2e8] sm:$0xff]
    %v2685 = vld [vmem:[#allocation2 + $0x2f0] sm:$0xff]
    %v2686 = vld [vmem:[#allocation2 + $0x2f8] sm:$0xff]
    %v2687 = vld [vmem:[#allocation2 + $0x300] sm:$0xff]
    %v2688 = vld [vmem:[#allocation2 + $0x308] sm:$0xff]
    %v2689 = vld [vmem:[#allocation2 + $0x310] sm:$0xff]
    %v2690 = vld [vmem:[#allocation2 + $0x318] sm:$0xff]
    %v2691 = vld [vmem:[#allocation2 + $0x320] sm:$0xff]
    %v2692 = vld [vmem:[#allocation2 + $0x328] sm:$0xff]
    %v2693 = vld [vmem:[#allocation2 + $0x330] sm:$0xff]
    %v2694 = vld [vmem:[#allocation2 + $0x338] sm:$0xff]
    %v2695 = vld [vmem:[#allocation2 + $0x340] sm:$0xff]
    %v2696 = vld [vmem:[#allocation2 + $0x348] sm:$0xff]
    %v2697 = vld [vmem:[#allocation2 + $0x350] sm:$0xff]
    %v2698 = vld [vmem:[#allocation2 + $0x358] sm:$0xff]
    %v2699 = vld [vmem:[#allocation2 + $0x360] sm:$0xff]
    %v2700 = vld [vmem:[#allocation2 + $0x368] sm:$0xff]
    %v2701 = vld [vmem:[#allocation2 + $0x370] sm:$0xff]
    %v2702 = vld [vmem:[#allocation2 + $0x378] sm:$0xff]
    %v2703 = vld [vmem:[#allocation2 + $0x380] sm:$0xff]
    %v2704 = vld [vmem:[#allocation2 + $0x388] sm:$0xff]
    %v2705 = vld [vmem:[#allocation2 + $0x390] sm:$0xff]
    %v2706 = vld [vmem:[#allocation2 + $0x398] sm:$0xff]
    %v2707 = vld [vmem:[#allocation2 + $0x3a0] sm:$0xff]
    %v2708 = vld [vmem:[#allocation2 + $0x3a8] sm:$0xff]
    %v2709 = vld [vmem:[#allocation2 + $0x3b0] sm:$0xff]
    %v2710 = vld [vmem:[#allocation2 + $0x3b8] sm:$0xff]
    %v2711 = vld [vmem:[#allocation2 + $0x3c0] sm:$0xff]
    %v2712 = vld [vmem:[#allocation2 + $0x3c8] sm:$0xff]
    %v2713 = vld [vmem:[#allocation2 + $0x3d0] sm:$0xff]
    %v2714 = vld [vmem:[#allocation2 + $0x3d8] sm:$0xff]
    %v2715 = vld [vmem:[#allocation2 + $0x3e0] sm:$0xff]
    %v2716 = vld [vmem:[#allocation2 + $0x3e8] sm:$0xff]
    %v2717 = vld [vmem:[#allocation2 + $0x3f0] sm:$0xff]
    %v2718 = vld [vmem:[#allocation2 + $0x3f8] sm:$0xff]
    %v2719 = vld [vmem:[#allocation8] sm:$0xf]
    %v2720 = vld [vmem:[#allocation8 + $0x4] sm:$0xf]
    %v2721 = vld [vmem:[#allocation8 + $0x8] sm:$0xf]
    %v2722 = vld [vmem:[#allocation8 + $0xc] sm:$0xf]
    %v2723 = vld [vmem:[#allocation9] sm:$0x1]
    %v2725 = vlaneseq
    %v2726 = vshrl.u32 %v2725, 7
    %v2727 = vsub.s32 0, %v2726
    %v2728 = vrot.slane %v2723, %v2727
    %v2734 = vunpack.c.l.b16 %v2719
    %v2735 = vunpack.c.l.b16 %v2720
    %v2736 = vunpack.c.l.b16 %v2721
    %v2737 = vunpack.c.l.b16 %v2722
    %v2738 = vpack.c.b16 %v2735, %v2734
    %v2739 = vpack.c.b16 %v2737, %v2736
    %v2743 = vsel %vm312, %v2591, 0
    %v2746 = vsel %vm312, %v2592, 0
    %v2749 = vsel %vm312, %v2593, 0
    %v2752 = vsel %vm312, %v2594, 0
    %v2755 = vsel %vm312, %v2595, 0
    %v2758 = vsel %vm312, %v2596, 0
    %v2761 = vsel %vm312, %v2597, 0
    %v2764 = vsel %vm312, %v2598, 0
    %v2767 = vsel %vm312, %v2599, 0
    %v2770 = vsel %vm312, %v2600, 0
    %v2773 = vsel %vm312, %v2601, 0
    %v2776 = vsel %vm312, %v2602, 0
    %v2779 = vsel %vm312, %v2603, 0
    %v2782 = vsel %vm312, %v2604, 0
    %v2785 = vsel %vm312, %v2605, 0
    %v2788 = vsel %vm312, %v2606, 0
    %v2791 = vsel %vm312, %v2607, 0
    %v2794 = vsel %vm312, %v2608, 0
    %v2797 = vsel %vm312, %v2609, 0
    %v2800 = vsel %vm312, %v2610, 0
    %v2803 = vsel %vm312, %v2611, 0
    %v2806 = vsel %vm312, %v2612, 0
    %v2809 = vsel %vm312, %v2613, 0
    %v2812 = vsel %vm312, %v2614, 0
    %v2815 = vsel %vm312, %v2615, 0
    %v2818 = vsel %vm312, %v2616, 0
    %v2821 = vsel %vm312, %v2617, 0
    %v2824 = vsel %vm312, %v2618, 0
    %v2827 = vsel %vm312, %v2619, 0
    %v2830 = vsel %vm312, %v2620, 0
    %v2833 = vsel %vm312, %v2621, 0
    %v2836 = vsel %vm312, %v2622, 0
    %v2839 = vsel %vm312, %v2623, 0
    %v2842 = vsel %vm312, %v2624, 0
    %v2845 = vsel %vm312, %v2625, 0
    %v2848 = vsel %vm312, %v2626, 0
    %v2851 = vsel %vm312, %v2627, 0
    %v2854 = vsel %vm312, %v2628, 0
    %v2857 = vsel %vm312, %v2629, 0
    %v2860 = vsel %vm312, %v2630, 0
    %v2863 = vsel %vm312, %v2631, 0
    %v2866 = vsel %vm312, %v2632, 0
    %v2869 = vsel %vm312, %v2633, 0
    %v2872 = vsel %vm312, %v2634, 0
    %v2875 = vsel %vm312, %v2635, 0
    %v2878 = vsel %vm312, %v2636, 0
    %v2881 = vsel %vm312, %v2637, 0
    %v2884 = vsel %vm312, %v2638, 0
    %v2887 = vsel %vm312, %v2639, 0
    %v2890 = vsel %vm312, %v2640, 0
    %v2893 = vsel %vm312, %v2641, 0
    %v2896 = vsel %vm312, %v2642, 0
    %v2899 = vsel %vm312, %v2643, 0
    %v2902 = vsel %vm312, %v2644, 0
    %v2905 = vsel %vm312, %v2645, 0
    %v2908 = vsel %vm312, %v2646, 0
    %v2911 = vsel %vm312, %v2647, 0
    %v2914 = vsel %vm312, %v2648, 0
    %v2917 = vsel %vm312, %v2649, 0
    %v2920 = vsel %vm312, %v2650, 0
    %v2923 = vsel %vm312, %v2651, 0
    %v2926 = vsel %vm312, %v2652, 0
    %v2929 = vsel %vm312, %v2653, 0
    %v2932 = vsel %vm312, %v2654, 0
    %v2935 = vsel %vm312, %v2655, 0
    %v2938 = vsel %vm312, %v2656, 0
    %v2941 = vsel %vm312, %v2657, 0
    %v2944 = vsel %vm312, %v2658, 0
    %v2947 = vsel %vm312, %v2659, 0
    %v2950 = vsel %vm312, %v2660, 0
    %v2953 = vsel %vm312, %v2661, 0
    %v2956 = vsel %vm312, %v2662, 0
    %v2959 = vsel %vm312, %v2663, 0
    %v2962 = vsel %vm312, %v2664, 0
    %v2965 = vsel %vm312, %v2665, 0
    %v2968 = vsel %vm312, %v2666, 0
    %v2971 = vsel %vm312, %v2667, 0
    %v2974 = vsel %vm312, %v2668, 0
    %v2977 = vsel %vm312, %v2669, 0
    %v2980 = vsel %vm312, %v2670, 0
    %v2983 = vsel %vm312, %v2671, 0
    %v2986 = vsel %vm312, %v2672, 0
    %v2989 = vsel %vm312, %v2673, 0
    %v2992 = vsel %vm312, %v2674, 0
    %v2995 = vsel %vm312, %v2675, 0
    %v2998 = vsel %vm312, %v2676, 0
    %v3001 = vsel %vm312, %v2677, 0
    %v3004 = vsel %vm312, %v2678, 0
    %v3007 = vsel %vm312, %v2679, 0
    %v3010 = vsel %vm312, %v2680, 0
    %v3013 = vsel %vm312, %v2681, 0
    %v3016 = vsel %vm312, %v2682, 0
    %v3019 = vsel %vm312, %v2683, 0
    %v3022 = vsel %vm312, %v2684, 0
    %v3025 = vsel %vm312, %v2685, 0
    %v3028 = vsel %vm312, %v2686, 0
    %v3031 = vsel %vm312, %v2687, 0
    %v3034 = vsel %vm312, %v2688, 0
    %v3037 = vsel %vm312, %v2689, 0
    %v3040 = vsel %vm312, %v2690, 0
    %v3043 = vsel %vm312, %v2691, 0
    %v3046 = vsel %vm312, %v2692, 0
    %v3049 = vsel %vm312, %v2693, 0
    %v3052 = vsel %vm312, %v2694, 0
    %v3055 = vsel %vm312, %v2695, 0
    %v3058 = vsel %vm312, %v2696, 0
    %v3061 = vsel %vm312, %v2697, 0
    %v3064 = vsel %vm312, %v2698, 0
    %v3067 = vsel %vm312, %v2699, 0
    %v3070 = vsel %vm312, %v2700, 0
    %v3073 = vsel %vm312, %v2701, 0
    %v3076 = vsel %vm312, %v2702, 0
    %v3079 = vsel %vm312, %v2703, 0
    %v3082 = vsel %vm312, %v2704, 0
    %v3085 = vsel %vm312, %v2705, 0
    %v3088 = vsel %vm312, %v2706, 0
    %v3091 = vsel %vm312, %v2707, 0
    %v3094 = vsel %vm312, %v2708, 0
    %v3097 = vsel %vm312, %v2709, 0
    %v3100 = vsel %vm312, %v2710, 0
    %v3103 = vsel %vm312, %v2711, 0
    %v3106 = vsel %vm312, %v2712, 0
    %v3109 = vsel %vm312, %v2713, 0
    %v3112 = vsel %vm312, %v2714, 0
    %v3115 = vsel %vm312, %v2715, 0
    %v3118 = vsel %vm312, %v2716, 0
    %v3121 = vsel %vm312, %v2717, 0
    %v3124 = vsel %vm312, %v2718, 0
    %3126 = vmatprep.subr.bf16.mxu0 0
    %3127 = vmatpush1.bf16.msra.mxu0 %v2738
    %3128 = vmatprep.subr.bf16.mxu0 0
    %3129 = vmatpush1.bf16.msra.mxu0 %v2739
    %3130 = vmatprep.subr.bf16.mxu0 0
    %3131 = vmatpush1.bf16.msra.mxu0 0
    %3132 = vmatprep.subr.bf16.mxu0 0
    %3133 = vmatpush1.bf16.msra.mxu0 0
    %3134 = vmatprep.subr.bf16.mxu0 0
    %3135 = vmatpush1.bf16.msra.mxu0 0
    %3136 = vmatprep.subr.bf16.mxu0 0
    %3137 = vmatpush1.bf16.msra.mxu0 0
    %3138 = vmatprep.subr.bf16.mxu0 0
    %3139 = vmatpush1.bf16.msra.mxu0 0
    %3140 = vmatprep.subr.bf16.mxu0 0
    %3141 = vmatpush1.bf16.msra.mxu0 0
    %3142 = vmatprep.subr.bf16.mxu0 0
    %3143 = vmatpush1.bf16.msra.mxu0 0
    %3144 = vmatprep.subr.bf16.mxu0 0
    %3145 = vmatpush1.bf16.msra.mxu0 0
    %3146 = vmatprep.subr.bf16.mxu0 0
    %3147 = vmatpush1.bf16.msra.mxu0 0
    %3148 = vmatprep.subr.bf16.mxu0 0
    %3149 = vmatpush1.bf16.msra.mxu0 0
    %3150 = vmatprep.subr.bf16.mxu0 0
    %3151 = vmatpush1.bf16.msra.mxu0 0
    %3152 = vmatprep.subr.bf16.mxu0 0
    %3153 = vmatpush1.bf16.msra.mxu0 0
    %3154 = vmatprep.subr.bf16.mxu0 0
    %3155 = vmatpush1.bf16.msra.mxu0 0
    %3156 = vmatprep.subr.bf16.mxu0 0
    %3157 = vmatpush1.bf16.msra.mxu0 0
    %3158 = vmatprep.mubr.bf16.mxu0 0
    %3159 = vmatmul.mubr.bf16.gmra.mrb[0].mxu0 %v2743
    %v3160 = vpop.f32.mrb[0].mxu0
    %v3161 = vadd.f32 %v2728, %v3160
    %v3162 = vpop.f32.mrb[0].mxu0
    %v3163 = vpop.f32.mrb[0].mxu0
    %v3164 = vadd.f32 %v2728, %v3163
    %v3165 = vpop.f32.mrb[0].mxu0
    %3166 = vmatprep.mubr.bf16.mxu0 0
    %3167 = vmatmul.mubr.bf16.gmra.mrb[0].mxu0 %v2746
    %v3168 = vpop.f32.mrb[0].mxu0
    %v3169 = vadd.f32 %v2728, %v3168
    %v3170 = vpop.f32.mrb[0].mxu0
    %v3171 = vpop.f32.mrb[0].mxu0
    %v3172 = vadd.f32 %v2728, %v3171
    %v3173 = vpop.f32.mrb[0].mxu0
    %3174 = vmatprep.mubr.bf16.mxu0 0
    %3175 = vmatmul.mubr.bf16.gmra.mrb[0].mxu0 %v2749
    %v3176 = vpop.f32.mrb[0].mxu0
    %v3177 = vadd.f32 %v2728, %v3176
    %v3178 = vpop.f32.mrb[0].mxu0
    %v3179 = vpop.f32.mrb[0].mxu0
    %v3180 = vadd.f32 %v2728, %v3179
    %v3181 = vpop.f32.mrb[0].mxu0
    %3182 = vmatprep.mubr.bf16.mxu0 0
    %3183 = vmatmul.mubr.bf16.gmra.mrb[0].mxu0 %v2752
    %v3184 = vpop.f32.mrb[0].mxu0
    %v3185 = vadd.f32 %v2728, %v3184
    %v3186 = vpop.f32.mrb[0].mxu0
    %v3187 = vpop.f32.mrb[0].mxu0
    %v3188 = vadd.f32 %v2728, %v3187
    %v3189 = vpop.f32.mrb[0].mxu0
    %3190 = vmatprep.mubr.bf16.mxu0 0
    %3191 = vmatmul.mubr.bf16.gmra.mrb[0].mxu0 %v2755
    %v3192 = vpop.f32.mrb[0].mxu0
    %v3193 = vadd.f32 %v2728, %v3192
    %v3194 = vpop.f32.mrb[0].mxu0
    %v3195 = vpop.f32.mrb[0].mxu0
    %v3196 = vadd.f32 %v2728, %v3195
    %v3197 = vpop.f32.mrb[0].mxu0
    %3198 = vmatprep.mubr.bf16.mxu0 0
    %3199 = vmatmul.mubr.bf16.gmra.mrb[0].mxu0 %v2758
    %v3200 = vpop.f32.mrb[0].mxu0
    %v3201 = vadd.f32 %v2728, %v3200
    %v3202 = vpop.f32.mrb[0].mxu0
    %v3203 = vpop.f32.mrb[0].mxu0
    %v3204 = vadd.f32 %v2728, %v3203
    %v3205 = vpop.f32.mrb[0].mxu0
    %3206 = vmatprep.mubr.bf16.mxu0 0
    %3207 = vmatmul.mubr.bf16.gmra.mrb[0].mxu0 %v2761
    %v3208 = vpop.f32.mrb[0].mxu0
    %v3209 = vadd.f32 %v2728, %v3208
    %v3210 = vpop.f32.mrb[0].mxu0
    %v3211 = vpop.f32.mrb[0].mxu0
    %v3212 = vadd.f32 %v2728, %v3211
    %v3213 = vpop.f32.mrb[0].mxu0
    %3214 = vmatprep.mubr.bf16.mxu0 0
    %3215 = vmatmul.mubr.bf16.gmra.mrb[0].mxu0 %v2764
    %v3216 = vpop.f32.mrb[0].mxu0
    %v3217 = vadd.f32 %v2728, %v3216
    %v3218 = vpop.f32.mrb[0].mxu0
    %v3219 = vpop.f32.mrb[0].mxu0
    %v3220 = vadd.f32 %v2728, %v3219
    %v3221 = vpop.f32.mrb[0].mxu0
    %3222 = vmatprep.mubr.bf16.mxu0 0
    %3223 = vmatmul.mubr.bf16.gmra.mrb[0].mxu0 %v2767
    %v3224 = vpop.f32.mrb[0].mxu0
    %v3225 = vadd.f32 %v2728, %v3224
    %v3226 = vpop.f32.mrb[0].mxu0
    %v3227 = vpop.f32.mrb[0].mxu0
    %v3228 = vadd.f32 %v2728, %v3227
    %v3229 = vpop.f32.mrb[0].mxu0
    %3230 = vmatprep.mubr.bf16.mxu0 0
    %3231 = vmatmul.mubr.bf16.gmra.mrb[0].mxu0 %v2770
    %v3232 = vpop.f32.mrb[0].mxu0
    %v3233 = vadd.f32 %v2728, %v3232
    %v3234 = vpop.f32.mrb[0].mxu0
    %v3235 = vpop.f32.mrb[0].mxu0
    %v3236 = vadd.f32 %v2728, %v3235
    %v3237 = vpop.f32.mrb[0].mxu0
    %3238 = vmatprep.mubr.bf16.mxu0 0
    %3239 = vmatmul.mubr.bf16.gmra.mrb[0].mxu0 %v2773
    %v3240 = vpop.f32.mrb[0].mxu0
    %v3241 = vadd.f32 %v2728, %v3240
    %v3242 = vpop.f32.mrb[0].mxu0
    %v3243 = vpop.f32.mrb[0].mxu0
    %v3244 = vadd.f32 %v2728, %v3243
    %v3245 = vpop.f32.mrb[0].mxu0
    %3246 = vmatprep.mubr.bf16.mxu0 0
    %3247 = vmatmul.mubr.bf16.gmra.mrb[0].mxu0 %v2776
    %v3248 = vpop.f32.mrb[0].mxu0
    %v3249 = vadd.f32 %v2728, %v3248
    %v3250 = vpop.f32.mrb[0].mxu0
    %v3251 = vpop.f32.mrb[0].mxu0
    %v3252 = vadd.f32 %v2728, %v3251
    %v3253 = vpop.f32.mrb[0].mxu0
    %3254 = vmatprep.mubr.bf16.mxu0 0
    %3255 = vmatmul.mubr.bf16.gmra.mrb[0].mxu0 %v2779
    %v3256 = vpop.f32.mrb[0].mxu0
    %v3257 = vadd.f32 %v2728, %v3256
    %v3258 = vpop.f32.mrb[0].mxu0
    %v3259 = vpop.f32.mrb[0].mxu0
    %v3260 = vadd.f32 %v2728, %v3259
    %v3261 = vpop.f32.mrb[0].mxu0
    %3262 = vmatprep.mubr.bf16.mxu0 0
    %3263 = vmatmul.mubr.bf16.gmra.mrb[0].mxu0 %v2782
    %v3264 = vpop.f32.mrb[0].mxu0
    %v3265 = vadd.f32 %v2728, %v3264
    %v3266 = vpop.f32.mrb[0].mxu0
    %v3267 = vpop.f32.mrb[0].mxu0
    %v3268 = vadd.f32 %v2728, %v3267
    %v3269 = vpop.f32.mrb[0].mxu0
    %3270 = vmatprep.mubr.bf16.mxu0 0
    %3271 = vmatmul.mubr.bf16.gmra.mrb[0].mxu0 %v2785
    %v3272 = vpop.f32.mrb[0].mxu0
    %v3273 = vadd.f32 %v2728, %v3272
    %v3274 = vpop.f32.mrb[0].mxu0
    %v3275 = vpop.f32.mrb[0].mxu0
    %v3276 = vadd.f32 %v2728, %v3275
    %v3277 = vpop.f32.mrb[0].mxu0
    %3278 = vmatprep.mubr.bf16.mxu0 0
    %3279 = vmatmul.mubr.bf16.gmra.mrb[0].mxu0 %v2788
    %v3280 = vpop.f32.mrb[0].mxu0
    %v3281 = vadd.f32 %v2728, %v3280
    %v3282 = vpop.f32.mrb[0].mxu0
    %v3283 = vpop.f32.mrb[0].mxu0
    %v3284 = vadd.f32 %v2728, %v3283
    %v3285 = vpop.f32.mrb[0].mxu0
    %3286 = vmatprep.mubr.bf16.mxu0 0
    %3287 = vmatmul.mubr.bf16.gmra.mrb[0].mxu0 %v2791
    %v3288 = vpop.f32.mrb[0].mxu0
    %v3289 = vadd.f32 %v2728, %v3288
    %v3290 = vpop.f32.mrb[0].mxu0
    %v3291 = vpop.f32.mrb[0].mxu0
    %v3292 = vadd.f32 %v2728, %v3291
    %v3293 = vpop.f32.mrb[0].mxu0
    %3294 = vmatprep.mubr.bf16.mxu0 0
    %3295 = vmatmul.mubr.bf16.gmra.mrb[0].mxu0 %v2794
    %v3296 = vpop.f32.mrb[0].mxu0
    %v3297 = vadd.f32 %v2728, %v3296
    %v3298 = vpop.f32.mrb[0].mxu0
    %v3299 = vpop.f32.mrb[0].mxu0
    %v3300 = vadd.f32 %v2728, %v3299
    %v3301 = vpop.f32.mrb[0].mxu0
    %3302 = vmatprep.mubr.bf16.mxu0 0
    %3303 = vmatmul.mubr.bf16.gmra.mrb[0].mxu0 %v2797
    %v3304 = vpop.f32.mrb[0].mxu0
    %v3305 = vadd.f32 %v2728, %v3304
    %v3306 = vpop.f32.mrb[0].mxu0
    %v3307 = vpop.f32.mrb[0].mxu0
    %v3308 = vadd.f32 %v2728, %v3307
    %v3309 = vpop.f32.mrb[0].mxu0
    %3310 = vmatprep.mubr.bf16.mxu0 0
    %3311 = vmatmul.mubr.bf16.gmra.mrb[0].mxu0 %v2800
    %v3312 = vpop.f32.mrb[0].mxu0
    %v3313 = vadd.f32 %v2728, %v3312
    %v3314 = vpop.f32.mrb[0].mxu0
    %v3315 = vpop.f32.mrb[0].mxu0
    %v3316 = vadd.f32 %v2728, %v3315
    %v3317 = vpop.f32.mrb[0].mxu0
    %3318 = vmatprep.mubr.bf16.mxu0 0
    %3319 = vmatmul.mubr.bf16.gmra.mrb[0].mxu0 %v2803
    %v3320 = vpop.f32.mrb[0].mxu0
    %v3321 = vadd.f32 %v2728, %v3320
    %v3322 = vpop.f32.mrb[0].mxu0
    %v3323 = vpop.f32.mrb[0].mxu0
    %v3324 = vadd.f32 %v2728, %v3323
    %v3325 = vpop.f32.mrb[0].mxu0
    %3326 = vmatprep.mubr.bf16.mxu0 0
    %3327 = vmatmul.mubr.bf16.gmra.mrb[0].mxu0 %v2806
    %v3328 = vpop.f32.mrb[0].mxu0
    %v3329 = vadd.f32 %v2728, %v3328
    %v3330 = vpop.f32.mrb[0].mxu0
    %v3331 = vpop.f32.mrb[0].mxu0
    %v3332 = vadd.f32 %v2728, %v3331
    %v3333 = vpop.f32.mrb[0].mxu0
    %3334 = vmatprep.mubr.bf16.mxu0 0
    %3335 = vmatmul.mubr.bf16.gmra.mrb[0].mxu0 %v2809
    %v3336 = vpop.f32.mrb[0].mxu0
    %v3337 = vadd.f32 %v2728, %v3336
    %v3338 = vpop.f32.mrb[0].mxu0
    %v3339 = vpop.f32.mrb[0].mxu0
    %v3340 = vadd.f32 %v2728, %v3339
    %v3341 = vpop.f32.mrb[0].mxu0
    %3342 = vmatprep.mubr.bf16.mxu0 0
    %3343 = vmatmul.mubr.bf16.gmra.mrb[0].mxu0 %v2812
    %v3344 = vpop.f32.mrb[0].mxu0
    %v3345 = vadd.f32 %v2728, %v3344
    %v3346 = vpop.f32.mrb[0].mxu0
    %v3347 = vpop.f32.mrb[0].mxu0
    %v3348 = vadd.f32 %v2728, %v3347
    %v3349 = vpop.f32.mrb[0].mxu0
    %3350 = vmatprep.mubr.bf16.mxu0 0
    %3351 = vmatmul.mubr.bf16.gmra.mrb[0].mxu0 %v2815
    %v3352 = vpop.f32.mrb[0].mxu0
    %v3353 = vadd.f32 %v2728, %v3352
    %v3354 = vpop.f32.mrb[0].mxu0
    %v3355 = vpop.f32.mrb[0].mxu0
    %v3356 = vadd.f32 %v2728, %v3355
    %v3357 = vpop.f32.mrb[0].mxu0
    %3358 = vmatprep.mubr.bf16.mxu0 0
    %3359 = vmatmul.mubr.bf16.gmra.mrb[0].mxu0 %v2818
    %v3360 = vpop.f32.mrb[0].mxu0
    %v3361 = vadd.f32 %v2728, %v3360
    %v3362 = vpop.f32.mrb[0].mxu0
    %v3363 = vpop.f32.mrb[0].mxu0
    %v3364 = vadd.f32 %v2728, %v3363
    %v3365 = vpop.f32.mrb[0].mxu0
    %3366 = vmatprep.mubr.bf16.mxu0 0
    %3367 = vmatmul.mubr.bf16.gmra.mrb[0].mxu0 %v2821
    %v3368 = vpop.f32.mrb[0].mxu0
    %v3369 = vadd.f32 %v2728, %v3368
    %v3370 = vpop.f32.mrb[0].mxu0
    %v3371 = vpop.f32.mrb[0].mxu0
    %v3372 = vadd.f32 %v2728, %v3371
    %v3373 = vpop.f32.mrb[0].mxu0
    %3374 = vmatprep.mubr.bf16.mxu0 0
    %3375 = vmatmul.mubr.bf16.gmra.mrb[0].mxu0 %v2824
    %v3376 = vpop.f32.mrb[0].mxu0
    %v3377 = vadd.f32 %v2728, %v3376
    %v3378 = vpop.f32.mrb[0].mxu0
    %v3379 = vpop.f32.mrb[0].mxu0
    %v3380 = vadd.f32 %v2728, %v3379
    %v3381 = vpop.f32.mrb[0].mxu0
    %3382 = vmatprep.mubr.bf16.mxu0 0
    %3383 = vmatmul.mubr.bf16.gmra.mrb[0].mxu0 %v2827
    %v3384 = vpop.f32.mrb[0].mxu0
    %v3385 = vadd.f32 %v2728, %v3384
    %v3386 = vpop.f32.mrb[0].mxu0
    %v3387 = vpop.f32.mrb[0].mxu0
    %v3388 = vadd.f32 %v2728, %v3387
    %v3389 = vpop.f32.mrb[0].mxu0
    %3390 = vmatprep.mubr.bf16.mxu0 0
    %3391 = vmatmul.mubr.bf16.gmra.mrb[0].mxu0 %v2830
    %v3392 = vpop.f32.mrb[0].mxu0
    %v3393 = vadd.f32 %v2728, %v3392
    %v3394 = vpop.f32.mrb[0].mxu0
    %v3395 = vpop.f32.mrb[0].mxu0
    %v3396 = vadd.f32 %v2728, %v3395
    %v3397 = vpop.f32.mrb[0].mxu0
    %3398 = vmatprep.mubr.bf16.mxu0 0
    %3399 = vmatmul.mubr.bf16.gmra.mrb[0].mxu0 %v2833
    %v3400 = vpop.f32.mrb[0].mxu0
    %v3401 = vadd.f32 %v2728, %v3400
    %v3402 = vpop.f32.mrb[0].mxu0
    %v3403 = vpop.f32.mrb[0].mxu0
    %v3404 = vadd.f32 %v2728, %v3403
    %v3405 = vpop.f32.mrb[0].mxu0
    %3406 = vmatprep.mubr.bf16.mxu0 0
    %3407 = vmatmul.mubr.bf16.gmra.mrb[0].mxu0 %v2836
    %v3408 = vpop.f32.mrb[0].mxu0
    %v3409 = vadd.f32 %v2728, %v3408
    %v3410 = vpop.f32.mrb[0].mxu0
    %v3411 = vpop.f32.mrb[0].mxu0
    %v3412 = vadd.f32 %v2728, %v3411
    %v3413 = vpop.f32.mrb[0].mxu0
    %3414 = vmatprep.mubr.bf16.mxu0 0
    %3415 = vmatmul.mubr.bf16.gmra.mrb[0].mxu0 %v2839
    %v3416 = vpop.f32.mrb[0].mxu0
    %v3417 = vadd.f32 %v2728, %v3416
    %v3418 = vpop.f32.mrb[0].mxu0
    %v3419 = vpop.f32.mrb[0].mxu0
    %v3420 = vadd.f32 %v2728, %v3419
    %v3421 = vpop.f32.mrb[0].mxu0
    %3422 = vmatprep.mubr.bf16.mxu0 0
    %3423 = vmatmul.mubr.bf16.gmra.mrb[0].mxu0 %v2842
    %v3424 = vpop.f32.mrb[0].mxu0
    %v3425 = vadd.f32 %v2728, %v3424
    %v3426 = vpop.f32.mrb[0].mxu0
    %v3427 = vpop.f32.mrb[0].mxu0
    %v3428 = vadd.f32 %v2728, %v3427
    %v3429 = vpop.f32.mrb[0].mxu0
    %3430 = vmatprep.mubr.bf16.mxu0 0
    %3431 = vmatmul.mubr.bf16.gmra.mrb[0].mxu0 %v2845
    %v3432 = vpop.f32.mrb[0].mxu0
    %v3433 = vadd.f32 %v2728, %v3432
    %v3434 = vpop.f32.mrb[0].mxu0
    %v3435 = vpop.f32.mrb[0].mxu0
    %v3436 = vadd.f32 %v2728, %v3435
    %v3437 = vpop.f32.mrb[0].mxu0
    %3438 = vmatprep.mubr.bf16.mxu0 0
    %3439 = vmatmul.mubr.bf16.gmra.mrb[0].mxu0 %v2848
    %v3440 = vpop.f32.mrb[0].mxu0
    %v3441 = vadd.f32 %v2728, %v3440
    %v3442 = vpop.f32.mrb[0].mxu0
    %v3443 = vpop.f32.mrb[0].mxu0
    %v3444 = vadd.f32 %v2728, %v3443
    %v3445 = vpop.f32.mrb[0].mxu0
    %3446 = vmatprep.mubr.bf16.mxu0 0
    %3447 = vmatmul.mubr.bf16.gmra.mrb[0].mxu0 %v2851
    %v3448 = vpop.f32.mrb[0].mxu0
    %v3449 = vadd.f32 %v2728, %v3448
    %v3450 = vpop.f32.mrb[0].mxu0
    %v3451 = vpop.f32.mrb[0].mxu0
    %v3452 = vadd.f32 %v2728, %v3451
    %v3453 = vpop.f32.mrb[0].mxu0
    %3454 = vmatprep.mubr.bf16.mxu0 0
    %3455 = vmatmul.mubr.bf16.gmra.mrb[0].mxu0 %v2854
    %v3456 = vpop.f32.mrb[0].mxu0
    %v3457 = vadd.f32 %v2728, %v3456
    %v3458 = vpop.f32.mrb[0].mxu0
    %v3459 = vpop.f32.mrb[0].mxu0
    %v3460 = vadd.f32 %v2728, %v3459
    %v3461 = vpop.f32.mrb[0].mxu0
    %3462 = vmatprep.mubr.bf16.mxu0 0
    %3463 = vmatmul.mubr.bf16.gmra.mrb[0].mxu0 %v2857
    %v3464 = vpop.f32.mrb[0].mxu0
    %v3465 = vadd.f32 %v2728, %v3464
    %v3466 = vpop.f32.mrb[0].mxu0
    %v3467 = vpop.f32.mrb[0].mxu0
    %v3468 = vadd.f32 %v2728, %v3467
    %v3469 = vpop.f32.mrb[0].mxu0
    %3470 = vmatprep.mubr.bf16.mxu0 0
    %3471 = vmatmul.mubr.bf16.gmra.mrb[0].mxu0 %v2860
    %v3472 = vpop.f32.mrb[0].mxu0
    %v3473 = vadd.f32 %v2728, %v3472
    %v3474 = vpop.f32.mrb[0].mxu0
    %v3475 = vpop.f32.mrb[0].mxu0
    %v3476 = vadd.f32 %v2728, %v3475
    %v3477 = vpop.f32.mrb[0].mxu0
    %3478 = vmatprep.mubr.bf16.mxu0 0
    %3479 = vmatmul.mubr.bf16.gmra.mrb[0].mxu0 %v2863
    %v3480 = vpop.f32.mrb[0].mxu0
    %v3481 = vadd.f32 %v2728, %v3480
    %v3482 = vpop.f32.mrb[0].mxu0
    %v3483 = vpop.f32.mrb[0].mxu0
    %v3484 = vadd.f32 %v2728, %v3483
    %v3485 = vpop.f32.mrb[0].mxu0
    %3486 = vmatprep.mubr.bf16.mxu0 0
    %3487 = vmatmul.mubr.bf16.gmra.mrb[0].mxu0 %v2866
    %v3488 = vpop.f32.mrb[0].mxu0
    %v3489 = vadd.f32 %v2728, %v3488
    %v3490 = vpop.f32.mrb[0].mxu0
    %v3491 = vpop.f32.mrb[0].mxu0
    %v3492 = vadd.f32 %v2728, %v3491
    %v3493 = vpop.f32.mrb[0].mxu0
    %3494 = vmatprep.mubr.bf16.mxu0 0
    %3495 = vmatmul.mubr.bf16.gmra.mrb[0].mxu0 %v2869
    %v3496 = vpop.f32.mrb[0].mxu0
    %v3497 = vadd.f32 %v2728, %v3496
    %v3498 = vpop.f32.mrb[0].mxu0
    %v3499 = vpop.f32.mrb[0].mxu0
    %v3500 = vadd.f32 %v2728, %v3499
    %v3501 = vpop.f32.mrb[0].mxu0
    %3502 = vmatprep.mubr.bf16.mxu0 0
    %3503 = vmatmul.mubr.bf16.gmra.mrb[0].mxu0 %v2872
    %v3504 = vpop.f32.mrb[0].mxu0
    %v3505 = vadd.f32 %v2728, %v3504
    %v3506 = vpop.f32.mrb[0].mxu0
    %v3507 = vpop.f32.mrb[0].mxu0
    %v3508 = vadd.f32 %v2728, %v3507
    %v3509 = vpop.f32.mrb[0].mxu0
    %3510 = vmatprep.mubr.bf16.mxu0 0
    %3511 = vmatmul.mubr.bf16.gmra.mrb[0].mxu0 %v2875
    %v3512 = vpop.f32.mrb[0].mxu0
    %v3513 = vadd.f32 %v2728, %v3512
    %v3514 = vpop.f32.mrb[0].mxu0
    %v3515 = vpop.f32.mrb[0].mxu0
    %v3516 = vadd.f32 %v2728, %v3515
    %v3517 = vpop.f32.mrb[0].mxu0
    %3518 = vmatprep.mubr.bf16.mxu0 0
    %3519 = vmatmul.mubr.bf16.gmra.mrb[0].mxu0 %v2878
    %v3520 = vpop.f32.mrb[0].mxu0
    %v3521 = vadd.f32 %v2728, %v3520
    %v3522 = vpop.f32.mrb[0].mxu0
    %v3523 = vpop.f32.mrb[0].mxu0
    %v3524 = vadd.f32 %v2728, %v3523
    %v3525 = vpop.f32.mrb[0].mxu0
    %3526 = vmatprep.mubr.bf16.mxu0 0
    %3527 = vmatmul.mubr.bf16.gmra.mrb[0].mxu0 %v2881
    %v3528 = vpop.f32.mrb[0].mxu0
    %v3529 = vadd.f32 %v2728, %v3528
    %v3530 = vpop.f32.mrb[0].mxu0
    %v3531 = vpop.f32.mrb[0].mxu0
    %v3532 = vadd.f32 %v2728, %v3531
    %v3533 = vpop.f32.mrb[0].mxu0
    %3534 = vmatprep.mubr.bf16.mxu0 0
    %3535 = vmatmul.mubr.bf16.gmra.mrb[0].mxu0 %v2884
    %v3536 = vpop.f32.mrb[0].mxu0
    %v3537 = vadd.f32 %v2728, %v3536
    %v3538 = vpop.f32.mrb[0].mxu0
    %v3539 = vpop.f32.mrb[0].mxu0
    %v3540 = vadd.f32 %v2728, %v3539
    %v3541 = vpop.f32.mrb[0].mxu0
    %3542 = vmatprep.mubr.bf16.mxu0 0
    %3543 = vmatmul.mubr.bf16.gmra.mrb[0].mxu0 %v2887
    %v3544 = vpop.f32.mrb[0].mxu0
    %v3545 = vadd.f32 %v2728, %v3544
    %v3546 = vpop.f32.mrb[0].mxu0
    %v3547 = vpop.f32.mrb[0].mxu0
    %v3548 = vadd.f32 %v2728, %v3547
    %v3549 = vpop.f32.mrb[0].mxu0
    %3550 = vmatprep.mubr.bf16.mxu0 0
    %3551 = vmatmul.mubr.bf16.gmra.mrb[0].mxu0 %v2890
    %v3552 = vpop.f32.mrb[0].mxu0
    %v3553 = vadd.f32 %v2728, %v3552
    %v3554 = vpop.f32.mrb[0].mxu0
    %v3555 = vpop.f32.mrb[0].mxu0
    %v3556 = vadd.f32 %v2728, %v3555
    %v3557 = vpop.f32.mrb[0].mxu0
    %3558 = vmatprep.mubr.bf16.mxu0 0
    %3559 = vmatmul.mubr.bf16.gmra.mrb[0].mxu0 %v2893
    %v3560 = vpop.f32.mrb[0].mxu0
    %v3561 = vadd.f32 %v2728, %v3560
    %v3562 = vpop.f32.mrb[0].mxu0
    %v3563 = vpop.f32.mrb[0].mxu0
    %v3564 = vadd.f32 %v2728, %v3563
    %v3565 = vpop.f32.mrb[0].mxu0
    %3566 = vmatprep.mubr.bf16.mxu0 0
    %3567 = vmatmul.mubr.bf16.gmra.mrb[0].mxu0 %v2896
    %v3568 = vpop.f32.mrb[0].mxu0
    %v3569 = vadd.f32 %v2728, %v3568
    %v3570 = vpop.f32.mrb[0].mxu0
    %v3571 = vpop.f32.mrb[0].mxu0
    %v3572 = vadd.f32 %v2728, %v3571
    %v3573 = vpop.f32.mrb[0].mxu0
    %3574 = vmatprep.mubr.bf16.mxu0 0
    %3575 = vmatmul.mubr.bf16.gmra.mrb[0].mxu0 %v2899
    %v3576 = vpop.f32.mrb[0].mxu0
    %v3577 = vadd.f32 %v2728, %v3576
    %v3578 = vpop.f32.mrb[0].mxu0
    %v3579 = vpop.f32.mrb[0].mxu0
    %v3580 = vadd.f32 %v2728, %v3579
    %v3581 = vpop.f32.mrb[0].mxu0
    %3582 = vmatprep.mubr.bf16.mxu0 0
    %3583 = vmatmul.mubr.bf16.gmra.mrb[0].mxu0 %v2902
    %v3584 = vpop.f32.mrb[0].mxu0
    %v3585 = vadd.f32 %v2728, %v3584
    %v3586 = vpop.f32.mrb[0].mxu0
    %v3587 = vpop.f32.mrb[0].mxu0
    %v3588 = vadd.f32 %v2728, %v3587
    %v3589 = vpop.f32.mrb[0].mxu0
    %3590 = vmatprep.mubr.bf16.mxu0 0
    %3591 = vmatmul.mubr.bf16.gmra.mrb[0].mxu0 %v2905
    %v3592 = vpop.f32.mrb[0].mxu0
    %v3593 = vadd.f32 %v2728, %v3592
    %v3594 = vpop.f32.mrb[0].mxu0
    %v3595 = vpop.f32.mrb[0].mxu0
    %v3596 = vadd.f32 %v2728, %v3595
    %v3597 = vpop.f32.mrb[0].mxu0
    %3598 = vmatprep.mubr.bf16.mxu0 0
    %3599 = vmatmul.mubr.bf16.gmra.mrb[0].mxu0 %v2908
    %v3600 = vpop.f32.mrb[0].mxu0
    %v3601 = vadd.f32 %v2728, %v3600
    %v3602 = vpop.f32.mrb[0].mxu0
    %v3603 = vpop.f32.mrb[0].mxu0
    %v3604 = vadd.f32 %v2728, %v3603
    %v3605 = vpop.f32.mrb[0].mxu0
    %3606 = vmatprep.mubr.bf16.mxu0 0
    %3607 = vmatmul.mubr.bf16.gmra.mrb[0].mxu0 %v2911
    %v3608 = vpop.f32.mrb[0].mxu0
    %v3609 = vadd.f32 %v2728, %v3608
    %v3610 = vpop.f32.mrb[0].mxu0
    %v3611 = vpop.f32.mrb[0].mxu0
    %v3612 = vadd.f32 %v2728, %v3611
    %v3613 = vpop.f32.mrb[0].mxu0
    %3614 = vmatprep.mubr.bf16.mxu0 0
    %3615 = vmatmul.mubr.bf16.gmra.mrb[0].mxu0 %v2914
    %v3616 = vpop.f32.mrb[0].mxu0
    %v3617 = vadd.f32 %v2728, %v3616
    %v3618 = vpop.f32.mrb[0].mxu0
    %v3619 = vpop.f32.mrb[0].mxu0
    %v3620 = vadd.f32 %v2728, %v3619
    %v3621 = vpop.f32.mrb[0].mxu0
    %3622 = vmatprep.mubr.bf16.mxu0 0
    %3623 = vmatmul.mubr.bf16.gmra.mrb[0].mxu0 %v2917
    %v3624 = vpop.f32.mrb[0].mxu0
    %v3625 = vadd.f32 %v2728, %v3624
    %v3626 = vpop.f32.mrb[0].mxu0
    %v3627 = vpop.f32.mrb[0].mxu0
    %v3628 = vadd.f32 %v2728, %v3627
    %v3629 = vpop.f32.mrb[0].mxu0
    %3630 = vmatprep.mubr.bf16.mxu0 0
    %3631 = vmatmul.mubr.bf16.gmra.mrb[0].mxu0 %v2920
    %v3632 = vpop.f32.mrb[0].mxu0
    %v3633 = vadd.f32 %v2728, %v3632
    %v3634 = vpop.f32.mrb[0].mxu0
    %v3635 = vpop.f32.mrb[0].mxu0
    %v3636 = vadd.f32 %v2728, %v3635
    %v3637 = vpop.f32.mrb[0].mxu0
    %3638 = vmatprep.mubr.bf16.mxu0 0
    %3639 = vmatmul.mubr.bf16.gmra.mrb[0].mxu0 %v2923
    %v3640 = vpop.f32.mrb[0].mxu0
    %v3641 = vadd.f32 %v2728, %v3640
    %v3642 = vpop.f32.mrb[0].mxu0
    %v3643 = vpop.f32.mrb[0].mxu0
    %v3644 = vadd.f32 %v2728, %v3643
    %v3645 = vpop.f32.mrb[0].mxu0
    %3646 = vmatprep.mubr.bf16.mxu0 0
    %3647 = vmatmul.mubr.bf16.gmra.mrb[0].mxu0 %v2926
    %v3648 = vpop.f32.mrb[0].mxu0
    %v3649 = vadd.f32 %v2728, %v3648
    %v3650 = vpop.f32.mrb[0].mxu0
    %v3651 = vpop.f32.mrb[0].mxu0
    %v3652 = vadd.f32 %v2728, %v3651
    %v3653 = vpop.f32.mrb[0].mxu0
    %3654 = vmatprep.mubr.bf16.mxu0 0
    %3655 = vmatmul.mubr.bf16.gmra.mrb[0].mxu0 %v2929
    %v3656 = vpop.f32.mrb[0].mxu0
    %v3657 = vadd.f32 %v2728, %v3656
    %v3658 = vpop.f32.mrb[0].mxu0
    %v3659 = vpop.f32.mrb[0].mxu0
    %v3660 = vadd.f32 %v2728, %v3659
    %v3661 = vpop.f32.mrb[0].mxu0
    %3662 = vmatprep.mubr.bf16.mxu0 0
    %3663 = vmatmul.mubr.bf16.gmra.mrb[0].mxu0 %v2932
    %v3664 = vpop.f32.mrb[0].mxu0
    %v3665 = vadd.f32 %v2728, %v3664
    %v3666 = vpop.f32.mrb[0].mxu0
    %v3667 = vpop.f32.mrb[0].mxu0
    %v3668 = vadd.f32 %v2728, %v3667
    %v3669 = vpop.f32.mrb[0].mxu0
    %3670 = vmatprep.mubr.bf16.mxu0 0
    %3671 = vmatmul.mubr.bf16.gmra.mrb[0].mxu0 %v2935
    %v3672 = vpop.f32.mrb[0].mxu0
    %v3673 = vadd.f32 %v2728, %v3672
    %v3674 = vpop.f32.mrb[0].mxu0
    %v3675 = vpop.f32.mrb[0].mxu0
    %v3676 = vadd.f32 %v2728, %v3675
    %v3677 = vpop.f32.mrb[0].mxu0
    %3678 = vmatprep.mubr.bf16.mxu0 0
    %3679 = vmatmul.mubr.bf16.gmra.mrb[0].mxu0 %v2938
    %v3680 = vpop.f32.mrb[0].mxu0
    %v3681 = vadd.f32 %v2728, %v3680
    %v3682 = vpop.f32.mrb[0].mxu0
    %v3683 = vpop.f32.mrb[0].mxu0
    %v3684 = vadd.f32 %v2728, %v3683
    %v3685 = vpop.f32.mrb[0].mxu0
    %3686 = vmatprep.mubr.bf16.mxu0 0
    %3687 = vmatmul.mubr.bf16.gmra.mrb[0].mxu0 %v2941
    %v3688 = vpop.f32.mrb[0].mxu0
    %v3689 = vadd.f32 %v2728, %v3688
    %v3690 = vpop.f32.mrb[0].mxu0
    %v3691 = vpop.f32.mrb[0].mxu0
    %v3692 = vadd.f32 %v2728, %v3691
    %v3693 = vpop.f32.mrb[0].mxu0
    %3694 = vmatprep.mubr.bf16.mxu0 0
    %3695 = vmatmul.mubr.bf16.gmra.mrb[0].mxu0 %v2944
    %v3696 = vpop.f32.mrb[0].mxu0
    %v3697 = vadd.f32 %v2728, %v3696
    %v3698 = vpop.f32.mrb[0].mxu0
    %v3699 = vpop.f32.mrb[0].mxu0
    %v3700 = vadd.f32 %v2728, %v3699
    %v3701 = vpop.f32.mrb[0].mxu0
    %3702 = vmatprep.mubr.bf16.mxu0 0
    %3703 = vmatmul.mubr.bf16.gmra.mrb[0].mxu0 %v2947
    %v3704 = vpop.f32.mrb[0].mxu0
    %v3705 = vadd.f32 %v2728, %v3704
    %v3706 = vpop.f32.mrb[0].mxu0
    %v3707 = vpop.f32.mrb[0].mxu0
    %v3708 = vadd.f32 %v2728, %v3707
    %v3709 = vpop.f32.mrb[0].mxu0
    %3710 = vmatprep.mubr.bf16.mxu0 0
    %3711 = vmatmul.mubr.bf16.gmra.mrb[0].mxu0 %v2950
    %v3712 = vpop.f32.mrb[0].mxu0
    %v3713 = vadd.f32 %v2728, %v3712
    %v3714 = vpop.f32.mrb[0].mxu0
    %v3715 = vpop.f32.mrb[0].mxu0
    %v3716 = vadd.f32 %v2728, %v3715
    %v3717 = vpop.f32.mrb[0].mxu0
    %3718 = vmatprep.mubr.bf16.mxu0 0
    %3719 = vmatmul.mubr.bf16.gmra.mrb[0].mxu0 %v2953
    %v3720 = vpop.f32.mrb[0].mxu0
    %v3721 = vadd.f32 %v2728, %v3720
    %v3722 = vpop.f32.mrb[0].mxu0
    %v3723 = vpop.f32.mrb[0].mxu0
    %v3724 = vadd.f32 %v2728, %v3723
    %v3725 = vpop.f32.mrb[0].mxu0
    %3726 = vmatprep.mubr.bf16.mxu0 0
    %3727 = vmatmul.mubr.bf16.gmra.mrb[0].mxu0 %v2956
    %v3728 = vpop.f32.mrb[0].mxu0
    %v3729 = vadd.f32 %v2728, %v3728
    %v3730 = vpop.f32.mrb[0].mxu0
    %v3731 = vpop.f32.mrb[0].mxu0
    %v3732 = vadd.f32 %v2728, %v3731
    %v3733 = vpop.f32.mrb[0].mxu0
    %3734 = vmatprep.mubr.bf16.mxu0 0
    %3735 = vmatmul.mubr.bf16.gmra.mrb[0].mxu0 %v2959
    %v3736 = vpop.f32.mrb[0].mxu0
    %v3737 = vadd.f32 %v2728, %v3736
    %v3738 = vpop.f32.mrb[0].mxu0
    %v3739 = vpop.f32.mrb[0].mxu0
    %v3740 = vadd.f32 %v2728, %v3739
    %v3741 = vpop.f32.mrb[0].mxu0
    %3742 = vmatprep.mubr.bf16.mxu0 0
    %3743 = vmatmul.mubr.bf16.gmra.mrb[0].mxu0 %v2962
    %v3744 = vpop.f32.mrb[0].mxu0
    %v3745 = vadd.f32 %v2728, %v3744
    %v3746 = vpop.f32.mrb[0].mxu0
    %v3747 = vpop.f32.mrb[0].mxu0
    %v3748 = vadd.f32 %v2728, %v3747
    %v3749 = vpop.f32.mrb[0].mxu0
    %3750 = vmatprep.mubr.bf16.mxu0 0
    %3751 = vmatmul.mubr.bf16.gmra.mrb[0].mxu0 %v2965
    %v3752 = vpop.f32.mrb[0].mxu0
    %v3753 = vadd.f32 %v2728, %v3752
    %v3754 = vpop.f32.mrb[0].mxu0
    %v3755 = vpop.f32.mrb[0].mxu0
    %v3756 = vadd.f32 %v2728, %v3755
    %v3757 = vpop.f32.mrb[0].mxu0
    %3758 = vmatprep.mubr.bf16.mxu0 0
    %3759 = vmatmul.mubr.bf16.gmra.mrb[0].mxu0 %v2968
    %v3760 = vpop.f32.mrb[0].mxu0
    %v3761 = vadd.f32 %v2728, %v3760
    %v3762 = vpop.f32.mrb[0].mxu0
    %v3763 = vpop.f32.mrb[0].mxu0
    %v3764 = vadd.f32 %v2728, %v3763
    %v3765 = vpop.f32.mrb[0].mxu0
    %3766 = vmatprep.mubr.bf16.mxu0 0
    %3767 = vmatmul.mubr.bf16.gmra.mrb[0].mxu0 %v2971
    %v3768 = vpop.f32.mrb[0].mxu0
    %v3769 = vadd.f32 %v2728, %v3768
    %v3770 = vpop.f32.mrb[0].mxu0
    %v3771 = vpop.f32.mrb[0].mxu0
    %v3772 = vadd.f32 %v2728, %v3771
    %v3773 = vpop.f32.mrb[0].mxu0
    %3774 = vmatprep.mubr.bf16.mxu0 0
    %3775 = vmatmul.mubr.bf16.gmra.mrb[0].mxu0 %v2974
    %v3776 = vpop.f32.mrb[0].mxu0
    %v3777 = vadd.f32 %v2728, %v3776
    %v3778 = vpop.f32.mrb[0].mxu0
    %v3779 = vpop.f32.mrb[0].mxu0
    %v3780 = vadd.f32 %v2728, %v3779
    %v3781 = vpop.f32.mrb[0].mxu0
    %3782 = vmatprep.mubr.bf16.mxu0 0
    %3783 = vmatmul.mubr.bf16.gmra.mrb[0].mxu0 %v2977
    %v3784 = vpop.f32.mrb[0].mxu0
    %v3785 = vadd.f32 %v2728, %v3784
    %v3786 = vpop.f32.mrb[0].mxu0
    %v3787 = vpop.f32.mrb[0].mxu0
    %v3788 = vadd.f32 %v2728, %v3787
    %v3789 = vpop.f32.mrb[0].mxu0
    %3790 = vmatprep.mubr.bf16.mxu0 0
    %3791 = vmatmul.mubr.bf16.gmra.mrb[0].mxu0 %v2980
    %v3792 = vpop.f32.mrb[0].mxu0
    %v3793 = vadd.f32 %v2728, %v3792
    %v3794 = vpop.f32.mrb[0].mxu0
    %v3795 = vpop.f32.mrb[0].mxu0
    %v3796 = vadd.f32 %v2728, %v3795
    %v3797 = vpop.f32.mrb[0].mxu0
    %3798 = vmatprep.mubr.bf16.mxu0 0
    %3799 = vmatmul.mubr.bf16.gmra.mrb[0].mxu0 %v2983
    %v3800 = vpop.f32.mrb[0].mxu0
    %v3801 = vadd.f32 %v2728, %v3800
    %v3802 = vpop.f32.mrb[0].mxu0
    %v3803 = vpop.f32.mrb[0].mxu0
    %v3804 = vadd.f32 %v2728, %v3803
    %v3805 = vpop.f32.mrb[0].mxu0
    %3806 = vmatprep.mubr.bf16.mxu0 0
    %3807 = vmatmul.mubr.bf16.gmra.mrb[0].mxu0 %v2986
    %v3808 = vpop.f32.mrb[0].mxu0
    %v3809 = vadd.f32 %v2728, %v3808
    %v3810 = vpop.f32.mrb[0].mxu0
    %v3811 = vpop.f32.mrb[0].mxu0
    %v3812 = vadd.f32 %v2728, %v3811
    %v3813 = vpop.f32.mrb[0].mxu0
    %3814 = vmatprep.mubr.bf16.mxu0 0
    %3815 = vmatmul.mubr.bf16.gmra.mrb[0].mxu0 %v2989
    %v3816 = vpop.f32.mrb[0].mxu0
    %v3817 = vadd.f32 %v2728, %v3816
    %v3818 = vpop.f32.mrb[0].mxu0
    %v3819 = vpop.f32.mrb[0].mxu0
    %v3820 = vadd.f32 %v2728, %v3819
    %v3821 = vpop.f32.mrb[0].mxu0
    %3822 = vmatprep.mubr.bf16.mxu0 0
    %3823 = vmatmul.mubr.bf16.gmra.mrb[0].mxu0 %v2992
    %v3824 = vpop.f32.mrb[0].mxu0
    %v3825 = vadd.f32 %v2728, %v3824
    %v3826 = vpop.f32.mrb[0].mxu0
    %v3827 = vpop.f32.mrb[0].mxu0
    %v3828 = vadd.f32 %v2728, %v3827
    %v3829 = vpop.f32.mrb[0].mxu0
    %3830 = vmatprep.mubr.bf16.mxu0 0
    %3831 = vmatmul.mubr.bf16.gmra.mrb[0].mxu0 %v2995
    %v3832 = vpop.f32.mrb[0].mxu0
    %v3833 = vadd.f32 %v2728, %v3832
    %v3834 = vpop.f32.mrb[0].mxu0
    %v3835 = vpop.f32.mrb[0].mxu0
    %v3836 = vadd.f32 %v2728, %v3835
    %v3837 = vpop.f32.mrb[0].mxu0
    %3838 = vmatprep.mubr.bf16.mxu0 0
    %3839 = vmatmul.mubr.bf16.gmra.mrb[0].mxu0 %v2998
    %v3840 = vpop.f32.mrb[0].mxu0
    %v3841 = vadd.f32 %v2728, %v3840
    %v3842 = vpop.f32.mrb[0].mxu0
    %v3843 = vpop.f32.mrb[0].mxu0
    %v3844 = vadd.f32 %v2728, %v3843
    %v3845 = vpop.f32.mrb[0].mxu0
    %3846 = vmatprep.mubr.bf16.mxu0 0
    %3847 = vmatmul.mubr.bf16.gmra.mrb[0].mxu0 %v3001
    %v3848 = vpop.f32.mrb[0].mxu0
    %v3849 = vadd.f32 %v2728, %v3848
    %v3850 = vpop.f32.mrb[0].mxu0
    %v3851 = vpop.f32.mrb[0].mxu0
    %v3852 = vadd.f32 %v2728, %v3851
    %v3853 = vpop.f32.mrb[0].mxu0
    %3854 = vmatprep.mubr.bf16.mxu0 0
    %3855 = vmatmul.mubr.bf16.gmra.mrb[0].mxu0 %v3004
    %v3856 = vpop.f32.mrb[0].mxu0
    %v3857 = vadd.f32 %v2728, %v3856
    %v3858 = vpop.f32.mrb[0].mxu0
    %v3859 = vpop.f32.mrb[0].mxu0
    %v3860 = vadd.f32 %v2728, %v3859
    %v3861 = vpop.f32.mrb[0].mxu0
    %3862 = vmatprep.mubr.bf16.mxu0 0
    %3863 = vmatmul.mubr.bf16.gmra.mrb[0].mxu0 %v3007
    %v3864 = vpop.f32.mrb[0].mxu0
    %v3865 = vadd.f32 %v2728, %v3864
    %v3866 = vpop.f32.mrb[0].mxu0
    %v3867 = vpop.f32.mrb[0].mxu0
    %v3868 = vadd.f32 %v2728, %v3867
    %v3869 = vpop.f32.mrb[0].mxu0
    %3870 = vmatprep.mubr.bf16.mxu0 0
    %3871 = vmatmul.mubr.bf16.gmra.mrb[0].mxu0 %v3010
    %v3872 = vpop.f32.mrb[0].mxu0
    %v3873 = vadd.f32 %v2728, %v3872
    %v3874 = vpop.f32.mrb[0].mxu0
    %v3875 = vpop.f32.mrb[0].mxu0
    %v3876 = vadd.f32 %v2728, %v3875
    %v3877 = vpop.f32.mrb[0].mxu0
    %3878 = vmatprep.mubr.bf16.mxu0 0
    %3879 = vmatmul.mubr.bf16.gmra.mrb[0].mxu0 %v3013
    %v3880 = vpop.f32.mrb[0].mxu0
    %v3881 = vadd.f32 %v2728, %v3880
    %v3882 = vpop.f32.mrb[0].mxu0
    %v3883 = vpop.f32.mrb[0].mxu0
    %v3884 = vadd.f32 %v2728, %v3883
    %v3885 = vpop.f32.mrb[0].mxu0
    %3886 = vmatprep.mubr.bf16.mxu0 0
    %3887 = vmatmul.mubr.bf16.gmra.mrb[0].mxu0 %v3016
    %v3888 = vpop.f32.mrb[0].mxu0
    %v3889 = vadd.f32 %v2728, %v3888
    %v3890 = vpop.f32.mrb[0].mxu0
    %v3891 = vpop.f32.mrb[0].mxu0
    %v3892 = vadd.f32 %v2728, %v3891
    %v3893 = vpop.f32.mrb[0].mxu0
    %3894 = vmatprep.mubr.bf16.mxu0 0
    %3895 = vmatmul.mubr.bf16.gmra.mrb[0].mxu0 %v3019
    %v3896 = vpop.f32.mrb[0].mxu0
    %v3897 = vadd.f32 %v2728, %v3896
    %v3898 = vpop.f32.mrb[0].mxu0
    %v3899 = vpop.f32.mrb[0].mxu0
    %v3900 = vadd.f32 %v2728, %v3899
    %v3901 = vpop.f32.mrb[0].mxu0
    %3902 = vmatprep.mubr.bf16.mxu0 0
    %3903 = vmatmul.mubr.bf16.gmra.mrb[0].mxu0 %v3022
    %v3904 = vpop.f32.mrb[0].mxu0
    %v3905 = vadd.f32 %v2728, %v3904
    %v3906 = vpop.f32.mrb[0].mxu0
    %v3907 = vpop.f32.mrb[0].mxu0
    %v3908 = vadd.f32 %v2728, %v3907
    %v3909 = vpop.f32.mrb[0].mxu0
    %3910 = vmatprep.mubr.bf16.mxu0 0
    %3911 = vmatmul.mubr.bf16.gmra.mrb[0].mxu0 %v3025
    %v3912 = vpop.f32.mrb[0].mxu0
    %v3913 = vadd.f32 %v2728, %v3912
    %v3914 = vpop.f32.mrb[0].mxu0
    %v3915 = vpop.f32.mrb[0].mxu0
    %v3916 = vadd.f32 %v2728, %v3915
    %v3917 = vpop.f32.mrb[0].mxu0
    %3918 = vmatprep.mubr.bf16.mxu0 0
    %3919 = vmatmul.mubr.bf16.gmra.mrb[0].mxu0 %v3028
    %v3920 = vpop.f32.mrb[0].mxu0
    %v3921 = vadd.f32 %v2728, %v3920
    %v3922 = vpop.f32.mrb[0].mxu0
    %v3923 = vpop.f32.mrb[0].mxu0
    %v3924 = vadd.f32 %v2728, %v3923
    %v3925 = vpop.f32.mrb[0].mxu0
    %3926 = vmatprep.mubr.bf16.mxu0 0
    %3927 = vmatmul.mubr.bf16.gmra.mrb[0].mxu0 %v3031
    %v3928 = vpop.f32.mrb[0].mxu0
    %v3929 = vadd.f32 %v2728, %v3928
    %v3930 = vpop.f32.mrb[0].mxu0
    %v3931 = vpop.f32.mrb[0].mxu0
    %v3932 = vadd.f32 %v2728, %v3931
    %v3933 = vpop.f32.mrb[0].mxu0
    %3934 = vmatprep.mubr.bf16.mxu0 0
    %3935 = vmatmul.mubr.bf16.gmra.mrb[0].mxu0 %v3034
    %v3936 = vpop.f32.mrb[0].mxu0
    %v3937 = vadd.f32 %v2728, %v3936
    %v3938 = vpop.f32.mrb[0].mxu0
    %v3939 = vpop.f32.mrb[0].mxu0
    %v3940 = vadd.f32 %v2728, %v3939
    %v3941 = vpop.f32.mrb[0].mxu0
    %3942 = vmatprep.mubr.bf16.mxu0 0
    %3943 = vmatmul.mubr.bf16.gmra.mrb[0].mxu0 %v3037
    %v3944 = vpop.f32.mrb[0].mxu0
    %v3945 = vadd.f32 %v2728, %v3944
    %v3946 = vpop.f32.mrb[0].mxu0
    %v3947 = vpop.f32.mrb[0].mxu0
    %v3948 = vadd.f32 %v2728, %v3947
    %v3949 = vpop.f32.mrb[0].mxu0
    %3950 = vmatprep.mubr.bf16.mxu0 0
    %3951 = vmatmul.mubr.bf16.gmra.mrb[0].mxu0 %v3040
    %v3952 = vpop.f32.mrb[0].mxu0
    %v3953 = vadd.f32 %v2728, %v3952
    %v3954 = vpop.f32.mrb[0].mxu0
    %v3955 = vpop.f32.mrb[0].mxu0
    %v3956 = vadd.f32 %v2728, %v3955
    %v3957 = vpop.f32.mrb[0].mxu0
    %3958 = vmatprep.mubr.bf16.mxu0 0
    %3959 = vmatmul.mubr.bf16.gmra.mrb[0].mxu0 %v3043
    %v3960 = vpop.f32.mrb[0].mxu0
    %v3961 = vadd.f32 %v2728, %v3960
    %v3962 = vpop.f32.mrb[0].mxu0
    %v3963 = vpop.f32.mrb[0].mxu0
    %v3964 = vadd.f32 %v2728, %v3963
    %v3965 = vpop.f32.mrb[0].mxu0
    %3966 = vmatprep.mubr.bf16.mxu0 0
    %3967 = vmatmul.mubr.bf16.gmra.mrb[0].mxu0 %v3046
    %v3968 = vpop.f32.mrb[0].mxu0
    %v3969 = vadd.f32 %v2728, %v3968
    %v3970 = vpop.f32.mrb[0].mxu0
    %v3971 = vpop.f32.mrb[0].mxu0
    %v3972 = vadd.f32 %v2728, %v3971
    %v3973 = vpop.f32.mrb[0].mxu0
    %3974 = vmatprep.mubr.bf16.mxu0 0
    %3975 = vmatmul.mubr.bf16.gmra.mrb[0].mxu0 %v3049
    %v3976 = vpop.f32.mrb[0].mxu0
    %v3977 = vadd.f32 %v2728, %v3976
    %v3978 = vpop.f32.mrb[0].mxu0
    %v3979 = vpop.f32.mrb[0].mxu0
    %v3980 = vadd.f32 %v2728, %v3979
    %v3981 = vpop.f32.mrb[0].mxu0
    %3982 = vmatprep.mubr.bf16.mxu0 0
    %3983 = vmatmul.mubr.bf16.gmra.mrb[0].mxu0 %v3052
    %v3984 = vpop.f32.mrb[0].mxu0
    %v3985 = vadd.f32 %v2728, %v3984
    %v3986 = vpop.f32.mrb[0].mxu0
    %v3987 = vpop.f32.mrb[0].mxu0
    %v3988 = vadd.f32 %v2728, %v3987
    %v3989 = vpop.f32.mrb[0].mxu0
    %3990 = vmatprep.mubr.bf16.mxu0 0
    %3991 = vmatmul.mubr.bf16.gmra.mrb[0].mxu0 %v3055
    %v3992 = vpop.f32.mrb[0].mxu0
    %v3993 = vadd.f32 %v2728, %v3992
    %v3994 = vpop.f32.mrb[0].mxu0
    %v3995 = vpop.f32.mrb[0].mxu0
    %v3996 = vadd.f32 %v2728, %v3995
    %v3997 = vpop.f32.mrb[0].mxu0
    %3998 = vmatprep.mubr.bf16.mxu0 0
    %3999 = vmatmul.mubr.bf16.gmra.mrb[0].mxu0 %v3058
    %v4000 = vpop.f32.mrb[0].mxu0
    %v4001 = vadd.f32 %v2728, %v4000
    %v4002 = vpop.f32.mrb[0].mxu0
    %v4003 = vpop.f32.mrb[0].mxu0
    %v4004 = vadd.f32 %v2728, %v4003
    %v4005 = vpop.f32.mrb[0].mxu0
    %4006 = vmatprep.mubr.bf16.mxu0 0
    %4007 = vmatmul.mubr.bf16.gmra.mrb[0].mxu0 %v3061
    %v4008 = vpop.f32.mrb[0].mxu0
    %v4009 = vadd.f32 %v2728, %v4008
    %v4010 = vpop.f32.mrb[0].mxu0
    %v4011 = vpop.f32.mrb[0].mxu0
    %v4012 = vadd.f32 %v2728, %v4011
    %v4013 = vpop.f32.mrb[0].mxu0
    %4014 = vmatprep.mubr.bf16.mxu0 0
    %4015 = vmatmul.mubr.bf16.gmra.mrb[0].mxu0 %v3064
    %v4016 = vpop.f32.mrb[0].mxu0
    %v4017 = vadd.f32 %v2728, %v4016
    %v4018 = vpop.f32.mrb[0].mxu0
    %v4019 = vpop.f32.mrb[0].mxu0
    %v4020 = vadd.f32 %v2728, %v4019
    %v4021 = vpop.f32.mrb[0].mxu0
    %4022 = vmatprep.mubr.bf16.mxu0 0
    %4023 = vmatmul.mubr.bf16.gmra.mrb[0].mxu0 %v3067
    %v4024 = vpop.f32.mrb[0].mxu0
    %v4025 = vadd.f32 %v2728, %v4024
    %v4026 = vpop.f32.mrb[0].mxu0
    %v4027 = vpop.f32.mrb[0].mxu0
    %v4028 = vadd.f32 %v2728, %v4027
    %v4029 = vpop.f32.mrb[0].mxu0
    %4030 = vmatprep.mubr.bf16.mxu0 0
    %4031 = vmatmul.mubr.bf16.gmra.mrb[0].mxu0 %v3070
    %v4032 = vpop.f32.mrb[0].mxu0
    %v4033 = vadd.f32 %v2728, %v4032
    %v4034 = vpop.f32.mrb[0].mxu0
    %v4035 = vpop.f32.mrb[0].mxu0
    %v4036 = vadd.f32 %v2728, %v4035
    %v4037 = vpop.f32.mrb[0].mxu0
    %4038 = vmatprep.mubr.bf16.mxu0 0
    %4039 = vmatmul.mubr.bf16.gmra.mrb[0].mxu0 %v3073
    %v4040 = vpop.f32.mrb[0].mxu0
    %v4041 = vadd.f32 %v2728, %v4040
    %v4042 = vpop.f32.mrb[0].mxu0
    %v4043 = vpop.f32.mrb[0].mxu0
    %v4044 = vadd.f32 %v2728, %v4043
    %v4045 = vpop.f32.mrb[0].mxu0
    %4046 = vmatprep.mubr.bf16.mxu0 0
    %4047 = vmatmul.mubr.bf16.gmra.mrb[0].mxu0 %v3076
    %v4048 = vpop.f32.mrb[0].mxu0
    %v4049 = vadd.f32 %v2728, %v4048
    %v4050 = vpop.f32.mrb[0].mxu0
    %v4051 = vpop.f32.mrb[0].mxu0
    %v4052 = vadd.f32 %v2728, %v4051
    %v4053 = vpop.f32.mrb[0].mxu0
    %4054 = vmatprep.mubr.bf16.mxu0 0
    %4055 = vmatmul.mubr.bf16.gmra.mrb[0].mxu0 %v3079
    %v4056 = vpop.f32.mrb[0].mxu0
    %v4057 = vadd.f32 %v2728, %v4056
    %v4058 = vpop.f32.mrb[0].mxu0
    %v4059 = vpop.f32.mrb[0].mxu0
    %v4060 = vadd.f32 %v2728, %v4059
    %v4061 = vpop.f32.mrb[0].mxu0
    %4062 = vmatprep.mubr.bf16.mxu0 0
    %4063 = vmatmul.mubr.bf16.gmra.mrb[0].mxu0 %v3082
    %v4064 = vpop.f32.mrb[0].mxu0
    %v4065 = vadd.f32 %v2728, %v4064
    %v4066 = vpop.f32.mrb[0].mxu0
    %v4067 = vpop.f32.mrb[0].mxu0
    %v4068 = vadd.f32 %v2728, %v4067
    %v4069 = vpop.f32.mrb[0].mxu0
    %4070 = vmatprep.mubr.bf16.mxu0 0
    %4071 = vmatmul.mubr.bf16.gmra.mrb[0].mxu0 %v3085
    %v4072 = vpop.f32.mrb[0].mxu0
    %v4073 = vadd.f32 %v2728, %v4072
    %v4074 = vpop.f32.mrb[0].mxu0
    %v4075 = vpop.f32.mrb[0].mxu0
    %v4076 = vadd.f32 %v2728, %v4075
    %v4077 = vpop.f32.mrb[0].mxu0
    %4078 = vmatprep.mubr.bf16.mxu0 0
    %4079 = vmatmul.mubr.bf16.gmra.mrb[0].mxu0 %v3088
    %v4080 = vpop.f32.mrb[0].mxu0
    %v4081 = vadd.f32 %v2728, %v4080
    %v4082 = vpop.f32.mrb[0].mxu0
    %v4083 = vpop.f32.mrb[0].mxu0
    %v4084 = vadd.f32 %v2728, %v4083
    %v4085 = vpop.f32.mrb[0].mxu0
    %4086 = vmatprep.mubr.bf16.mxu0 0
    %4087 = vmatmul.mubr.bf16.gmra.mrb[0].mxu0 %v3091
    %v4088 = vpop.f32.mrb[0].mxu0
    %v4089 = vadd.f32 %v2728, %v4088
    %v4090 = vpop.f32.mrb[0].mxu0
    %v4091 = vpop.f32.mrb[0].mxu0
    %v4092 = vadd.f32 %v2728, %v4091
    %v4093 = vpop.f32.mrb[0].mxu0
    %4094 = vmatprep.mubr.bf16.mxu0 0
    %4095 = vmatmul.mubr.bf16.gmra.mrb[0].mxu0 %v3094
    %v4096 = vpop.f32.mrb[0].mxu0
    %v4097 = vadd.f32 %v2728, %v4096
    %v4098 = vpop.f32.mrb[0].mxu0
    %v4099 = vpop.f32.mrb[0].mxu0
    %v4100 = vadd.f32 %v2728, %v4099
    %v4101 = vpop.f32.mrb[0].mxu0
    %4102 = vmatprep.mubr.bf16.mxu0 0
    %4103 = vmatmul.mubr.bf16.gmra.mrb[0].mxu0 %v3097
    %v4104 = vpop.f32.mrb[0].mxu0
    %v4105 = vadd.f32 %v2728, %v4104
    %v4106 = vpop.f32.mrb[0].mxu0
    %v4107 = vpop.f32.mrb[0].mxu0
    %v4108 = vadd.f32 %v2728, %v4107
    %v4109 = vpop.f32.mrb[0].mxu0
    %4110 = vmatprep.mubr.bf16.mxu0 0
    %4111 = vmatmul.mubr.bf16.gmra.mrb[0].mxu0 %v3100
    %v4112 = vpop.f32.mrb[0].mxu0
    %v4113 = vadd.f32 %v2728, %v4112
    %v4114 = vpop.f32.mrb[0].mxu0
    %v4115 = vpop.f32.mrb[0].mxu0
    %v4116 = vadd.f32 %v2728, %v4115
    %v4117 = vpop.f32.mrb[0].mxu0
    %4118 = vmatprep.mubr.bf16.mxu0 0
    %4119 = vmatmul.mubr.bf16.gmra.mrb[0].mxu0 %v3103
    %v4120 = vpop.f32.mrb[0].mxu0
    %v4121 = vadd.f32 %v2728, %v4120
    %v4122 = vpop.f32.mrb[0].mxu0
    %v4123 = vpop.f32.mrb[0].mxu0
    %v4124 = vadd.f32 %v2728, %v4123
    %v4125 = vpop.f32.mrb[0].mxu0
    %4126 = vmatprep.mubr.bf16.mxu0 0
    %4127 = vmatmul.mubr.bf16.gmra.mrb[0].mxu0 %v3106
    %v4128 = vpop.f32.mrb[0].mxu0
    %v4129 = vadd.f32 %v2728, %v4128
    %v4130 = vpop.f32.mrb[0].mxu0
    %v4131 = vpop.f32.mrb[0].mxu0
    %v4132 = vadd.f32 %v2728, %v4131
    %v4133 = vpop.f32.mrb[0].mxu0
    %4134 = vmatprep.mubr.bf16.mxu0 0
    %4135 = vmatmul.mubr.bf16.gmra.mrb[0].mxu0 %v3109
    %v4136 = vpop.f32.mrb[0].mxu0
    %v4137 = vadd.f32 %v2728, %v4136
    %v4138 = vpop.f32.mrb[0].mxu0
    %v4139 = vpop.f32.mrb[0].mxu0
    %v4140 = vadd.f32 %v2728, %v4139
    %v4141 = vpop.f32.mrb[0].mxu0
    %4142 = vmatprep.mubr.bf16.mxu0 0
    %4143 = vmatmul.mubr.bf16.gmra.mrb[0].mxu0 %v3112
    %v4144 = vpop.f32.mrb[0].mxu0
    %v4145 = vadd.f32 %v2728, %v4144
    %v4146 = vpop.f32.mrb[0].mxu0
    %v4147 = vpop.f32.mrb[0].mxu0
    %v4148 = vadd.f32 %v2728, %v4147
    %v4149 = vpop.f32.mrb[0].mxu0
    %4150 = vmatprep.mubr.bf16.mxu0 0
    %4151 = vmatmul.mubr.bf16.gmra.mrb[0].mxu0 %v3115
    %v4152 = vpop.f32.mrb[0].mxu0
    %v4153 = vadd.f32 %v2728, %v4152
    %v4154 = vpop.f32.mrb[0].mxu0
    %v4155 = vpop.f32.mrb[0].mxu0
    %v4156 = vadd.f32 %v2728, %v4155
    %v4157 = vpop.f32.mrb[0].mxu0
    %4158 = vmatprep.mubr.bf16.mxu0 0
    %4159 = vmatmul.mubr.bf16.gmra.mrb[0].mxu0 %v3118
    %v4160 = vpop.f32.mrb[0].mxu0
    %v4161 = vadd.f32 %v2728, %v4160
    %v4162 = vpop.f32.mrb[0].mxu0
    %v4163 = vpop.f32.mrb[0].mxu0
    %v4164 = vadd.f32 %v2728, %v4163
    %v4165 = vpop.f32.mrb[0].mxu0
    %4166 = vmatprep.mubr.bf16.mxu0 0
    %4167 = vmatmul.mubr.bf16.gmra.mrb[0].mxu0 %v3121
    %v4168 = vpop.f32.mrb[0].mxu0
    %v4169 = vadd.f32 %v2728, %v4168
    %v4170 = vpop.f32.mrb[0].mxu0
    %v4171 = vpop.f32.mrb[0].mxu0
    %v4172 = vadd.f32 %v2728, %v4171
    %v4173 = vpop.f32.mrb[0].mxu0
    %4174 = vmatprep.mubr.bf16.mxu0 0
    %4175 = vmatmul.mubr.bf16.gmra.mrb[0].mxu0 %v3124
    %v4176 = vpop.f32.mrb[0].mxu0
    %v4177 = vadd.f32 %v2728, %v4176
    %v4178 = vpop.f32.mrb[0].mxu0
    %v4179 = vpop.f32.mrb[0].mxu0
    %v4180 = vadd.f32 %v2728, %v4179
    %v4181 = vpop.f32.mrb[0].mxu0
    %4182 = vdwg.mxu0
    %vm4183 = vcmask 523264
    %4184 = vst.msk [vmem:[#allocation11] sm:$0xff] %vm4183, %v3161
    %4185 = vst.msk [vmem:[#allocation11 + $0x10] sm:$0xff] %vm4183, %v3164
    %4186 = vst.msk [vmem:[#allocation11 + $0x20] sm:$0xff] %vm4183, %v3169
    %4187 = vst.msk [vmem:[#allocation11 + $0x30] sm:$0xff] %vm4183, %v3172
    %4188 = vst.msk [vmem:[#allocation11 + $0x40] sm:$0xff] %vm4183, %v3177
    %4189 = vst.msk [vmem:[#allocation11 + $0x50] sm:$0xff] %vm4183, %v3180
    %4190 = vst.msk [vmem:[#allocation11 + $0x60] sm:$0xff] %vm4183, %v3185
    %4191 = vst.msk [vmem:[#allocation11 + $0x70] sm:$0xff] %vm4183, %v3188
    %4192 = vst.msk [vmem:[#allocation11 + $0x80] sm:$0xff] %vm4183, %v3193
    %4193 = vst.msk [vmem:[#allocation11 + $0x90] sm:$0xff] %vm4183, %v3196
    %4194 = vst.msk [vmem:[#allocation11 + $0xa0] sm:$0xff] %vm4183, %v3201
    %4195 = vst.msk [vmem:[#allocation11 + $0xb0] sm:$0xff] %vm4183, %v3204
    %4196 = vst.msk [vmem:[#allocation11 + $0xc0] sm:$0xff] %vm4183, %v3209
    %4197 = vst.msk [vmem:[#allocation11 + $0xd0] sm:$0xff] %vm4183, %v3212
    %4198 = vst.msk [vmem:[#allocation11 + $0xe0] sm:$0xff] %vm4183, %v3217
    %4199 = vst.msk [vmem:[#allocation11 + $0xf0] sm:$0xff] %vm4183, %v3220
    %4200 = vst.msk [vmem:[#allocation11 + $0x100] sm:$0xff] %vm4183, %v3225
    %4201 = vst.msk [vmem:[#allocation11 + $0x110] sm:$0xff] %vm4183, %v3228
    %4202 = vst.msk [vmem:[#allocation11 + $0x120] sm:$0xff] %vm4183, %v3233
    %4203 = vst.msk [vmem:[#allocation11 + $0x130] sm:$0xff] %vm4183, %v3236
    %4204 = vst.msk [vmem:[#allocation11 + $0x140] sm:$0xff] %vm4183, %v3241
    %4205 = vst.msk [vmem:[#allocation11 + $0x150] sm:$0xff] %vm4183, %v3244
    %4206 = vst.msk [vmem:[#allocation11 + $0x160] sm:$0xff] %vm4183, %v3249
    %4207 = vst.msk [vmem:[#allocation11 + $0x170] sm:$0xff] %vm4183, %v3252
    %4208 = vst.msk [vmem:[#allocation11 + $0x180] sm:$0xff] %vm4183, %v3257
    %4209 = vst.msk [vmem:[#allocation11 + $0x190] sm:$0xff] %vm4183, %v3260
    %4210 = vst.msk [vmem:[#allocation11 + $0x1a0] sm:$0xff] %vm4183, %v3265
    %4211 = vst.msk [vmem:[#allocation11 + $0x1b0] sm:$0xff] %vm4183, %v3268
    %4212 = vst.msk [vmem:[#allocation11 + $0x1c0] sm:$0xff] %vm4183, %v3273
    %4213 = vst.msk [vmem:[#allocation11 + $0x1d0] sm:$0xff] %vm4183, %v3276
    %4214 = vst.msk [vmem:[#allocation11 + $0x1e0] sm:$0xff] %vm4183, %v3281
    %4215 = vst.msk [vmem:[#allocation11 + $0x1f0] sm:$0xff] %vm4183, %v3284
    %4216 = vst.msk [vmem:[#allocation11 + $0x200] sm:$0xff] %vm4183, %v3289
    %4217 = vst.msk [vmem:[#allocation11 + $0x210] sm:$0xff] %vm4183, %v3292
    %4218 = vst.msk [vmem:[#allocation11 + $0x220] sm:$0xff] %vm4183, %v3297
    %4219 = vst.msk [vmem:[#allocation11 + $0x230] sm:$0xff] %vm4183, %v3300
    %4220 = vst.msk [vmem:[#allocation11 + $0x240] sm:$0xff] %vm4183, %v3305
    %4221 = vst.msk [vmem:[#allocation11 + $0x250] sm:$0xff] %vm4183, %v3308
    %4222 = vst.msk [vmem:[#allocation11 + $0x260] sm:$0xff] %vm4183, %v3313
    %4223 = vst.msk [vmem:[#allocation11 + $0x270] sm:$0xff] %vm4183, %v3316
    %4224 = vst.msk [vmem:[#allocation11 + $0x280] sm:$0xff] %vm4183, %v3321
    %4225 = vst.msk [vmem:[#allocation11 + $0x290] sm:$0xff] %vm4183, %v3324
    %4226 = vst.msk [vmem:[#allocation11 + $0x2a0] sm:$0xff] %vm4183, %v3329
    %4227 = vst.msk [vmem:[#allocation11 + $0x2b0] sm:$0xff] %vm4183, %v3332
    %4228 = vst.msk [vmem:[#allocation11 + $0x2c0] sm:$0xff] %vm4183, %v3337
    %4229 = vst.msk [vmem:[#allocation11 + $0x2d0] sm:$0xff] %vm4183, %v3340
    %4230 = vst.msk [vmem:[#allocation11 + $0x2e0] sm:$0xff] %vm4183, %v3345
    %4231 = vst.msk [vmem:[#allocation11 + $0x2f0] sm:$0xff] %vm4183, %v3348
    %4232 = vst.msk [vmem:[#allocation11 + $0x300] sm:$0xff] %vm4183, %v3353
    %4233 = vst.msk [vmem:[#allocation11 + $0x310] sm:$0xff] %vm4183, %v3356
    %4234 = vst.msk [vmem:[#allocation11 + $0x320] sm:$0xff] %vm4183, %v3361
    %4235 = vst.msk [vmem:[#allocation11 + $0x330] sm:$0xff] %vm4183, %v3364
    %4236 = vst.msk [vmem:[#allocation11 + $0x340] sm:$0xff] %vm4183, %v3369
    %4237 = vst.msk [vmem:[#allocation11 + $0x350] sm:$0xff] %vm4183, %v3372
    %4238 = vst.msk [vmem:[#allocation11 + $0x360] sm:$0xff] %vm4183, %v3377
    %4239 = vst.msk [vmem:[#allocation11 + $0x370] sm:$0xff] %vm4183, %v3380
    %4240 = vst.msk [vmem:[#allocation11 + $0x380] sm:$0xff] %vm4183, %v3385
    %4241 = vst.msk [vmem:[#allocation11 + $0x390] sm:$0xff] %vm4183, %v3388
    %4242 = vst.msk [vmem:[#allocation11 + $0x3a0] sm:$0xff] %vm4183, %v3393
    %4243 = vst.msk [vmem:[#allocation11 + $0x3b0] sm:$0xff] %vm4183, %v3396
    %4244 = vst.msk [vmem:[#allocation11 + $0x3c0] sm:$0xff] %vm4183, %v3401
    %4245 = vst.msk [vmem:[#allocation11 + $0x3d0] sm:$0xff] %vm4183, %v3404
    %4246 = vst.msk [vmem:[#allocation11 + $0x3e0] sm:$0xff] %vm4183, %v3409
    %4247 = vst.msk [vmem:[#allocation11 + $0x3f0] sm:$0xff] %vm4183, %v3412
    %4312 = vrot.lane.b32.xlu0 %v3417, 64
    %v4313 = vpop.permute.xlu0 %4312
    %4314 = vrot.lane.b32.xlu0 %v3420, 64
    %v4315 = vpop.permute.xlu0 %4314
    %4316 = vrot.lane.b32.xlu0 %v3425, 64
    %v4317 = vpop.permute.xlu0 %4316
    %4318 = vrot.lane.b32.xlu0 %v3428, 64
    %v4319 = vpop.permute.xlu0 %4318
    %4320 = vrot.lane.b32.xlu0 %v3433, 64
    %v4321 = vpop.permute.xlu0 %4320
    %4322 = vrot.lane.b32.xlu0 %v3436, 64
    %v4323 = vpop.permute.xlu0 %4322
    %4324 = vrot.lane.b32.xlu0 %v3441, 64
    %v4325 = vpop.permute.xlu0 %4324
    %4326 = vrot.lane.b32.xlu0 %v3444, 64
    %v4327 = vpop.permute.xlu0 %4326
    %4328 = vrot.lane.b32.xlu0 %v3449, 64
    %v4329 = vpop.permute.xlu0 %4328
    %4330 = vrot.lane.b32.xlu0 %v3452, 64
    %v4331 = vpop.permute.xlu0 %4330
    %4332 = vrot.lane.b32.xlu0 %v3457, 64
    %v4333 = vpop.permute.xlu0 %4332
    %4334 = vrot.lane.b32.xlu0 %v3460, 64
    %v4335 = vpop.permute.xlu0 %4334
    %4336 = vrot.lane.b32.xlu0 %v3465, 64
    %v4337 = vpop.permute.xlu0 %4336
    %4338 = vrot.lane.b32.xlu0 %v3468, 64
    %v4339 = vpop.permute.xlu0 %4338
    %4340 = vrot.lane.b32.xlu0 %v3473, 64
    %v4341 = vpop.permute.xlu0 %4340
    %4342 = vrot.lane.b32.xlu0 %v3476, 64
    %v4343 = vpop.permute.xlu0 %4342
    %4344 = vrot.lane.b32.xlu0 %v3481, 64
    %v4345 = vpop.permute.xlu0 %4344
    %4346 = vrot.lane.b32.xlu0 %v3484, 64
    %v4347 = vpop.permute.xlu0 %4346
    %4348 = vrot.lane.b32.xlu0 %v3489, 64
    %v4349 = vpop.permute.xlu0 %4348
    %4350 = vrot.lane.b32.xlu0 %v3492, 64
    %v4351 = vpop.permute.xlu0 %4350
    %4352 = vrot.lane.b32.xlu0 %v3497, 64
    %v4353 = vpop.permute.xlu0 %4352
    %4354 = vrot.lane.b32.xlu0 %v3500, 64
    %v4355 = vpop.permute.xlu0 %4354
    %4356 = vrot.lane.b32.xlu0 %v3505, 64
    %v4357 = vpop.permute.xlu0 %4356
    %4358 = vrot.lane.b32.xlu0 %v3508, 64
    %v4359 = vpop.permute.xlu0 %4358
    %4360 = vrot.lane.b32.xlu0 %v3513, 64
    %v4361 = vpop.permute.xlu0 %4360
    %4362 = vrot.lane.b32.xlu0 %v3516, 64
    %v4363 = vpop.permute.xlu0 %4362
    %4364 = vrot.lane.b32.xlu0 %v3521, 64
    %v4365 = vpop.permute.xlu0 %4364
    %4366 = vrot.lane.b32.xlu0 %v3524, 64
    %v4367 = vpop.permute.xlu0 %4366
    %4368 = vrot.lane.b32.xlu0 %v3529, 64
    %v4369 = vpop.permute.xlu0 %4368
    %4370 = vrot.lane.b32.xlu0 %v3532, 64
    %v4371 = vpop.permute.xlu0 %4370
    %4372 = vrot.lane.b32.xlu0 %v3537, 64
    %v4373 = vpop.permute.xlu0 %4372
    %4374 = vrot.lane.b32.xlu0 %v3540, 64
    %v4375 = vpop.permute.xlu0 %4374
    %4376 = vrot.lane.b32.xlu0 %v3545, 64
    %v4377 = vpop.permute.xlu0 %4376
    %4378 = vrot.lane.b32.xlu0 %v3548, 64
    %v4379 = vpop.permute.xlu0 %4378
    %4380 = vrot.lane.b32.xlu0 %v3553, 64
    %v4381 = vpop.permute.xlu0 %4380
    %4382 = vrot.lane.b32.xlu0 %v3556, 64
    %v4383 = vpop.permute.xlu0 %4382
    %4384 = vrot.lane.b32.xlu0 %v3561, 64
    %v4385 = vpop.permute.xlu0 %4384
    %4386 = vrot.lane.b32.xlu0 %v3564, 64
    %v4387 = vpop.permute.xlu0 %4386
    %4388 = vrot.lane.b32.xlu0 %v3569, 64
    %v4389 = vpop.permute.xlu0 %4388
    %4390 = vrot.lane.b32.xlu0 %v3572, 64
    %v4391 = vpop.permute.xlu0 %4390
    %4392 = vrot.lane.b32.xlu0 %v3577, 64
    %v4393 = vpop.permute.xlu0 %4392
    %4394 = vrot.lane.b32.xlu0 %v3580, 64
    %v4395 = vpop.permute.xlu0 %4394
    %4396 = vrot.lane.b32.xlu0 %v3585, 64
    %v4397 = vpop.permute.xlu0 %4396
    %4398 = vrot.lane.b32.xlu0 %v3588, 64
    %v4399 = vpop.permute.xlu0 %4398
    %4400 = vrot.lane.b32.xlu0 %v3593, 64
    %v4401 = vpop.permute.xlu0 %4400
    %4402 = vrot.lane.b32.xlu0 %v3596, 64
    %v4403 = vpop.permute.xlu0 %4402
    %4404 = vrot.lane.b32.xlu0 %v3601, 64
    %v4405 = vpop.permute.xlu0 %4404
    %4406 = vrot.lane.b32.xlu0 %v3604, 64
    %v4407 = vpop.permute.xlu0 %4406
    %4408 = vrot.lane.b32.xlu0 %v3609, 64
    %v4409 = vpop.permute.xlu0 %4408
    %4410 = vrot.lane.b32.xlu0 %v3612, 64
    %v4411 = vpop.permute.xlu0 %4410
    %4412 = vrot.lane.b32.xlu0 %v3617, 64
    %v4413 = vpop.permute.xlu0 %4412
    %4414 = vrot.lane.b32.xlu0 %v3620, 64
    %v4415 = vpop.permute.xlu0 %4414
    %4416 = vrot.lane.b32.xlu0 %v3625, 64
    %v4417 = vpop.permute.xlu0 %4416
    %4418 = vrot.lane.b32.xlu0 %v3628, 64
    %v4419 = vpop.permute.xlu0 %4418
    %4420 = vrot.lane.b32.xlu0 %v3633, 64
    %v4421 = vpop.permute.xlu0 %4420
    %4422 = vrot.lane.b32.xlu0 %v3636, 64
    %v4423 = vpop.permute.xlu0 %4422
    %4424 = vrot.lane.b32.xlu0 %v3641, 64
    %v4425 = vpop.permute.xlu0 %4424
    %4426 = vrot.lane.b32.xlu0 %v3644, 64
    %v4427 = vpop.permute.xlu0 %4426
    %4428 = vrot.lane.b32.xlu0 %v3649, 64
    %v4429 = vpop.permute.xlu0 %4428
    %4430 = vrot.lane.b32.xlu0 %v3652, 64
    %v4431 = vpop.permute.xlu0 %4430
    %4432 = vrot.lane.b32.xlu0 %v3657, 64
    %v4433 = vpop.permute.xlu0 %4432
    %4434 = vrot.lane.b32.xlu0 %v3660, 64
    %v4435 = vpop.permute.xlu0 %4434
    %4436 = vrot.lane.b32.xlu0 %v3665, 64
    %v4437 = vpop.permute.xlu0 %4436
    %4438 = vrot.lane.b32.xlu0 %v3668, 64
    %v4439 = vpop.permute.xlu0 %4438
    %vm4504 = vcmask 1048064
    %4505 = vst.msk [vmem:[#allocation11] sm:$0xff] %vm4504, %v4313
    %4506 = vst.msk [vmem:[#allocation11 + $0x10] sm:$0xff] %vm4504, %v4315
    %4507 = vst.msk [vmem:[#allocation11 + $0x20] sm:$0xff] %vm4504, %v4317
    %4508 = vst.msk [vmem:[#allocation11 + $0x30] sm:$0xff] %vm4504, %v4319
    %4509 = vst.msk [vmem:[#allocation11 + $0x40] sm:$0xff] %vm4504, %v4321
    %4510 = vst.msk [vmem:[#allocation11 + $0x50] sm:$0xff] %vm4504, %v4323
    %4511 = vst.msk [vmem:[#allocation11 + $0x60] sm:$0xff] %vm4504, %v4325
    %4512 = vst.msk [vmem:[#allocation11 + $0x70] sm:$0xff] %vm4504, %v4327
    %4513 = vst.msk [vmem:[#allocation11 + $0x80] sm:$0xff] %vm4504, %v4329
    %4514 = vst.msk [vmem:[#allocation11 + $0x90] sm:$0xff] %vm4504, %v4331
    %4515 = vst.msk [vmem:[#allocation11 + $0xa0] sm:$0xff] %vm4504, %v4333
    %4516 = vst.msk [vmem:[#allocation11 + $0xb0] sm:$0xff] %vm4504, %v4335
    %4517 = vst.msk [vmem:[#allocation11 + $0xc0] sm:$0xff] %vm4504, %v4337
    %4518 = vst.msk [vmem:[#allocation11 + $0xd0] sm:$0xff] %vm4504, %v4339
    %4519 = vst.msk [vmem:[#allocation11 + $0xe0] sm:$0xff] %vm4504, %v4341
    %4520 = vst.msk [vmem:[#allocation11 + $0xf0] sm:$0xff] %vm4504, %v4343
    %4521 = vst.msk [vmem:[#allocation11 + $0x100] sm:$0xff] %vm4504, %v4345
    %4522 = vst.msk [vmem:[#allocation11 + $0x110] sm:$0xff] %vm4504, %v4347
    %4523 = vst.msk [vmem:[#allocation11 + $0x120] sm:$0xff] %vm4504, %v4349
    %4524 = vst.msk [vmem:[#allocation11 + $0x130] sm:$0xff] %vm4504, %v4351
    %4525 = vst.msk [vmem:[#allocation11 + $0x140] sm:$0xff] %vm4504, %v4353
    %4526 = vst.msk [vmem:[#allocation11 + $0x150] sm:$0xff] %vm4504, %v4355
    %4527 = vst.msk [vmem:[#allocation11 + $0x160] sm:$0xff] %vm4504, %v4357
    %4528 = vst.msk [vmem:[#allocation11 + $0x170] sm:$0xff] %vm4504, %v4359
    %4529 = vst.msk [vmem:[#allocation11 + $0x180] sm:$0xff] %vm4504, %v4361
    %4530 = vst.msk [vmem:[#allocation11 + $0x190] sm:$0xff] %vm4504, %v4363
    %4531 = vst.msk [vmem:[#allocation11 + $0x1a0] sm:$0xff] %vm4504, %v4365
    %4532 = vst.msk [vmem:[#allocation11 + $0x1b0] sm:$0xff] %vm4504, %v4367
    %4533 = vst.msk [vmem:[#allocation11 + $0x1c0] sm:$0xff] %vm4504, %v4369
    %4534 = vst.msk [vmem:[#allocation11 + $0x1d0] sm:$0xff] %vm4504, %v4371
    %4535 = vst.msk [vmem:[#allocation11 + $0x1e0] sm:$0xff] %vm4504, %v4373
    %4536 = vst.msk [vmem:[#allocation11 + $0x1f0] sm:$0xff] %vm4504, %v4375
    %4537 = vst.msk [vmem:[#allocation11 + $0x200] sm:$0xff] %vm4504, %v4377
    %4538 = vst.msk [vmem:[#allocation11 + $0x210] sm:$0xff] %vm4504, %v4379
    %4539 = vst.msk [vmem:[#allocation11 + $0x220] sm:$0xff] %vm4504, %v4381
    %4540 = vst.msk [vmem:[#allocation11 + $0x230] sm:$0xff] %vm4504, %v4383
    %4541 = vst.msk [vmem:[#allocation11 + $0x240] sm:$0xff] %vm4504, %v4385
    %4542 = vst.msk [vmem:[#allocation11 + $0x250] sm:$0xff] %vm4504, %v4387
    %4543 = vst.msk [vmem:[#allocation11 + $0x260] sm:$0xff] %vm4504, %v4389
    %4544 = vst.msk [vmem:[#allocation11 + $0x270] sm:$0xff] %vm4504, %v4391
    %4545 = vst.msk [vmem:[#allocation11 + $0x280] sm:$0xff] %vm4504, %v4393
    %4546 = vst.msk [vmem:[#allocation11 + $0x290] sm:$0xff] %vm4504, %v4395
    %4547 = vst.msk [vmem:[#allocation11 + $0x2a0] sm:$0xff] %vm4504, %v4397
    %4548 = vst.msk [vmem:[#allocation11 + $0x2b0] sm:$0xff] %vm4504, %v4399
    %4549 = vst.msk [vmem:[#allocation11 + $0x2c0] sm:$0xff] %vm4504, %v4401
    %4550 = vst.msk [vmem:[#allocation11 + $0x2d0] sm:$0xff] %vm4504, %v4403
    %4551 = vst.msk [vmem:[#allocation11 + $0x2e0] sm:$0xff] %vm4504, %v4405
    %4552 = vst.msk [vmem:[#allocation11 + $0x2f0] sm:$0xff] %vm4504, %v4407
    %4553 = vst.msk [vmem:[#allocation11 + $0x300] sm:$0xff] %vm4504, %v4409
    %4554 = vst.msk [vmem:[#allocation11 + $0x310] sm:$0xff] %vm4504, %v4411
    %4555 = vst.msk [vmem:[#allocation11 + $0x320] sm:$0xff] %vm4504, %v4413
    %4556 = vst.msk [vmem:[#allocation11 + $0x330] sm:$0xff] %vm4504, %v4415
    %4557 = vst.msk [vmem:[#allocation11 + $0x340] sm:$0xff] %vm4504, %v4417
    %4558 = vst.msk [vmem:[#allocation11 + $0x350] sm:$0xff] %vm4504, %v4419
    %4559 = vst.msk [vmem:[#allocation11 + $0x360] sm:$0xff] %vm4504, %v4421
    %4560 = vst.msk [vmem:[#allocation11 + $0x370] sm:$0xff] %vm4504, %v4423
    %4561 = vst.msk [vmem:[#allocation11 + $0x380] sm:$0xff] %vm4504, %v4425
    %4562 = vst.msk [vmem:[#allocation11 + $0x390] sm:$0xff] %vm4504, %v4427
    %4563 = vst.msk [vmem:[#allocation11 + $0x3a0] sm:$0xff] %vm4504, %v4429
    %4564 = vst.msk [vmem:[#allocation11 + $0x3b0] sm:$0xff] %vm4504, %v4431
    %4565 = vst.msk [vmem:[#allocation11 + $0x3c0] sm:$0xff] %vm4504, %v4433
    %4566 = vst.msk [vmem:[#allocation11 + $0x3d0] sm:$0xff] %vm4504, %v4435
    %4567 = vst.msk [vmem:[#allocation11 + $0x3e0] sm:$0xff] %vm4504, %v4437
    %4568 = vst.msk [vmem:[#allocation11 + $0x3f0] sm:$0xff] %vm4504, %v4439
    %4569 = vst.msk [vmem:[#allocation11 + $0x8] sm:$0xff] %vm4183, %v3673
    %4570 = vst.msk [vmem:[#allocation11 + $0x18] sm:$0xff] %vm4183, %v3676
    %4571 = vst.msk [vmem:[#allocation11 + $0x28] sm:$0xff] %vm4183, %v3681
    %4572 = vst.msk [vmem:[#allocation11 + $0x38] sm:$0xff] %vm4183, %v3684
    %4573 = vst.msk [vmem:[#allocation11 + $0x48] sm:$0xff] %vm4183, %v3689
    %4574 = vst.msk [vmem:[#allocation11 + $0x58] sm:$0xff] %vm4183, %v3692
    %4575 = vst.msk [vmem:[#allocation11 + $0x68] sm:$0xff] %vm4183, %v3697
    %4576 = vst.msk [vmem:[#allocation11 + $0x78] sm:$0xff] %vm4183, %v3700
    %4577 = vst.msk [vmem:[#allocation11 + $0x88] sm:$0xff] %vm4183, %v3705
    %4578 = vst.msk [vmem:[#allocation11 + $0x98] sm:$0xff] %vm4183, %v3708
    %4579 = vst.msk [vmem:[#allocation11 + $0xa8] sm:$0xff] %vm4183, %v3713
    %4580 = vst.msk [vmem:[#allocation11 + $0xb8] sm:$0xff] %vm4183, %v3716
    %4581 = vst.msk [vmem:[#allocation11 + $0xc8] sm:$0xff] %vm4183, %v3721
    %4582 = vst.msk [vmem:[#allocation11 + $0xd8] sm:$0xff] %vm4183, %v3724
    %4583 = vst.msk [vmem:[#allocation11 + $0xe8] sm:$0xff] %vm4183, %v3729
    %4584 = vst.msk [vmem:[#allocation11 + $0xf8] sm:$0xff] %vm4183, %v3732
    %4585 = vst.msk [vmem:[#allocation11 + $0x108] sm:$0xff] %vm4183, %v3737
    %4586 = vst.msk [vmem:[#allocation11 + $0x118] sm:$0xff] %vm4183, %v3740
    %4587 = vst.msk [vmem:[#allocation11 + $0x128] sm:$0xff] %vm4183, %v3745
    %4588 = vst.msk [vmem:[#allocation11 + $0x138] sm:$0xff] %vm4183, %v3748
    %4589 = vst.msk [vmem:[#allocation11 + $0x148] sm:$0xff] %vm4183, %v3753
    %4590 = vst.msk [vmem:[#allocation11 + $0x158] sm:$0xff] %vm4183, %v3756
    %4591 = vst.msk [vmem:[#allocation11 + $0x168] sm:$0xff] %vm4183, %v3761
    %4592 = vst.msk [vmem:[#allocation11 + $0x178] sm:$0xff] %vm4183, %v3764
    %4593 = vst.msk [vmem:[#allocation11 + $0x188] sm:$0xff] %vm4183, %v3769
    %4594 = vst.msk [vmem:[#allocation11 + $0x198] sm:$0xff] %vm4183, %v3772
    %4595 = vst.msk [vmem:[#allocation11 + $0x1a8] sm:$0xff] %vm4183, %v3777
    %4596 = vst.msk [vmem:[#allocation11 + $0x1b8] sm:$0xff] %vm4183, %v3780
    %4597 = vst.msk [vmem:[#allocation11 + $0x1c8] sm:$0xff] %vm4183, %v3785
    %4598 = vst.msk [vmem:[#allocation11 + $0x1d8] sm:$0xff] %vm4183, %v3788
    %4599 = vst.msk [vmem:[#allocation11 + $0x1e8] sm:$0xff] %vm4183, %v3793
    %4600 = vst.msk [vmem:[#allocation11 + $0x1f8] sm:$0xff] %vm4183, %v3796
    %4601 = vst.msk [vmem:[#allocation11 + $0x208] sm:$0xff] %vm4183, %v3801
    %4602 = vst.msk [vmem:[#allocation11 + $0x218] sm:$0xff] %vm4183, %v3804
    %4603 = vst.msk [vmem:[#allocation11 + $0x228] sm:$0xff] %vm4183, %v3809
    %4604 = vst.msk [vmem:[#allocation11 + $0x238] sm:$0xff] %vm4183, %v3812
    %4605 = vst.msk [vmem:[#allocation11 + $0x248] sm:$0xff] %vm4183, %v3817
    %4606 = vst.msk [vmem:[#allocation11 + $0x258] sm:$0xff] %vm4183, %v3820
    %4607 = vst.msk [vmem:[#allocation11 + $0x268] sm:$0xff] %vm4183, %v3825
    %4608 = vst.msk [vmem:[#allocation11 + $0x278] sm:$0xff] %vm4183, %v3828
    %4609 = vst.msk [vmem:[#allocation11 + $0x288] sm:$0xff] %vm4183, %v3833
    %4610 = vst.msk [vmem:[#allocation11 + $0x298] sm:$0xff] %vm4183, %v3836
    %4611 = vst.msk [vmem:[#allocation11 + $0x2a8] sm:$0xff] %vm4183, %v3841
    %4612 = vst.msk [vmem:[#allocation11 + $0x2b8] sm:$0xff] %vm4183, %v3844
    %4613 = vst.msk [vmem:[#allocation11 + $0x2c8] sm:$0xff] %vm4183, %v3849
    %4614 = vst.msk [vmem:[#allocation11 + $0x2d8] sm:$0xff] %vm4183, %v3852
    %4615 = vst.msk [vmem:[#allocation11 + $0x2e8] sm:$0xff] %vm4183, %v3857
    %4616 = vst.msk [vmem:[#allocation11 + $0x2f8] sm:$0xff] %vm4183, %v3860
    %4617 = vst.msk [vmem:[#allocation11 + $0x308] sm:$0xff] %vm4183, %v3865
    %4618 = vst.msk [vmem:[#allocation11 + $0x318] sm:$0xff] %vm4183, %v3868
    %4619 = vst.msk [vmem:[#allocation11 + $0x328] sm:$0xff] %vm4183, %v3873
    %4620 = vst.msk [vmem:[#allocation11 + $0x338] sm:$0xff] %vm4183, %v3876
    %4621 = vst.msk [vmem:[#allocation11 + $0x348] sm:$0xff] %vm4183, %v3881
    %4622 = vst.msk [vmem:[#allocation11 + $0x358] sm:$0xff] %vm4183, %v3884
    %4623 = vst.msk [vmem:[#allocation11 + $0x368] sm:$0xff] %vm4183, %v3889
    %4624 = vst.msk [vmem:[#allocation11 + $0x378] sm:$0xff] %vm4183, %v3892
    %4625 = vst.msk [vmem:[#allocation11 + $0x388] sm:$0xff] %vm4183, %v3897
    %4626 = vst.msk [vmem:[#allocation11 + $0x398] sm:$0xff] %vm4183, %v3900
    %4627 = vst.msk [vmem:[#allocation11 + $0x3a8] sm:$0xff] %vm4183, %v3905
    %4628 = vst.msk [vmem:[#allocation11 + $0x3b8] sm:$0xff] %vm4183, %v3908
    %4629 = vst.msk [vmem:[#allocation11 + $0x3c8] sm:$0xff] %vm4183, %v3913
    %4630 = vst.msk [vmem:[#allocation11 + $0x3d8] sm:$0xff] %vm4183, %v3916
    %4631 = vst.msk [vmem:[#allocation11 + $0x3e8] sm:$0xff] %vm4183, %v3921
    %4632 = vst.msk [vmem:[#allocation11 + $0x3f8] sm:$0xff] %vm4183, %v3924
    %4697 = vrot.lane.b32.xlu0 %v3929, 64
    %v4698 = vpop.permute.xlu0 %4697
    %4699 = vrot.lane.b32.xlu0 %v3932, 64
    %v4700 = vpop.permute.xlu0 %4699
    %4701 = vrot.lane.b32.xlu0 %v3937, 64
    %v4702 = vpop.permute.xlu0 %4701
    %4703 = vrot.lane.b32.xlu0 %v3940, 64
    %v4704 = vpop.permute.xlu0 %4703
    %4705 = vrot.lane.b32.xlu0 %v3945, 64
    %v4706 = vpop.permute.xlu0 %4705
    %4707 = vrot.lane.b32.xlu0 %v3948, 64
    %v4708 = vpop.permute.xlu0 %4707
    %4709 = vrot.lane.b32.xlu0 %v3953, 64
    %v4710 = vpop.permute.xlu0 %4709
    %4711 = vrot.lane.b32.xlu0 %v3956, 64
    %v4712 = vpop.permute.xlu0 %4711
    %4713 = vrot.lane.b32.xlu0 %v3961, 64
    %v4714 = vpop.permute.xlu0 %4713
    %4715 = vrot.lane.b32.xlu0 %v3964, 64
    %v4716 = vpop.permute.xlu0 %4715
    %4717 = vrot.lane.b32.xlu0 %v3969, 64
    %v4718 = vpop.permute.xlu0 %4717
    %4719 = vrot.lane.b32.xlu0 %v3972, 64
    %v4720 = vpop.permute.xlu0 %4719
    %4721 = vrot.lane.b32.xlu0 %v3977, 64
    %v4722 = vpop.permute.xlu0 %4721
    %4723 = vrot.lane.b32.xlu0 %v3980, 64
    %v4724 = vpop.permute.xlu0 %4723
    %4725 = vrot.lane.b32.xlu0 %v3985, 64
    %v4726 = vpop.permute.xlu0 %4725
    %4727 = vrot.lane.b32.xlu0 %v3988, 64
    %v4728 = vpop.permute.xlu0 %4727
    %4729 = vrot.lane.b32.xlu0 %v3993, 64
    %v4730 = vpop.permute.xlu0 %4729
    %4731 = vrot.lane.b32.xlu0 %v3996, 64
    %v4732 = vpop.permute.xlu0 %4731
    %4733 = vrot.lane.b32.xlu0 %v4001, 64
    %v4734 = vpop.permute.xlu0 %4733
    %4735 = vrot.lane.b32.xlu0 %v4004, 64
    %v4736 = vpop.permute.xlu0 %4735
    %4737 = vrot.lane.b32.xlu0 %v4009, 64
    %v4738 = vpop.permute.xlu0 %4737
    %4739 = vrot.lane.b32.xlu0 %v4012, 64
    %v4740 = vpop.permute.xlu0 %4739
    %4741 = vrot.lane.b32.xlu0 %v4017, 64
    %v4742 = vpop.permute.xlu0 %4741
    %4743 = vrot.lane.b32.xlu0 %v4020, 64
    %v4744 = vpop.permute.xlu0 %4743
    %4745 = vrot.lane.b32.xlu0 %v4025, 64
    %v4746 = vpop.permute.xlu0 %4745
    %4747 = vrot.lane.b32.xlu0 %v4028, 64
    %v4748 = vpop.permute.xlu0 %4747
    %4749 = vrot.lane.b32.xlu0 %v4033, 64
    %v4750 = vpop.permute.xlu0 %4749
    %4751 = vrot.lane.b32.xlu0 %v4036, 64
    %v4752 = vpop.permute.xlu0 %4751
    %4753 = vrot.lane.b32.xlu0 %v4041, 64
    %v4754 = vpop.permute.xlu0 %4753
    %4755 = vrot.lane.b32.xlu0 %v4044, 64
    %v4756 = vpop.permute.xlu0 %4755
    %4757 = vrot.lane.b32.xlu0 %v4049, 64
    %v4758 = vpop.permute.xlu0 %4757
    %4759 = vrot.lane.b32.xlu0 %v4052, 64
    %v4760 = vpop.permute.xlu0 %4759
    %4761 = vrot.lane.b32.xlu0 %v4057, 64
    %v4762 = vpop.permute.xlu0 %4761
    %4763 = vrot.lane.b32.xlu0 %v4060, 64
    %v4764 = vpop.permute.xlu0 %4763
    %4765 = vrot.lane.b32.xlu0 %v4065, 64
    %v4766 = vpop.permute.xlu0 %4765
    %4767 = vrot.lane.b32.xlu0 %v4068, 64
    %v4768 = vpop.permute.xlu0 %4767
    %4769 = vrot.lane.b32.xlu0 %v4073, 64
    %v4770 = vpop.permute.xlu0 %4769
    %4771 = vrot.lane.b32.xlu0 %v4076, 64
    %v4772 = vpop.permute.xlu0 %4771
    %4773 = vrot.lane.b32.xlu0 %v4081, 64
    %v4774 = vpop.permute.xlu0 %4773
    %4775 = vrot.lane.b32.xlu0 %v4084, 64
    %v4776 = vpop.permute.xlu0 %4775
    %4777 = vrot.lane.b32.xlu0 %v4089, 64
    %v4778 = vpop.permute.xlu0 %4777
    %4779 = vrot.lane.b32.xlu0 %v4092, 64
    %v4780 = vpop.permute.xlu0 %4779
    %4781 = vrot.lane.b32.xlu0 %v4097, 64
    %v4782 = vpop.permute.xlu0 %4781
    %4783 = vrot.lane.b32.xlu0 %v4100, 64
    %v4784 = vpop.permute.xlu0 %4783
    %4785 = vrot.lane.b32.xlu0 %v4105, 64
    %v4786 = vpop.permute.xlu0 %4785
    %4787 = vrot.lane.b32.xlu0 %v4108, 64
    %v4788 = vpop.permute.xlu0 %4787
    %4789 = vrot.lane.b32.xlu0 %v4113, 64
    %v4790 = vpop.permute.xlu0 %4789
    %4791 = vrot.lane.b32.xlu0 %v4116, 64
    %v4792 = vpop.permute.xlu0 %4791
    %4793 = vrot.lane.b32.xlu0 %v4121, 64
    %v4794 = vpop.permute.xlu0 %4793
    %4795 = vrot.lane.b32.xlu0 %v4124, 64
    %v4796 = vpop.permute.xlu0 %4795
    %4797 = vrot.lane.b32.xlu0 %v4129, 64
    %v4798 = vpop.permute.xlu0 %4797
    %4799 = vrot.lane.b32.xlu0 %v4132, 64
    %v4800 = vpop.permute.xlu0 %4799
    %4801 = vrot.lane.b32.xlu0 %v4137, 64
    %v4802 = vpop.permute.xlu0 %4801
    %4803 = vrot.lane.b32.xlu0 %v4140, 64
    %v4804 = vpop.permute.xlu0 %4803
    %4805 = vrot.lane.b32.xlu0 %v4145, 64
    %v4806 = vpop.permute.xlu0 %4805
    %4807 = vrot.lane.b32.xlu0 %v4148, 64
    %v4808 = vpop.permute.xlu0 %4807
    %4809 = vrot.lane.b32.xlu0 %v4153, 64
    %v4810 = vpop.permute.xlu0 %4809
    %4811 = vrot.lane.b32.xlu0 %v4156, 64
    %v4812 = vpop.permute.xlu0 %4811
    %4813 = vrot.lane.b32.xlu0 %v4161, 64
    %v4814 = vpop.permute.xlu0 %4813
    %4815 = vrot.lane.b32.xlu0 %v4164, 64
    %v4816 = vpop.permute.xlu0 %4815
    %4817 = vrot.lane.b32.xlu0 %v4169, 64
    %v4818 = vpop.permute.xlu0 %4817
    %4819 = vrot.lane.b32.xlu0 %v4172, 64
    %v4820 = vpop.permute.xlu0 %4819
    %4821 = vrot.lane.b32.xlu0 %v4177, 64
    %v4822 = vpop.permute.xlu0 %4821
    %4823 = vrot.lane.b32.xlu0 %v4180, 64
    %v4824 = vpop.permute.xlu0 %4823
    %4889 = vst.msk [vmem:[#allocation11 + $0x8] sm:$0xff] %vm4504, %v4698
    %4890 = vst.msk [vmem:[#allocation11 + $0x18] sm:$0xff] %vm4504, %v4700
    %4891 = vst.msk [vmem:[#allocation11 + $0x28] sm:$0xff] %vm4504, %v4702
    %4892 = vst.msk [vmem:[#allocation11 + $0x38] sm:$0xff] %vm4504, %v4704
    %4893 = vst.msk [vmem:[#allocation11 + $0x48] sm:$0xff] %vm4504, %v4706
    %4894 = vst.msk [vmem:[#allocation11 + $0x58] sm:$0xff] %vm4504, %v4708
    %4895 = vst.msk [vmem:[#allocation11 + $0x68] sm:$0xff] %vm4504, %v4710
    %4896 = vst.msk [vmem:[#allocation11 + $0x78] sm:$0xff] %vm4504, %v4712
    %4897 = vst.msk [vmem:[#allocation11 + $0x88] sm:$0xff] %vm4504, %v4714
    %4898 = vst.msk [vmem:[#allocation11 + $0x98] sm:$0xff] %vm4504, %v4716
    %4899 = vst.msk [vmem:[#allocation11 + $0xa8] sm:$0xff] %vm4504, %v4718
    %4900 = vst.msk [vmem:[#allocation11 + $0xb8] sm:$0xff] %vm4504, %v4720
    %4901 = vst.msk [vmem:[#allocation11 + $0xc8] sm:$0xff] %vm4504, %v4722
    %4902 = vst.msk [vmem:[#allocation11 + $0xd8] sm:$0xff] %vm4504, %v4724
    %4903 = vst.msk [vmem:[#allocation11 + $0xe8] sm:$0xff] %vm4504, %v4726
    %4904 = vst.msk [vmem:[#allocation11 + $0xf8] sm:$0xff] %vm4504, %v4728
    %4905 = vst.msk [vmem:[#allocation11 + $0x108] sm:$0xff] %vm4504, %v4730
    %4906 = vst.msk [vmem:[#allocation11 + $0x118] sm:$0xff] %vm4504, %v4732
    %4907 = vst.msk [vmem:[#allocation11 + $0x128] sm:$0xff] %vm4504, %v4734
    %4908 = vst.msk [vmem:[#allocation11 + $0x138] sm:$0xff] %vm4504, %v4736
    %4909 = vst.msk [vmem:[#allocation11 + $0x148] sm:$0xff] %vm4504, %v4738
    %4910 = vst.msk [vmem:[#allocation11 + $0x158] sm:$0xff] %vm4504, %v4740
    %4911 = vst.msk [vmem:[#allocation11 + $0x168] sm:$0xff] %vm4504, %v4742
    %4912 = vst.msk [vmem:[#allocation11 + $0x178] sm:$0xff] %vm4504, %v4744
    %4913 = vst.msk [vmem:[#allocation11 + $0x188] sm:$0xff] %vm4504, %v4746
    %4914 = vst.msk [vmem:[#allocation11 + $0x198] sm:$0xff] %vm4504, %v4748
    %4915 = vst.msk [vmem:[#allocation11 + $0x1a8] sm:$0xff] %vm4504, %v4750
    %4916 = vst.msk [vmem:[#allocation11 + $0x1b8] sm:$0xff] %vm4504, %v4752
    %4917 = vst.msk [vmem:[#allocation11 + $0x1c8] sm:$0xff] %vm4504, %v4754
    %4918 = vst.msk [vmem:[#allocation11 + $0x1d8] sm:$0xff] %vm4504, %v4756
    %4919 = vst.msk [vmem:[#allocation11 + $0x1e8] sm:$0xff] %vm4504, %v4758
    %4920 = vst.msk [vmem:[#allocation11 + $0x1f8] sm:$0xff] %vm4504, %v4760
    %4921 = vst.msk [vmem:[#allocation11 + $0x208] sm:$0xff] %vm4504, %v4762
    %4922 = vst.msk [vmem:[#allocation11 + $0x218] sm:$0xff] %vm4504, %v4764
    %4923 = vst.msk [vmem:[#allocation11 + $0x228] sm:$0xff] %vm4504, %v4766
    %4924 = vst.msk [vmem:[#allocation11 + $0x238] sm:$0xff] %vm4504, %v4768
    %4925 = vst.msk [vmem:[#allocation11 + $0x248] sm:$0xff] %vm4504, %v4770
    %4926 = vst.msk [vmem:[#allocation11 + $0x258] sm:$0xff] %vm4504, %v4772
    %4927 = vst.msk [vmem:[#allocation11 + $0x268] sm:$0xff] %vm4504, %v4774
    %4928 = vst.msk [vmem:[#allocation11 + $0x278] sm:$0xff] %vm4504, %v4776
    %4929 = vst.msk [vmem:[#allocation11 + $0x288] sm:$0xff] %vm4504, %v4778
    %4930 = vst.msk [vmem:[#allocation11 + $0x298] sm:$0xff] %vm4504, %v4780
    %4931 = vst.msk [vmem:[#allocation11 + $0x2a8] sm:$0xff] %vm4504, %v4782
    %4932 = vst.msk [vmem:[#allocation11 + $0x2b8] sm:$0xff] %vm4504, %v4784
    %4933 = vst.msk [vmem:[#allocation11 + $0x2c8] sm:$0xff] %vm4504, %v4786
    %4934 = vst.msk [vmem:[#allocation11 + $0x2d8] sm:$0xff] %vm4504, %v4788
    %4935 = vst.msk [vmem:[#allocation11 + $0x2e8] sm:$0xff] %vm4504, %v4790
    %4936 = vst.msk [vmem:[#allocation11 + $0x2f8] sm:$0xff] %vm4504, %v4792
    %4937 = vst.msk [vmem:[#allocation11 + $0x308] sm:$0xff] %vm4504, %v4794
    %4938 = vst.msk [vmem:[#allocation11 + $0x318] sm:$0xff] %vm4504, %v4796
    %4939 = vst.msk [vmem:[#allocation11 + $0x328] sm:$0xff] %vm4504, %v4798
    %4940 = vst.msk [vmem:[#allocation11 + $0x338] sm:$0xff] %vm4504, %v4800
    %4941 = vst.msk [vmem:[#allocation11 + $0x348] sm:$0xff] %vm4504, %v4802
    %4942 = vst.msk [vmem:[#allocation11 + $0x358] sm:$0xff] %vm4504, %v4804
    %4943 = vst.msk [vmem:[#allocation11 + $0x368] sm:$0xff] %vm4504, %v4806
    %4944 = vst.msk [vmem:[#allocation11 + $0x378] sm:$0xff] %vm4504, %v4808
    %4945 = vst.msk [vmem:[#allocation11 + $0x388] sm:$0xff] %vm4504, %v4810
    %4946 = vst.msk [vmem:[#allocation11 + $0x398] sm:$0xff] %vm4504, %v4812
    %4947 = vst.msk [vmem:[#allocation11 + $0x3a8] sm:$0xff] %vm4504, %v4814
    %4948 = vst.msk [vmem:[#allocation11 + $0x3b8] sm:$0xff] %vm4504, %v4816
    %4949 = vst.msk [vmem:[#allocation11 + $0x3c8] sm:$0xff] %vm4504, %v4818
    %4950 = vst.msk [vmem:[#allocation11 + $0x3d8] sm:$0xff] %vm4504, %v4820
    %4951 = vst.msk [vmem:[#allocation11 + $0x3e8] sm:$0xff] %vm4504, %v4822
    %4952 = vst.msk [vmem:[#allocation11 + $0x3f8] sm:$0xff] %vm4504, %v4824
    // Predicated region
    $region34: #{decoder_forward.3} parent=1 // pred_check
      _
    $region35: #{decoder_forward.3} parent=1 // pred_check_branch
      %4954 = sbr.rel (0) target = $region37
    $region36: #{decoder_forward.3} parent=1 // pred_region
      %s4956 = ssub.s32 16384, 16384
      %4957 = vsyncadd [#allocation5], %s4956
      %s4958 = sshll.u32 [#allocation11], 4
      %s4959 = int_to_ptr.vmem [resolvable:$true] %s4958
      %4964 = dma.vmem_to_hbm [thread:$0]  %s4959, 16384, %s4, [#allocation5], 256, 256, 16
    $region37: #{decoder_forward.3} parent=1 // pred_fallthru
      _
    // Predicated region
    $region38: #{decoder_forward.3} parent=1 // pred_check
      _
    $region39: #{decoder_forward.3} parent=1 // pred_check_branch
      %4966 = sbr.rel (0) target = $region41
    $region40: #{decoder_forward.3} parent=1 // pred_region
      %4967 = dma.done [#allocation5], 16384
    $region41: #{decoder_forward.3} parent=1 // pred_fallthru
      _
    %4968 = vsyncpa [#allocation4], 1
    %4969 = vsyncpa [#allocation7], 1
    %4970 = vsyncpa [#allocation10], 1
    %4971 = vsyncpa [#allocation5], 1

</llo_original>
